<compile_context>
chip_gen: v6e
topology: v6e:2x2x1
jax: 0.10.0
libtpu: 0.0.40
codegen_flags: <defaults>
</compile_context>

<pallas_src>
import functools

import numpy as np
import jax
import jax.numpy as jnp
from jax.experimental import pallas as pl
from jax.experimental.pallas import tpu as pltpu


# --------------------------------------------------------------------------------------
# Static geometry helpers (host-side Python)
# --------------------------------------------------------------------------------------
def _phase_split_taps(ks):
    """Tap/offset geometry for ConvTranspose1d(kernel=2*ks, stride=2, padding=ks//2).

    Output row j=2m sums x[m + off_s] * W[:, :, even_taps[s]]; row j=2m+1 uses odd_taps.
    The offsets are consecutive integers, so each phase is a plain ks-tap stride-1 conv
    over a zero-padded buffer (no zero-insertion, no wasted MXU rows).
    """
    Kt, p = 2 * ks, ks // 2
    even_taps = sorted([t for t in range(Kt) if t % 2 == p % 2], reverse=True)
    odd_taps = sorted([t for t in range(Kt) if t % 2 != p % 2], reverse=True)
    e_off0 = (p - even_taps[0]) // 2          # most negative input offset, even phase
    o_off0 = (p + 1 - odd_taps[0]) // 2       # most negative input offset, odd phase
    front = -min(e_off0, o_off0)              # zero-padding rows before the interior
    return even_taps, odd_taps, e_off0, o_off0, front


def build_interp_matrix(L_src, L_dst):
    """Dense matrix matching F.interpolate(mode='linear', align_corners=False)."""
    M = np.zeros((L_src, L_dst), np.float32)
    scale = L_src / L_dst
    for i in range(L_dst):
        src = scale * (i + 0.5) - 0.5
        src = max(src, 0.0)
        lo = min(int(np.floor(src)), L_src - 1)
        hi = lo + 1 if lo < L_src - 1 else lo
        w = src - lo
        M[lo, i] += 1.0 - w
        M[hi, i] += w
    return M


# --------------------------------------------------------------------------------------
# Fused Pallas kernel: whole encoder + decoder + interpolation for one batch element
# --------------------------------------------------------------------------------------
def _fused_autoencoder_kernel(*args, cfg):
    n_enc, n_dec = len(cfg["enc"]), len(cfg["dec"])
    ks, pad = cfg["ks"], cfg["pad"]
    mxu_dtype = cfg["mxu_dtype"]

    it = iter(args)
    x_ref = next(it)
    enc_p = [[next(it) for _ in range(3)] for _ in range(n_enc)]   # (W, scale, shift)
    dec_p = [[next(it) for _ in range(4)] for _ in range(n_dec)]   # (We, Wo, scale, shift)
    me_ref = next(it)
    mo_ref = next(it)
    o_ref = next(it)
    enc_buf = [next(it) for _ in range(n_enc)]
    dec_buf = [next(it) for _ in range(n_dec)]

    def mxu(a, w_ref):
        # bf16 operands at the MXU boundary, f32 accumulation; elementwise stays f32.
        return jnp.dot(a.astype(mxu_dtype), w_ref[...],
                       preferred_element_type=jnp.float32)

    # ----- encoder: [Conv1d -> BN -> ReLU -> MaxPool1d(2) -> Dropout(eval=id)] x n -----
    h = x_ref[...].astype(jnp.float32)                         # (L0, 1), channel-last
    for l in range(n_enc):
        L, L_out, Cin, Cout = cfg["enc"][l]
        w_ref, sc_ref, sh_ref = enc_p[l]
        buf = enc_buf[l]                                       # (L + 2*pad, Cin)
        buf[...] = jnp.zeros_like(buf)                         # in-kernel zero padding
        buf[pl.ds(pad, L), :] = h
        # One deep (L_out, ks*Cin) @ (ks*Cin, Cout) matmul instead of ks shallow ones.
        slab = jnp.concatenate([buf[pl.ds(k, L_out), :] for k in range(ks)], axis=1)
        y = mxu(slab, w_ref) * sc_ref[...] + sh_ref[...]       # conv + folded BN/bias
        y = jnp.maximum(y, 0.0)                                # ReLU
        Lp = L_out // 2                                        # MaxPool1d(2) (floor)
        if L_out != 2 * Lp:
            y = y[: 2 * Lp, :]
        h = jnp.max(y.reshape(Lp, 2, Cout), axis=1)

    # ----- decoder: ConvTranspose1d(2*ks, stride=2) phase-split into two stride-1 convs -----
    ph_e = ph_o = None
    for l in range(n_dec):
        Lh, Cin, Cout, M, front, e_start, o_start, Lpad = cfg["dec"][l]
        we_ref, wo_ref, sc_ref, sh_ref = dec_p[l]
        buf = dec_buf[l]                                       # (Lpad, Cin) padded input
        buf[...] = jnp.zeros_like(buf)
        if l == 0:
            buf[pl.ds(front, Lh), :] = h                       # encoder output, contiguous
        else:
            # Interleave the previous layer's even/odd phases straight into the padded
            # buffer with strided VMEM stores (no zero-insertion, no HBM scatter).
            buf[pl.ds(front, Lh // 2, stride=2), :] = ph_e
            buf[pl.ds(front + 1, Lh // 2, stride=2), :] = ph_o
        slab_e = jnp.concatenate([buf[pl.ds(e_start + s, M), :] for s in range(ks)], axis=1)
        slab_o = jnp.concatenate([buf[pl.ds(o_start + s, M), :] for s in range(ks)], axis=1)
        ye = mxu(slab_e, we_ref) * sc_ref[...] + sh_ref[...]   # even output rows
        yo = mxu(slab_o, wo_ref) * sc_ref[...] + sh_ref[...]   # odd output rows
        if l < n_dec - 1:
            ph_e, ph_o = jnp.maximum(ye, 0.0), jnp.maximum(yo, 0.0)
        else:
            ph_e, ph_o = jnp.tanh(ye), jnp.tanh(yo)            # final layer: bias + Tanh

    # ----- F.interpolate(mode='linear', align_corners=False), fused as two f32 matmuls -----
    # The final layer's phases are consumed directly; no interleave needed for the last layer.
    o = (jnp.dot(me_ref[...], ph_e, preferred_element_type=jnp.float32)
         + jnp.dot(mo_ref[...], ph_o, preferred_element_type=jnp.float32))
    o_ref[...] = o.astype(o_ref.dtype)


# --------------------------------------------------------------------------------------
# Parameter init (PyTorch-style), pre-reshaped for the fused kernel
# --------------------------------------------------------------------------------------
def init_params(key, hidden_dims, kernel_size, mxu_dtype=jnp.bfloat16):
    eps = 1e-5
    bn_scale = 1.0 / np.sqrt(1.0 + eps)   # eval BN: mean=0, var=1, gamma=1, beta=0
    ks = kernel_size
    Kt = 2 * ks
    even_taps, odd_taps, _, _, _ = _phase_split_taps(ks)
    params = {"encoder": [], "decoder": [], "kernel_size": ks,
              "hidden_dims": list(hidden_dims), "mxu_dtype": mxu_dtype}

    # Encoder Conv1d: (Cout, Cin, K) -> tap-major (K*Cin, Cout), stored in MXU dtype.
    in_ch = 1
    for dim in hidden_dims:
        key, kw, kb = jax.random.split(key, 3)
        bound = 1.0 / np.sqrt(in_ch * ks)
        w = jax.random.uniform(kw, (dim, in_ch, ks), jnp.float32, -bound, bound)
        b = jax.random.uniform(kb, (dim,), jnp.float32, -bound, bound)
        w_flat = jnp.concatenate([w[:, :, k].T for k in range(ks)], axis=0).astype(mxu_dtype)
        scale = jnp.full((1, dim), bn_scale, jnp.float32)
        shift = (b * bn_scale).reshape(1, dim)                 # BN(conv + bias) folded
        params["encoder"].append((w_flat, scale, shift))
        in_ch = dim

    # Decoder ConvTranspose1d: (Cin, Cout, 2k) -> even/odd phase weights (k*Cin, Cout).
    rev = list(hidden_dims[::-1])
    outs = rev[1:] + [1]
    for i, (din, dout) in enumerate(zip(rev, outs)):
        key, kw, kb = jax.random.split(key, 3)
        bound = 1.0 / np.sqrt(din * Kt)
        wt = jax.random.uniform(kw, (din, dout, Kt), jnp.float32, -bound, bound)
        b = jax.random.uniform(kb, (dout,), jnp.float32, -bound, bound)
        we = jnp.concatenate([wt[:, :, t] for t in even_taps], axis=0).astype(mxu_dtype)
        wo = jnp.concatenate([wt[:, :, t] for t in odd_taps], axis=0).astype(mxu_dtype)
        if i == len(rev) - 1:            # final ConvTranspose: no BatchNorm, bias + Tanh
            scale = jnp.ones((1, dout), jnp.float32)
            shift = b.reshape(1, dout)
        else:
            scale = jnp.full((1, dout), bn_scale, jnp.float32)
            shift = (b * bn_scale).reshape(1, dout)
        params["decoder"].append((we, wo, scale, shift))
    return params


# --------------------------------------------------------------------------------------
# Forward wrapper: one pallas_call for the whole network
# --------------------------------------------------------------------------------------
def conv_autoencoder_forward(x, params):
    """x: (B, 1, L) in PyTorch NCL layout.  Returns (B, 1, L)."""
    B, C_in, L_in = x.shape
    assert C_in == 1
    ks = params["kernel_size"]
    pad = ks // 2
    hidden = params["hidden_dims"]
    mxu_dtype = params["mxu_dtype"]

    # ---- static per-layer geometry ----
    enc_cfg = []
    L, Cin = L_in, 1
    for dim in hidden:
        L_out = L + 2 * pad - ks + 1
        enc_cfg.append((L, L_out, Cin, dim))
        L, Cin = L_out // 2, dim

    _, _, e_off0, o_off0, front = _phase_split_taps(ks)
    e_start, o_start = front + e_off0, front + o_off0
    dec_cfg = []
    rev = list(hidden[::-1])
    outs = rev[1:] + [1]
    for din, dout in zip(rev, outs):
        M = L - 1 - pad + ks                                   # output rows per phase
        Lpad = max(front + L, max(e_start, o_start) + ks + M - 1)
        dec_cfg.append((L, din, dout, M, front, e_start, o_start, Lpad))
        L = 2 * M                                              # ConvTranspose output length
    L_dec, M_last = L, dec_cfg[-1][3]

    # Even/odd split of the interpolation matrix (identity when L_dec == L_in), f32.
    Mi = build_interp_matrix(L_dec, L_in)                      # (L_dec, L_in), numpy
    me_t = jnp.asarray(np.ascontiguousarray(Mi[0::2, :].T))    # (L_in, M_last)
    mo_t = jnp.asarray(np.ascontiguousarray(Mi[1::2, :].T))    # (L_in, M_last)

    # ---- flat operand list + specs ----
    x_nlc = x.reshape(B, L_in, 1).astype(jnp.float32)          # NCL -> NLC (C == 1: free)
    inputs = [x_nlc]
    in_specs = [pl.BlockSpec((None, L_in, 1), lambda b: (b, 0, 0))]

    def full_spec(arr):
        return pl.BlockSpec(arr.shape, lambda b, nd=arr.ndim: (0,) * nd)

    for layer in params["encoder"]:
        for a in layer:
            inputs.append(a)
            in_specs.append(full_spec(a))
    for layer in params["decoder"]:
        for a in layer:
            inputs.append(a)
            in_specs.append(full_spec(a))
    for a in (me_t, mo_t):
        inputs.append(a)
        in_specs.append(full_spec(a))

    scratch = [pltpu.VMEM((Lc + 2 * pad, Cc), jnp.float32) for (Lc, _, Cc, _) in enc_cfg]
    scratch += [pltpu.VMEM((Lpad, Cc), jnp.float32)
                for (_, Cc, _, _, _, _, _, Lpad) in dec_cfg]

    cfg = {"enc": enc_cfg, "dec": dec_cfg, "ks": ks, "pad": pad, "mxu_dtype": mxu_dtype}
    kernel = functools.partial(_fused_autoencoder_kernel, cfg=cfg)

    out = pl.pallas_call(
        kernel,
        out_shape=jax.ShapeDtypeStruct((B, L_in, 1), jnp.float32),
        grid=(B,),
        in_specs=in_specs,
        out_specs=pl.BlockSpec((None, L_in, 1), lambda b: (b, 0, 0)),
        scratch_shapes=scratch,
        compiler_params=pltpu.CompilerParams(
            dimension_semantics=("parallel",),                 # batch across TCs on v7x
        ),
    )(*inputs)
    return out.reshape(B, 1, L_in)                             # back to (B, 1, L) NCL


# --------------------------------------------------------------------------------------
if __name__ == "__main__":
    key = jax.random.PRNGKey(0)
    B, L = 2, 128
    hidden_dims = [32, 16, 8]
    kernel_size = 3

    key, kx = jax.random.split(key)
    x = jax.random.normal(kx, (B, 1, L), jnp.float32)          # (batch, 1, seq_len)
    params = init_params(key, hidden_dims, kernel_size)

    fwd = jax.jit(lambda inp: conv_autoencoder_forward(inp, params))
    out = jax.block_until_ready(fwd(x))

    assert out.shape == (B, 1, L), out.shape
    assert jnp.all(jnp.isfinite(out))
    print("KERNEL_OK")
</pallas_src>

<mosaic_0001>
module attributes {stable_mosaic.version = 11 : i64} {
  func.func @_fused_autoencoder_kernel(%arg0: i32, %arg1: memref<1x128x1xf32, #tpu.memory_space<vmem>>, %arg2: memref<3x32xbf16, #tpu.memory_space<vmem>>, %arg3: memref<1x32xf32, #tpu.memory_space<vmem>>, %arg4: memref<1x32xf32, #tpu.memory_space<vmem>>, %arg5: memref<96x16xbf16, #tpu.memory_space<vmem>>, %arg6: memref<1x16xf32, #tpu.memory_space<vmem>>, %arg7: memref<1x16xf32, #tpu.memory_space<vmem>>, %arg8: memref<48x8xbf16, #tpu.memory_space<vmem>>, %arg9: memref<1x8xf32, #tpu.memory_space<vmem>>, %arg10: memref<1x8xf32, #tpu.memory_space<vmem>>, %arg11: memref<24x16xbf16, #tpu.memory_space<vmem>>, %arg12: memref<24x16xbf16, #tpu.memory_space<vmem>>, %arg13: memref<1x16xf32, #tpu.memory_space<vmem>>, %arg14: memref<1x16xf32, #tpu.memory_space<vmem>>, %arg15: memref<48x32xbf16, #tpu.memory_space<vmem>>, %arg16: memref<48x32xbf16, #tpu.memory_space<vmem>>, %arg17: memref<1x32xf32, #tpu.memory_space<vmem>>, %arg18: memref<1x32xf32, #tpu.memory_space<vmem>>, %arg19: memref<96x1xbf16, #tpu.memory_space<vmem>>, %arg20: memref<96x1xbf16, #tpu.memory_space<vmem>>, %arg21: memref<1x1xf32, #tpu.memory_space<vmem>>, %arg22: memref<1x1xf32, #tpu.memory_space<vmem>>, %arg23: memref<128x71xf32, #tpu.memory_space<vmem>>, %arg24: memref<128x71xf32, #tpu.memory_space<vmem>>, %arg25: memref<1x128x1xf32, #tpu.memory_space<vmem>>, %arg26: memref<130x1xf32, #tpu.memory_space<vmem>>, %arg27: memref<66x32xf32, #tpu.memory_space<vmem>>, %arg28: memref<34x16xf32, #tpu.memory_space<vmem>>, %arg29: memref<20x8xf32, #tpu.memory_space<vmem>>, %arg30: memref<38x16xf32, #tpu.memory_space<vmem>>, %arg31: memref<74x32xf32, #tpu.memory_space<vmem>>) attributes {dimension_semantics = [#tpu.dimension_semantics<parallel>], iteration_bounds = array<i64: 2>, scalar_prefetch = 0 : i64, scratch_operands = 6 : i64, tpu.core_type = #tpu.core_type<tc>, window_params = [{transform_indices = @transform_0, window_bounds = array<i64: 1, 128, 1>}, {pipeline_mode = #tpu.pipeline_mode<synchronous>, transform_indices = @transform_1, window_bounds = array<i64: 3, 32>}, {pipeline_mode = #tpu.pipeline_mode<synchronous>, transform_indices = @transform_2, window_bounds = array<i64: 1, 32>}, {pipeline_mode = #tpu.pipeline_mode<synchronous>, transform_indices = @transform_3, window_bounds = array<i64: 1, 32>}, {pipeline_mode = #tpu.pipeline_mode<synchronous>, transform_indices = @transform_4, window_bounds = array<i64: 96, 16>}, {pipeline_mode = #tpu.pipeline_mode<synchronous>, transform_indices = @transform_5, window_bounds = array<i64: 1, 16>}, {pipeline_mode = #tpu.pipeline_mode<synchronous>, transform_indices = @transform_6, window_bounds = array<i64: 1, 16>}, {pipeline_mode = #tpu.pipeline_mode<synchronous>, transform_indices = @transform_7, window_bounds = array<i64: 48, 8>}, {pipeline_mode = #tpu.pipeline_mode<synchronous>, transform_indices = @transform_8, window_bounds = array<i64: 1, 8>}, {pipeline_mode = #tpu.pipeline_mode<synchronous>, transform_indices = @transform_9, window_bounds = array<i64: 1, 8>}, {pipeline_mode = #tpu.pipeline_mode<synchronous>, transform_indices = @transform_10, window_bounds = array<i64: 24, 16>}, {pipeline_mode = #tpu.pipeline_mode<synchronous>, transform_indices = @transform_11, window_bounds = array<i64: 24, 16>}, {pipeline_mode = #tpu.pipeline_mode<synchronous>, transform_indices = @transform_12, window_bounds = array<i64: 1, 16>}, {pipeline_mode = #tpu.pipeline_mode<synchronous>, transform_indices = @transform_13, window_bounds = array<i64: 1, 16>}, {pipeline_mode = #tpu.pipeline_mode<synchronous>, transform_indices = @transform_14, window_bounds = array<i64: 48, 32>}, {pipeline_mode = #tpu.pipeline_mode<synchronous>, transform_indices = @transform_15, window_bounds = array<i64: 48, 32>}, {pipeline_mode = #tpu.pipeline_mode<synchronous>, transform_indices = @transform_16, window_bounds = array<i64: 1, 32>}, {pipeline_mode = #tpu.pipeline_mode<synchronous>, transform_indices = @transform_17, window_bounds = array<i64: 1, 32>}, {pipeline_mode = #tpu.pipeline_mode<synchronous>, transform_indices = @transform_18, window_bounds = array<i64: 96, 1>}, {pipeline_mode = #tpu.pipeline_mode<synchronous>, transform_indices = @transform_19, window_bounds = array<i64: 96, 1>}, {pipeline_mode = #tpu.pipeline_mode<synchronous>, transform_indices = @transform_20, window_bounds = array<i64: 1, 1>}, {pipeline_mode = #tpu.pipeline_mode<synchronous>, transform_indices = @transform_21, window_bounds = array<i64: 1, 1>}, {pipeline_mode = #tpu.pipeline_mode<synchronous>, transform_indices = @transform_22, window_bounds = array<i64: 128, 71>}, {pipeline_mode = #tpu.pipeline_mode<synchronous>, transform_indices = @transform_23, window_bounds = array<i64: 128, 71>}, {transform_indices = @transform_24, window_bounds = array<i64: 1, 128, 1>}]} {
    %c0 = arith.constant 0 : index
    %c0_0 = arith.constant 0 : index
    %c0_1 = arith.constant 0 : index
    %0 = vector.load %arg1[%c0, %c0_0, %c0_1] : memref<1x128x1xf32, #tpu.memory_space<vmem>>, vector<1x128x1xf32>
    %1 = vector.shape_cast %0 : vector<1x128x1xf32> to vector<128x1xf32>
    %cst = arith.constant 0.000000e+00 : f32
    %2 = vector.broadcast %cst : f32 to vector<130x1xf32>
    %c0_2 = arith.constant 0 : index
    %c0_3 = arith.constant 0 : index
    %3 = vector.load %arg26[%c0_2, %c0_3] : memref<130x1xf32, #tpu.memory_space<vmem>>, vector<130x1xf32>
    tpu.vector_store %arg26[%c0_2, %c0_3], %2 {strides = array<i32>} : memref<130x1xf32, #tpu.memory_space<vmem>>, vector<130x1xf32>,
    %c1 = arith.constant 1 : index
    %c0_4 = arith.constant 0 : index
    %4 = vector.load %arg26[%c1, %c0_4] : memref<130x1xf32, #tpu.memory_space<vmem>>, vector<128x1xf32>
    tpu.vector_store %arg26[%c1, %c0_4], %1 {strides = array<i32>} : memref<130x1xf32, #tpu.memory_space<vmem>>, vector<128x1xf32>,
    %c0_5 = arith.constant 0 : index
    %c0_6 = arith.constant 0 : index
    %5 = vector.load %arg26[%c0_5, %c0_6] : memref<130x1xf32, #tpu.memory_space<vmem>>, vector<128x1xf32>
    %c1_7 = arith.constant 1 : index
    %c0_8 = arith.constant 0 : index
    %6 = vector.load %arg26[%c1_7, %c0_8] : memref<130x1xf32, #tpu.memory_space<vmem>>, vector<128x1xf32>
    %c2 = arith.constant 2 : index
    %c0_9 = arith.constant 0 : index
    %7 = vector.load %arg26[%c2, %c0_9] : memref<130x1xf32, #tpu.memory_space<vmem>>, vector<128x1xf32>
    %8 = tpu.concatenate %5, %6, %7 in 1 : vector<128x1xf32>, vector<128x1xf32>, vector<128x1xf32> -> vector<128x3xf32>
    %9 = arith.truncf %8 : vector<128x3xf32> to vector<128x3xbf16>
    %c0_10 = arith.constant 0 : index
    %c0_11 = arith.constant 0 : index
    %10 = vector.load %arg2[%c0_10, %c0_11] : memref<3x32xbf16, #tpu.memory_space<vmem>>, vector<3x32xbf16>
    %cst_12 = arith.constant dense<0.000000e+00> : vector<128x32xf32>
    %11 = tpu.matmul %9, %10, %cst_12 {dimension_numbers = #tpu.dot_dimension_numbers<[1], [0], [0], [1], [0, 0, 1, 1], [], []>} : vector<128x3xbf16>, vector<3x32xbf16>, vector<128x32xf32> -> vector<128x32xf32>
    %c0_13 = arith.constant 0 : index
    %c0_14 = arith.constant 0 : index
    %12 = vector.load %arg3[%c0_13, %c0_14] : memref<1x32xf32, #tpu.memory_space<vmem>>, vector<1x32xf32>
    %13 = vector.broadcast %12 : vector<1x32xf32> to vector<128x32xf32>
    %14 = arith.mulf %11, %13 : vector<128x32xf32>
    %c0_15 = arith.constant 0 : index
    %c0_16 = arith.constant 0 : index
    %15 = vector.load %arg4[%c0_15, %c0_16] : memref<1x32xf32, #tpu.memory_space<vmem>>, vector<1x32xf32>
    %16 = vector.broadcast %15 : vector<1x32xf32> to vector<128x32xf32>
    %17 = arith.addf %14, %16 : vector<128x32xf32>
    %cst_17 = arith.constant 0.000000e+00 : f32
    %18 = vector.broadcast %cst_17 : f32 to vector<128x32xf32>
    %19 = arith.maximumf %17, %18 : vector<128x32xf32>
    %20 = vector.shape_cast %19 : vector<128x32xf32> to vector<64x2x32xf32>
    %cst_18 = arith.constant dense<0xFF800000> : vector<64x32xf32>
    %21 = vector.multi_reduction <maximumf>, %20, %cst_18 [1] : vector<64x2x32xf32> to vector<64x32xf32>
    %cst_19 = arith.constant 0.000000e+00 : f32
    %22 = vector.broadcast %cst_19 : f32 to vector<66x32xf32>
    %c0_20 = arith.constant 0 : index
    %c0_21 = arith.constant 0 : index
    %23 = vector.load %arg27[%c0_20, %c0_21] : memref<66x32xf32, #tpu.memory_space<vmem>>, vector<66x32xf32>
    tpu.vector_store %arg27[%c0_20, %c0_21], %22 {strides = array<i32>} : memref<66x32xf32, #tpu.memory_space<vmem>>, vector<66x32xf32>,
    %c1_22 = arith.constant 1 : index
    %c0_23 = arith.constant 0 : index
    %24 = vector.load %arg27[%c1_22, %c0_23] : memref<66x32xf32, #tpu.memory_space<vmem>>, vector<64x32xf32>
    tpu.vector_store %arg27[%c1_22, %c0_23], %21 {strides = array<i32>} : memref<66x32xf32, #tpu.memory_space<vmem>>, vector<64x32xf32>,
    %c0_24 = arith.constant 0 : index
    %c0_25 = arith.constant 0 : index
    %25 = vector.load %arg27[%c0_24, %c0_25] : memref<66x32xf32, #tpu.memory_space<vmem>>, vector<64x32xf32>
    %c1_26 = arith.constant 1 : index
    %c0_27 = arith.constant 0 : index
    %26 = vector.load %arg27[%c1_26, %c0_27] : memref<66x32xf32, #tpu.memory_space<vmem>>, vector<64x32xf32>
    %c2_28 = arith.constant 2 : index
    %c0_29 = arith.constant 0 : index
    %27 = vector.load %arg27[%c2_28, %c0_29] : memref<66x32xf32, #tpu.memory_space<vmem>>, vector<64x32xf32>
    %28 = tpu.concatenate %25, %26, %27 in 1 : vector<64x32xf32>, vector<64x32xf32>, vector<64x32xf32> -> vector<64x96xf32>
    %29 = arith.truncf %28 : vector<64x96xf32> to vector<64x96xbf16>
    %c0_30 = arith.constant 0 : index
    %c0_31 = arith.constant 0 : index
    %30 = vector.load %arg5[%c0_30, %c0_31] : memref<96x16xbf16, #tpu.memory_space<vmem>>, vector<96x16xbf16>
    %cst_32 = arith.constant dense<0.000000e+00> : vector<64x16xf32>
    %31 = tpu.matmul %29, %30, %cst_32 {dimension_numbers = #tpu.dot_dimension_numbers<[1], [0], [0], [1], [0, 0, 1, 1], [], []>} : vector<64x96xbf16>, vector<96x16xbf16>, vector<64x16xf32> -> vector<64x16xf32>
    %c0_33 = arith.constant 0 : index
    %c0_34 = arith.constant 0 : index
    %32 = vector.load %arg6[%c0_33, %c0_34] : memref<1x16xf32, #tpu.memory_space<vmem>>, vector<1x16xf32>
    %33 = vector.broadcast %32 : vector<1x16xf32> to vector<64x16xf32>
    %34 = arith.mulf %31, %33 : vector<64x16xf32>
    %c0_35 = arith.constant 0 : index
    %c0_36 = arith.constant 0 : index
    %35 = vector.load %arg7[%c0_35, %c0_36] : memref<1x16xf32, #tpu.memory_space<vmem>>, vector<1x16xf32>
    %36 = vector.broadcast %35 : vector<1x16xf32> to vector<64x16xf32>
    %37 = arith.addf %34, %36 : vector<64x16xf32>
    %cst_37 = arith.constant 0.000000e+00 : f32
    %38 = vector.broadcast %cst_37 : f32 to vector<64x16xf32>
    %39 = arith.maximumf %37, %38 : vector<64x16xf32>
    %40 = vector.shape_cast %39 : vector<64x16xf32> to vector<32x2x16xf32>
    %cst_38 = arith.constant dense<0xFF800000> : vector<32x16xf32>
    %41 = vector.multi_reduction <maximumf>, %40, %cst_38 [1] : vector<32x2x16xf32> to vector<32x16xf32>
    %cst_39 = arith.constant 0.000000e+00 : f32
    %42 = vector.broadcast %cst_39 : f32 to vector<34x16xf32>
    %c0_40 = arith.constant 0 : index
    %c0_41 = arith.constant 0 : index
    %43 = vector.load %arg28[%c0_40, %c0_41] : memref<34x16xf32, #tpu.memory_space<vmem>>, vector<34x16xf32>
    tpu.vector_store %arg28[%c0_40, %c0_41], %42 {strides = array<i32>} : memref<34x16xf32, #tpu.memory_space<vmem>>, vector<34x16xf32>,
    %c1_42 = arith.constant 1 : index
    %c0_43 = arith.constant 0 : index
    %44 = vector.load %arg28[%c1_42, %c0_43] : memref<34x16xf32, #tpu.memory_space<vmem>>, vector<32x16xf32>
    tpu.vector_store %arg28[%c1_42, %c0_43], %41 {strides = array<i32>} : memref<34x16xf32, #tpu.memory_space<vmem>>, vector<32x16xf32>,
    %c0_44 = arith.constant 0 : index
    %c0_45 = arith.constant 0 : index
    %45 = vector.load %arg28[%c0_44, %c0_45] : memref<34x16xf32, #tpu.memory_space<vmem>>, vector<32x16xf32>
    %c1_46 = arith.constant 1 : index
    %c0_47 = arith.constant 0 : index
    %46 = vector.load %arg28[%c1_46, %c0_47] : memref<34x16xf32, #tpu.memory_space<vmem>>, vector<32x16xf32>
    %c2_48 = arith.constant 2 : index
    %c0_49 = arith.constant 0 : index
    %47 = vector.load %arg28[%c2_48, %c0_49] : memref<34x16xf32, #tpu.memory_space<vmem>>, vector<32x16xf32>
    %48 = tpu.concatenate %45, %46, %47 in 1 : vector<32x16xf32>, vector<32x16xf32>, vector<32x16xf32> -> vector<32x48xf32>
    %49 = arith.truncf %48 : vector<32x48xf32> to vector<32x48xbf16>
    %c0_50 = arith.constant 0 : index
    %c0_51 = arith.constant 0 : index
    %50 = vector.load %arg8[%c0_50, %c0_51] : memref<48x8xbf16, #tpu.memory_space<vmem>>, vector<48x8xbf16>
    %cst_52 = arith.constant dense<0.000000e+00> : vector<32x8xf32>
    %51 = tpu.matmul %49, %50, %cst_52 {dimension_numbers = #tpu.dot_dimension_numbers<[1], [0], [0], [1], [0, 0, 1, 1], [], []>} : vector<32x48xbf16>, vector<48x8xbf16>, vector<32x8xf32> -> vector<32x8xf32>
    %c0_53 = arith.constant 0 : index
    %c0_54 = arith.constant 0 : index
    %52 = vector.load %arg9[%c0_53, %c0_54] : memref<1x8xf32, #tpu.memory_space<vmem>>, vector<1x8xf32>
    %53 = vector.broadcast %52 : vector<1x8xf32> to vector<32x8xf32>
    %54 = arith.mulf %51, %53 : vector<32x8xf32>
    %c0_55 = arith.constant 0 : index
    %c0_56 = arith.constant 0 : index
    %55 = vector.load %arg10[%c0_55, %c0_56] : memref<1x8xf32, #tpu.memory_space<vmem>>, vector<1x8xf32>
    %56 = vector.broadcast %55 : vector<1x8xf32> to vector<32x8xf32>
    %57 = arith.addf %54, %56 : vector<32x8xf32>
    %cst_57 = arith.constant 0.000000e+00 : f32
    %58 = vector.broadcast %cst_57 : f32 to vector<32x8xf32>
    %59 = arith.maximumf %57, %58 : vector<32x8xf32>
    %60 = vector.shape_cast %59 : vector<32x8xf32> to vector<16x2x8xf32>
    %cst_58 = arith.constant dense<0xFF800000> : vector<16x8xf32>
    %61 = vector.multi_reduction <maximumf>, %60, %cst_58 [1] : vector<16x2x8xf32> to vector<16x8xf32>
    %cst_59 = arith.constant 0.000000e+00 : f32
    %62 = vector.broadcast %cst_59 : f32 to vector<20x8xf32>
    %c0_60 = arith.constant 0 : index
    %c0_61 = arith.constant 0 : index
    %63 = vector.load %arg29[%c0_60, %c0_61] : memref<20x8xf32, #tpu.memory_space<vmem>>, vector<20x8xf32>
    tpu.vector_store %arg29[%c0_60, %c0_61], %62 {strides = array<i32>} : memref<20x8xf32, #tpu.memory_space<vmem>>, vector<20x8xf32>,
    %c2_62 = arith.constant 2 : index
    %c0_63 = arith.constant 0 : index
    %64 = vector.load %arg29[%c2_62, %c0_63] : memref<20x8xf32, #tpu.memory_space<vmem>>, vector<16x8xf32>
    tpu.vector_store %arg29[%c2_62, %c0_63], %61 {strides = array<i32>} : memref<20x8xf32, #tpu.memory_space<vmem>>, vector<16x8xf32>,
    %c0_64 = arith.constant 0 : index
    %c0_65 = arith.constant 0 : index
    %65 = vector.load %arg29[%c0_64, %c0_65] : memref<20x8xf32, #tpu.memory_space<vmem>>, vector<17x8xf32>
    %c1_66 = arith.constant 1 : index
    %c0_67 = arith.constant 0 : index
    %66 = vector.load %arg29[%c1_66, %c0_67] : memref<20x8xf32, #tpu.memory_space<vmem>>, vector<17x8xf32>
    %c2_68 = arith.constant 2 : index
    %c0_69 = arith.constant 0 : index
    %67 = vector.load %arg29[%c2_68, %c0_69] : memref<20x8xf32, #tpu.memory_space<vmem>>, vector<17x8xf32>
    %68 = tpu.concatenate %65, %66, %67 in 1 : vector<17x8xf32>, vector<17x8xf32>, vector<17x8xf32> -> vector<17x24xf32>
    %c1_70 = arith.constant 1 : index
    %c0_71 = arith.constant 0 : index
    %69 = vector.load %arg29[%c1_70, %c0_71] : memref<20x8xf32, #tpu.memory_space<vmem>>, vector<17x8xf32>
    %c2_72 = arith.constant 2 : index
    %c0_73 = arith.constant 0 : index
    %70 = vector.load %arg29[%c2_72, %c0_73] : memref<20x8xf32, #tpu.memory_space<vmem>>, vector<17x8xf32>
    %c3 = arith.constant 3 : index
    %c0_74 = arith.constant 0 : index
    %71 = vector.load %arg29[%c3, %c0_74] : memref<20x8xf32, #tpu.memory_space<vmem>>, vector<17x8xf32>
    %72 = tpu.concatenate %69, %70, %71 in 1 : vector<17x8xf32>, vector<17x8xf32>, vector<17x8xf32> -> vector<17x24xf32>
    %73 = arith.truncf %68 : vector<17x24xf32> to vector<17x24xbf16>
    %c0_75 = arith.constant 0 : index
    %c0_76 = arith.constant 0 : index
    %74 = vector.load %arg11[%c0_75, %c0_76] : memref<24x16xbf16, #tpu.memory_space<vmem>>, vector<24x16xbf16>
    %cst_77 = arith.constant dense<0.000000e+00> : vector<17x16xf32>
    %75 = tpu.matmul %73, %74, %cst_77 {dimension_numbers = #tpu.dot_dimension_numbers<[1], [0], [0], [1], [0, 0, 1, 1], [], []>} : vector<17x24xbf16>, vector<24x16xbf16>, vector<17x16xf32> -> vector<17x16xf32>
    %c0_78 = arith.constant 0 : index
    %c0_79 = arith.constant 0 : index
    %76 = vector.load %arg13[%c0_78, %c0_79] : memref<1x16xf32, #tpu.memory_space<vmem>>, vector<1x16xf32>
    %77 = vector.broadcast %76 : vector<1x16xf32> to vector<17x16xf32>
    %78 = arith.mulf %75, %77 : vector<17x16xf32>
    %c0_80 = arith.constant 0 : index
    %c0_81 = arith.constant 0 : index
    %79 = vector.load %arg14[%c0_80, %c0_81] : memref<1x16xf32, #tpu.memory_space<vmem>>, vector<1x16xf32>
    %80 = vector.broadcast %79 : vector<1x16xf32> to vector<17x16xf32>
    %81 = arith.addf %78, %80 : vector<17x16xf32>
    %82 = arith.truncf %72 : vector<17x24xf32> to vector<17x24xbf16>
    %c0_82 = arith.constant 0 : index
    %c0_83 = arith.constant 0 : index
    %83 = vector.load %arg12[%c0_82, %c0_83] : memref<24x16xbf16, #tpu.memory_space<vmem>>, vector<24x16xbf16>
    %cst_84 = arith.constant dense<0.000000e+00> : vector<17x16xf32>
    %84 = tpu.matmul %82, %83, %cst_84 {dimension_numbers = #tpu.dot_dimension_numbers<[1], [0], [0], [1], [0, 0, 1, 1], [], []>} : vector<17x24xbf16>, vector<24x16xbf16>, vector<17x16xf32> -> vector<17x16xf32>
    %c0_85 = arith.constant 0 : index
    %c0_86 = arith.constant 0 : index
    %85 = vector.load %arg13[%c0_85, %c0_86] : memref<1x16xf32, #tpu.memory_space<vmem>>, vector<1x16xf32>
    %86 = vector.broadcast %85 : vector<1x16xf32> to vector<17x16xf32>
    %87 = arith.mulf %84, %86 : vector<17x16xf32>
    %c0_87 = arith.constant 0 : index
    %c0_88 = arith.constant 0 : index
    %88 = vector.load %arg14[%c0_87, %c0_88] : memref<1x16xf32, #tpu.memory_space<vmem>>, vector<1x16xf32>
    %89 = vector.broadcast %88 : vector<1x16xf32> to vector<17x16xf32>
    %90 = arith.addf %87, %89 : vector<17x16xf32>
    %cst_89 = arith.constant 0.000000e+00 : f32
    %91 = vector.broadcast %cst_89 : f32 to vector<17x16xf32>
    %92 = arith.maximumf %81, %91 : vector<17x16xf32>
    %cst_90 = arith.constant 0.000000e+00 : f32
    %93 = vector.broadcast %cst_90 : f32 to vector<17x16xf32>
    %94 = arith.maximumf %90, %93 : vector<17x16xf32>
    %cst_91 = arith.constant 0.000000e+00 : f32
    %95 = vector.broadcast %cst_91 : f32 to vector<38x16xf32>
    %c0_92 = arith.constant 0 : index
    %c0_93 = arith.constant 0 : index
    %96 = vector.load %arg30[%c0_92, %c0_93] : memref<38x16xf32, #tpu.memory_space<vmem>>, vector<38x16xf32>
    tpu.vector_store %arg30[%c0_92, %c0_93], %95 {strides = array<i32>} : memref<38x16xf32, #tpu.memory_space<vmem>>, vector<38x16xf32>,
    %c2_94 = arith.constant 2 : index
    %c0_95 = arith.constant 0 : index
    %97 = tpu.strided_load %arg30[%c2_94, %c0_95] {strides = array<i32: 2, 1>} : memref<38x16xf32, #tpu.memory_space<vmem>>, vector<17x16xf32>
    tpu.strided_store %arg30[%c2_94, %c0_95], %92 {strides = array<i32: 2, 1>} : memref<38x16xf32, #tpu.memory_space<vmem>>, vector<17x16xf32>
    %c3_96 = arith.constant 3 : index
    %c0_97 = arith.constant 0 : index
    %98 = tpu.strided_load %arg30[%c3_96, %c0_97] {strides = array<i32: 2, 1>} : memref<38x16xf32, #tpu.memory_space<vmem>>, vector<17x16xf32>
    tpu.strided_store %arg30[%c3_96, %c0_97], %94 {strides = array<i32: 2, 1>} : memref<38x16xf32, #tpu.memory_space<vmem>>, vector<17x16xf32>
    %c0_98 = arith.constant 0 : index
    %c0_99 = arith.constant 0 : index
    %99 = vector.load %arg30[%c0_98, %c0_99] : memref<38x16xf32, #tpu.memory_space<vmem>>, vector<35x16xf32>
    %c1_100 = arith.constant 1 : index
    %c0_101 = arith.constant 0 : index
    %100 = vector.load %arg30[%c1_100, %c0_101] : memref<38x16xf32, #tpu.memory_space<vmem>>, vector<35x16xf32>
    %c2_102 = arith.constant 2 : index
    %c0_103 = arith.constant 0 : index
    %101 = vector.load %arg30[%c2_102, %c0_103] : memref<38x16xf32, #tpu.memory_space<vmem>>, vector<35x16xf32>
    %102 = tpu.concatenate %99, %100, %101 in 1 : vector<35x16xf32>, vector<35x16xf32>, vector<35x16xf32> -> vector<35x48xf32>
    %c1_104 = arith.constant 1 : index
    %c0_105 = arith.constant 0 : index
    %103 = vector.load %arg30[%c1_104, %c0_105] : memref<38x16xf32, #tpu.memory_space<vmem>>, vector<35x16xf32>
    %c2_106 = arith.constant 2 : index
    %c0_107 = arith.constant 0 : index
    %104 = vector.load %arg30[%c2_106, %c0_107] : memref<38x16xf32, #tpu.memory_space<vmem>>, vector<35x16xf32>
    %c3_108 = arith.constant 3 : index
    %c0_109 = arith.constant 0 : index
    %105 = vector.load %arg30[%c3_108, %c0_109] : memref<38x16xf32, #tpu.memory_space<vmem>>, vector<35x16xf32>
    %106 = tpu.concatenate %103, %104, %105 in 1 : vector<35x16xf32>, vector<35x16xf32>, vector<35x16xf32> -> vector<35x48xf32>
    %107 = arith.truncf %102 : vector<35x48xf32> to vector<35x48xbf16>
    %c0_110 = arith.constant 0 : index
    %c0_111 = arith.constant 0 : index
    %108 = vector.load %arg15[%c0_110, %c0_111] : memref<48x32xbf16, #tpu.memory_space<vmem>>, vector<48x32xbf16>
    %cst_112 = arith.constant dense<0.000000e+00> : vector<35x32xf32>
    %109 = tpu.matmul %107, %108, %cst_112 {dimension_numbers = #tpu.dot_dimension_numbers<[1], [0], [0], [1], [0, 0, 1, 1], [], []>} : vector<35x48xbf16>, vector<48x32xbf16>, vector<35x32xf32> -> vector<35x32xf32>
    %c0_113 = arith.constant 0 : index
    %c0_114 = arith.constant 0 : index
    %110 = vector.load %arg17[%c0_113, %c0_114] : memref<1x32xf32, #tpu.memory_space<vmem>>, vector<1x32xf32>
    %111 = vector.broadcast %110 : vector<1x32xf32> to vector<35x32xf32>
    %112 = arith.mulf %109, %111 : vector<35x32xf32>
    %c0_115 = arith.constant 0 : index
    %c0_116 = arith.constant 0 : index
    %113 = vector.load %arg18[%c0_115, %c0_116] : memref<1x32xf32, #tpu.memory_space<vmem>>, vector<1x32xf32>
    %114 = vector.broadcast %113 : vector<1x32xf32> to vector<35x32xf32>
    %115 = arith.addf %112, %114 : vector<35x32xf32>
    %116 = arith.truncf %106 : vector<35x48xf32> to vector<35x48xbf16>
    %c0_117 = arith.constant 0 : index
    %c0_118 = arith.constant 0 : index
    %117 = vector.load %arg16[%c0_117, %c0_118] : memref<48x32xbf16, #tpu.memory_space<vmem>>, vector<48x32xbf16>
    %cst_119 = arith.constant dense<0.000000e+00> : vector<35x32xf32>
    %118 = tpu.matmul %116, %117, %cst_119 {dimension_numbers = #tpu.dot_dimension_numbers<[1], [0], [0], [1], [0, 0, 1, 1], [], []>} : vector<35x48xbf16>, vector<48x32xbf16>, vector<35x32xf32> -> vector<35x32xf32>
    %c0_120 = arith.constant 0 : index
    %c0_121 = arith.constant 0 : index
    %119 = vector.load %arg17[%c0_120, %c0_121] : memref<1x32xf32, #tpu.memory_space<vmem>>, vector<1x32xf32>
    %120 = vector.broadcast %119 : vector<1x32xf32> to vector<35x32xf32>
    %121 = arith.mulf %118, %120 : vector<35x32xf32>
    %c0_122 = arith.constant 0 : index
    %c0_123 = arith.constant 0 : index
    %122 = vector.load %arg18[%c0_122, %c0_123] : memref<1x32xf32, #tpu.memory_space<vmem>>, vector<1x32xf32>
    %123 = vector.broadcast %122 : vector<1x32xf32> to vector<35x32xf32>
    %124 = arith.addf %121, %123 : vector<35x32xf32>
    %cst_124 = arith.constant 0.000000e+00 : f32
    %125 = vector.broadcast %cst_124 : f32 to vector<35x32xf32>
    %126 = arith.maximumf %115, %125 : vector<35x32xf32>
    %cst_125 = arith.constant 0.000000e+00 : f32
    %127 = vector.broadcast %cst_125 : f32 to vector<35x32xf32>
    %128 = arith.maximumf %124, %127 : vector<35x32xf32>
    %cst_126 = arith.constant 0.000000e+00 : f32
    %129 = vector.broadcast %cst_126 : f32 to vector<74x32xf32>
    %c0_127 = arith.constant 0 : index
    %c0_128 = arith.constant 0 : index
    %130 = vector.load %arg31[%c0_127, %c0_128] : memref<74x32xf32, #tpu.memory_space<vmem>>, vector<74x32xf32>
    tpu.vector_store %arg31[%c0_127, %c0_128], %129 {strides = array<i32>} : memref<74x32xf32, #tpu.memory_space<vmem>>, vector<74x32xf32>,
    %c2_129 = arith.constant 2 : index
    %c0_130 = arith.constant 0 : index
    %131 = tpu.strided_load %arg31[%c2_129, %c0_130] {strides = array<i32: 2, 1>} : memref<74x32xf32, #tpu.memory_space<vmem>>, vector<35x32xf32>
    tpu.strided_store %arg31[%c2_129, %c0_130], %126 {strides = array<i32: 2, 1>} : memref<74x32xf32, #tpu.memory_space<vmem>>, vector<35x32xf32>
    %c3_131 = arith.constant 3 : index
    %c0_132 = arith.constant 0 : index
    %132 = tpu.strided_load %arg31[%c3_131, %c0_132] {strides = array<i32: 2, 1>} : memref<74x32xf32, #tpu.memory_space<vmem>>, vector<35x32xf32>
    tpu.strided_store %arg31[%c3_131, %c0_132], %128 {strides = array<i32: 2, 1>} : memref<74x32xf32, #tpu.memory_space<vmem>>, vector<35x32xf32>
    %c0_133 = arith.constant 0 : index
    %c0_134 = arith.constant 0 : index
    %133 = vector.load %arg31[%c0_133, %c0_134] : memref<74x32xf32, #tpu.memory_space<vmem>>, vector<71x32xf32>
    %c1_135 = arith.constant 1 : index
    %c0_136 = arith.constant 0 : index
    %134 = vector.load %arg31[%c1_135, %c0_136] : memref<74x32xf32, #tpu.memory_space<vmem>>, vector<71x32xf32>
    %c2_137 = arith.constant 2 : index
    %c0_138 = arith.constant 0 : index
    %135 = vector.load %arg31[%c2_137, %c0_138] : memref<74x32xf32, #tpu.memory_space<vmem>>, vector<71x32xf32>
    %136 = tpu.concatenate %133, %134, %135 in 1 : vector<71x32xf32>, vector<71x32xf32>, vector<71x32xf32> -> vector<71x96xf32>
    %c1_139 = arith.constant 1 : index
    %c0_140 = arith.constant 0 : index
    %137 = vector.load %arg31[%c1_139, %c0_140] : memref<74x32xf32, #tpu.memory_space<vmem>>, vector<71x32xf32>
    %c2_141 = arith.constant 2 : index
    %c0_142 = arith.constant 0 : index
    %138 = vector.load %arg31[%c2_141, %c0_142] : memref<74x32xf32, #tpu.memory_space<vmem>>, vector<71x32xf32>
    %c3_143 = arith.constant 3 : index
    %c0_144 = arith.constant 0 : index
    %139 = vector.load %arg31[%c3_143, %c0_144] : memref<74x32xf32, #tpu.memory_space<vmem>>, vector<71x32xf32>
    %140 = tpu.concatenate %137, %138, %139 in 1 : vector<71x32xf32>, vector<71x32xf32>, vector<71x32xf32> -> vector<71x96xf32>
    %141 = arith.truncf %136 : vector<71x96xf32> to vector<71x96xbf16>
    %c0_145 = arith.constant 0 : index
    %c0_146 = arith.constant 0 : index
    %142 = vector.load %arg19[%c0_145, %c0_146] : memref<96x1xbf16, #tpu.memory_space<vmem>>, vector<96x1xbf16>
    %cst_147 = arith.constant dense<0.000000e+00> : vector<71x1xf32>
    %143 = tpu.matmul %141, %142, %cst_147 {dimension_numbers = #tpu.dot_dimension_numbers<[1], [0], [0], [1], [0, 0, 1, 1], [], []>} : vector<71x96xbf16>, vector<96x1xbf16>, vector<71x1xf32> -> vector<71x1xf32>
    %c0_148 = arith.constant 0 : index
    %c0_149 = arith.constant 0 : index
    %144 = vector.load %arg21[%c0_148, %c0_149] : memref<1x1xf32, #tpu.memory_space<vmem>>, vector<1x1xf32>
    %145 = vector.broadcast %144 : vector<1x1xf32> to vector<71x1xf32>
    %146 = arith.mulf %143, %145 : vector<71x1xf32>
    %c0_150 = arith.constant 0 : index
    %c0_151 = arith.constant 0 : index
    %147 = vector.load %arg22[%c0_150, %c0_151] : memref<1x1xf32, #tpu.memory_space<vmem>>, vector<1x1xf32>
    %148 = vector.broadcast %147 : vector<1x1xf32> to vector<71x1xf32>
    %149 = arith.addf %146, %148 : vector<71x1xf32>
    %150 = arith.truncf %140 : vector<71x96xf32> to vector<71x96xbf16>
    %c0_152 = arith.constant 0 : index
    %c0_153 = arith.constant 0 : index
    %151 = vector.load %arg20[%c0_152, %c0_153] : memref<96x1xbf16, #tpu.memory_space<vmem>>, vector<96x1xbf16>
    %cst_154 = arith.constant dense<0.000000e+00> : vector<71x1xf32>
    %152 = tpu.matmul %150, %151, %cst_154 {dimension_numbers = #tpu.dot_dimension_numbers<[1], [0], [0], [1], [0, 0, 1, 1], [], []>} : vector<71x96xbf16>, vector<96x1xbf16>, vector<71x1xf32> -> vector<71x1xf32>
    %c0_155 = arith.constant 0 : index
    %c0_156 = arith.constant 0 : index
    %153 = vector.load %arg21[%c0_155, %c0_156] : memref<1x1xf32, #tpu.memory_space<vmem>>, vector<1x1xf32>
    %154 = vector.broadcast %153 : vector<1x1xf32> to vector<71x1xf32>
    %155 = arith.mulf %152, %154 : vector<71x1xf32>
    %c0_157 = arith.constant 0 : index
    %c0_158 = arith.constant 0 : index
    %156 = vector.load %arg22[%c0_157, %c0_158] : memref<1x1xf32, #tpu.memory_space<vmem>>, vector<1x1xf32>
    %157 = vector.broadcast %156 : vector<1x1xf32> to vector<71x1xf32>
    %158 = arith.addf %155, %157 : vector<71x1xf32>
    %159 = math.tanh %149 : vector<71x1xf32>
    %160 = math.tanh %158 : vector<71x1xf32>
    %c0_159 = arith.constant 0 : index
    %c0_160 = arith.constant 0 : index
    %161 = vector.load %arg23[%c0_159, %c0_160] : memref<128x71xf32, #tpu.memory_space<vmem>>, vector<128x71xf32>
    %cst_161 = arith.constant dense<0.000000e+00> : vector<128x1xf32>
    %162 = tpu.matmul %161, %159, %cst_161 {dimension_numbers = #tpu.dot_dimension_numbers<[1], [0], [0], [1], [0, 0, 1, 1], [], []>} : vector<128x71xf32>, vector<71x1xf32>, vector<128x1xf32> -> vector<128x1xf32>
    %c0_162 = arith.constant 0 : index
    %c0_163 = arith.constant 0 : index
    %163 = vector.load %arg24[%c0_162, %c0_163] : memref<128x71xf32, #tpu.memory_space<vmem>>, vector<128x71xf32>
    %cst_164 = arith.constant dense<0.000000e+00> : vector<128x1xf32>
    %164 = tpu.matmul %163, %160, %cst_164 {dimension_numbers = #tpu.dot_dimension_numbers<[1], [0], [0], [1], [0, 0, 1, 1], [], []>} : vector<128x71xf32>, vector<71x1xf32>, vector<128x1xf32> -> vector<128x1xf32>
    %165 = arith.addf %162, %164 : vector<128x1xf32>
    %c0_165 = arith.constant 0 : index
    %c0_166 = arith.constant 0 : index
    %c0_167 = arith.constant 0 : index
    %166 = vector.load %arg25[%c0_165, %c0_166, %c0_167] : memref<1x128x1xf32, #tpu.memory_space<vmem>>, vector<1x128x1xf32>
    %167 = vector.shape_cast %166 : vector<1x128x1xf32> to vector<128x1xf32>
    %168 = vector.shape_cast %165 : vector<128x1xf32> to vector<1x128x1xf32>
    tpu.vector_store %arg25[%c0_165, %c0_166, %c0_167], %168 {strides = array<i32>} : memref<1x128x1xf32, #tpu.memory_space<vmem>>, vector<1x128x1xf32>,
    return
  }
  func.func @transform_0(%arg0: i32) -> (i32, i32, i32) {
    %c0_i32 = arith.constant 0 : i32
    %c0_i32_0 = arith.constant 0 : i32
    %c0_i32_1 = arith.constant 0 : i32
    return %arg0, %c0_i32, %c0_i32_0 : i32, i32, i32
  }
  func.func @transform_1(%arg0: i32) -> (i32, i32) {
    %c0_i32 = arith.constant 0 : i32
    %c0_i32_0 = arith.constant 0 : i32
    %c0_i32_1 = arith.constant 0 : i32
    return %c0_i32, %c0_i32_0 : i32, i32
  }
  func.func @transform_2(%arg0: i32) -> (i32, i32) {
    %c0_i32 = arith.constant 0 : i32
    %c0_i32_0 = arith.constant 0 : i32
    %c0_i32_1 = arith.constant 0 : i32
    return %c0_i32, %c0_i32_0 : i32, i32
  }
  func.func @transform_3(%arg0: i32) -> (i32, i32) {
    %c0_i32 = arith.constant 0 : i32
    %c0_i32_0 = arith.constant 0 : i32
    %c0_i32_1 = arith.constant 0 : i32
    return %c0_i32, %c0_i32_0 : i32, i32
  }
  func.func @transform_4(%arg0: i32) -> (i32, i32) {
    %c0_i32 = arith.constant 0 : i32
    %c0_i32_0 = arith.constant 0 : i32
    %c0_i32_1 = arith.constant 0 : i32
    return %c0_i32, %c0_i32_0 : i32, i32
  }
  func.func @transform_5(%arg0: i32) -> (i32, i32) {
    %c0_i32 = arith.constant 0 : i32
    %c0_i32_0 = arith.constant 0 : i32
    %c0_i32_1 = arith.constant 0 : i32
    return %c0_i32, %c0_i32_0 : i32, i32
  }
  func.func @transform_6(%arg0: i32) -> (i32, i32) {
    %c0_i32 = arith.constant 0 : i32
    %c0_i32_0 = arith.constant 0 : i32
    %c0_i32_1 = arith.constant 0 : i32
    return %c0_i32, %c0_i32_0 : i32, i32
  }
  func.func @transform_7(%arg0: i32) -> (i32, i32) {
    %c0_i32 = arith.constant 0 : i32
    %c0_i32_0 = arith.constant 0 : i32
    %c0_i32_1 = arith.constant 0 : i32
    return %c0_i32, %c0_i32_0 : i32, i32
  }
  func.func @transform_8(%arg0: i32) -> (i32, i32) {
    %c0_i32 = arith.constant 0 : i32
    %c0_i32_0 = arith.constant 0 : i32
    %c0_i32_1 = arith.constant 0 : i32
    return %c0_i32, %c0_i32_0 : i32, i32
  }
  func.func @transform_9(%arg0: i32) -> (i32, i32) {
    %c0_i32 = arith.constant 0 : i32
    %c0_i32_0 = arith.constant 0 : i32
    %c0_i32_1 = arith.constant 0 : i32
    return %c0_i32, %c0_i32_0 : i32, i32
  }
  func.func @transform_10(%arg0: i32) -> (i32, i32) {
    %c0_i32 = arith.constant 0 : i32
    %c0_i32_0 = arith.constant 0 : i32
    %c0_i32_1 = arith.constant 0 : i32
    return %c0_i32, %c0_i32_0 : i32, i32
  }
  func.func @transform_11(%arg0: i32) -> (i32, i32) {
    %c0_i32 = arith.constant 0 : i32
    %c0_i32_0 = arith.constant 0 : i32
    %c0_i32_1 = arith.constant 0 : i32
    return %c0_i32, %c0_i32_0 : i32, i32
  }
  func.func @transform_12(%arg0: i32) -> (i32, i32) {
    %c0_i32 = arith.constant 0 : i32
    %c0_i32_0 = arith.constant 0 : i32
    %c0_i32_1 = arith.constant 0 : i32
    return %c0_i32, %c0_i32_0 : i32, i32
  }
  func.func @transform_13(%arg0: i32) -> (i32, i32) {
    %c0_i32 = arith.constant 0 : i32
    %c0_i32_0 = arith.constant 0 : i32
    %c0_i32_1 = arith.constant 0 : i32
    return %c0_i32, %c0_i32_0 : i32, i32
  }
  func.func @transform_14(%arg0: i32) -> (i32, i32) {
    %c0_i32 = arith.constant 0 : i32
    %c0_i32_0 = arith.constant 0 : i32
    %c0_i32_1 = arith.constant 0 : i32
    return %c0_i32, %c0_i32_0 : i32, i32
  }
  func.func @transform_15(%arg0: i32) -> (i32, i32) {
    %c0_i32 = arith.constant 0 : i32
    %c0_i32_0 = arith.constant 0 : i32
    %c0_i32_1 = arith.constant 0 : i32
    return %c0_i32, %c0_i32_0 : i32, i32
  }
  func.func @transform_16(%arg0: i32) -> (i32, i32) {
    %c0_i32 = arith.constant 0 : i32
    %c0_i32_0 = arith.constant 0 : i32
    %c0_i32_1 = arith.constant 0 : i32
    return %c0_i32, %c0_i32_0 : i32, i32
  }
  func.func @transform_17(%arg0: i32) -> (i32, i32) {
    %c0_i32 = arith.constant 0 : i32
    %c0_i32_0 = arith.constant 0 : i32
    %c0_i32_1 = arith.constant 0 : i32
    return %c0_i32, %c0_i32_0 : i32, i32
  }
  func.func @transform_18(%arg0: i32) -> (i32, i32) {
    %c0_i32 = arith.constant 0 : i32
    %c0_i32_0 = arith.constant 0 : i32
    %c0_i32_1 = arith.constant 0 : i32
    return %c0_i32, %c0_i32_0 : i32, i32
  }
  func.func @transform_19(%arg0: i32) -> (i32, i32) {
    %c0_i32 = arith.constant 0 : i32
    %c0_i32_0 = arith.constant 0 : i32
    %c0_i32_1 = arith.constant 0 : i32
    return %c0_i32, %c0_i32_0 : i32, i32
  }
  func.func @transform_20(%arg0: i32) -> (i32, i32) {
    %c0_i32 = arith.constant 0 : i32
    %c0_i32_0 = arith.constant 0 : i32
    %c0_i32_1 = arith.constant 0 : i32
    return %c0_i32, %c0_i32_0 : i32, i32
  }
  func.func @transform_21(%arg0: i32) -> (i32, i32) {
    %c0_i32 = arith.constant 0 : i32
    %c0_i32_0 = arith.constant 0 : i32
    %c0_i32_1 = arith.constant 0 : i32
    return %c0_i32, %c0_i32_0 : i32, i32
  }
  func.func @transform_22(%arg0: i32) -> (i32, i32) {
    %c0_i32 = arith.constant 0 : i32
    %c0_i32_0 = arith.constant 0 : i32
    %c0_i32_1 = arith.constant 0 : i32
    return %c0_i32, %c0_i32_0 : i32, i32
  }
  func.func @transform_23(%arg0: i32) -> (i32, i32) {
    %c0_i32 = arith.constant 0 : i32
    %c0_i32_0 = arith.constant 0 : i32
    %c0_i32_1 = arith.constant 0 : i32
    return %c0_i32, %c0_i32_0 : i32, i32
  }
  func.func @transform_24(%arg0: i32) -> (i32, i32, i32) {
    %c0_i32 = arith.constant 0 : i32
    %c0_i32_0 = arith.constant 0 : i32
    %c0_i32_1 = arith.constant 0 : i32
    return %arg0, %c0_i32, %c0_i32_0 : i32, i32, i32
  }
}

</mosaic_0001>

<llo_original>
// kernel: _lambda_.1
$region0: #{_lambda_.1}
  #allocation0 [shape = 'u32[]', space=smem, size = 0x4, offset = 0x4, fixed_abs, tag = 'smem constant byte address 0x4 - core index']
  #allocation1 [shape = 'u32[144,128]{1,0:T(1,128)}', space=vmem, size = 0x12000, scoped, tag = 'internal scratch']
  #allocation2 [shape = 'f32[130,1]{1,0:T(8,128)}', space=vmem, size = 0x11000, scoped, tag = 'scratch operand']
  #allocation3 [shape = 'f32[66,32]{1,0:T(8,128)}', space=vmem, size = 0x9000, scoped, tag = 'scratch operand']
  #allocation4 [shape = 'f32[34,16]{1,0:T(8,128)}', space=vmem, size = 0x5000, scoped, tag = 'scratch operand']
  #allocation5 [shape = 'f32[20,8]{1,0:T(8,128)}', space=vmem, size = 0x3000, scoped, tag = 'scratch operand']
  #allocation6 [shape = 'f32[38,16]{1,0:T(8,128)}', space=vmem, size = 0x5000, scoped, tag = 'scratch operand']
  #allocation7 [shape = 'f32[74,32]{1,0:T(8,128)}', space=vmem, size = 0xa000, scoped, tag = 'scratch operand']
  #allocation8 [shape = 'f32[1,1]{1,0:T(1,128)S(1)}', space=vmem, size = 0x200, scoped, tag = 'scoped memory for _lambda_.1']
  #allocation9 [shape = 'f32[1,1]{1,0:T(1,128)S(1)}', space=vmem, size = 0x200, scoped, tag = 'scoped memory for _lambda_.1']
  %s0 = inlined_call_operand.vmem [shape: f32[2,128,1], index: 0, kind: input, shape index: {}]
  %s1 = inlined_call_operand.hbm [shape: bf16[3,32], index: 1, kind: input, shape index: {}]
  %s2 = inlined_call_operand.vmem [shape: f32[1,32], index: 2, kind: input, shape index: {}, may-alias: {2,16}]
  %s3 = inlined_call_operand.hbm [shape: f32[1,32], index: 3, kind: input, shape index: {}]
  %s4 = inlined_call_operand.hbm [shape: bf16[96,16], index: 4, kind: input, shape index: {}]
  %s5 = inlined_call_operand.vmem [shape: f32[1,16], index: 5, kind: input, shape index: {}, may-alias: {5,12}]
  %s6 = inlined_call_operand.hbm [shape: f32[1,16], index: 6, kind: input, shape index: {}]
  %s7 = inlined_call_operand.hbm [shape: bf16[48,8], index: 7, kind: input, shape index: {}]
  %s8 = inlined_call_operand.vmem [shape: f32[1,8], index: 8, kind: input, shape index: {}]
  %s9 = inlined_call_operand.hbm [shape: f32[1,8], index: 9, kind: input, shape index: {}]
  %s10 = inlined_call_operand.hbm [shape: bf16[24,16], index: 10, kind: input, shape index: {}]
  %s11 = inlined_call_operand.hbm [shape: bf16[24,16], index: 11, kind: input, shape index: {}]
  %s12 = inlined_call_operand.vmem [shape: f32[1,16], index: 12, kind: input, shape index: {}, may-alias: {5,12}]
  %s13 = inlined_call_operand.vmem [shape: f32[1,16], index: 13, kind: input, shape index: {}]
  %s14 = inlined_call_operand.hbm [shape: bf16[48,32], index: 14, kind: input, shape index: {}]
  %s15 = inlined_call_operand.vmem [shape: bf16[48,32], index: 15, kind: input, shape index: {}]
  %s16 = inlined_call_operand.vmem [shape: f32[1,32], index: 16, kind: input, shape index: {}, may-alias: {2,16}]
  %s17 = inlined_call_operand.vmem [shape: f32[1,32], index: 17, kind: input, shape index: {}]
  %s18 = inlined_call_operand.hbm [shape: bf16[96,1], index: 18, kind: input, shape index: {}]
  %s19 = inlined_call_operand.hbm [shape: bf16[96,1], index: 19, kind: input, shape index: {}]
  %s20 = inlined_call_operand.<no memory space> [shape: f32[1,1], index: 20, kind: input, shape index: {}]
  %s21 = inlined_call_operand.<no memory space> [shape: f32[1,1], index: 21, kind: input, shape index: {}]
  %s22 = inlined_call_operand.vmem [shape: f32[128,71], index: 22, kind: input, shape index: {}]
  %s23 = inlined_call_operand.vmem [shape: f32[128,71], index: 23, kind: input, shape index: {}]
  %s24 = inlined_call_operand.vmem [shape: f32[2,128,1], index: 24, kind: output, shape index: {}]
  %s25 = sld [smem:[#allocation0]]
  $region173: #{_lambda_.1} parent=0
    _
  %s27 = ssub.s32 1, %s25
  %s28 = scalar_select 0, %s27, %s25
  %v29 = vstv %s20
  %30 = vst [vmem:[#allocation8] sm:$0x1] %v29
  %v31 = vstv %s21
  %32 = vst [vmem:[#allocation9] sm:$0x1] %v31
  $region1: #{_lambda_.1} parent=0
    #allocation10 [shape = 'u8[1024]{0}', space=vmem, size = 0x400, scoped, tag = 'input window, operand 1, single buffered']
    #allocation11 [shape = 's32[2]{0}', space=sflag, size = 0x8, scoped, tag = 'scoped memory for _lambda_.1']
    #allocation12 [shape = 'u8[512]{0}', space=vmem, size = 0x400, scoped, tag = 'input window, operand 3, single buffered']
    #allocation13 [shape = 's32[1]{0}', space=sflag, size = 0x4, scoped, tag = 'scoped memory for _lambda_.1']
    #allocation14 [shape = 'u8[24576]{0}', space=vmem, size = 0x6000, scoped, tag = 'input window, operand 4, single buffered']
    #allocation15 [shape = 'u8[512]{0}', space=vmem, size = 0x400, scoped, tag = 'input window, operand 6, single buffered']
    #allocation16 [shape = 's32[1]{0}', space=sflag, size = 0x4, scoped, tag = 'scoped memory for _lambda_.1']
    #allocation17 [shape = 'u8[12288]{0}', space=vmem, size = 0x3000, scoped, tag = 'input window, operand 7, single buffered']
    #allocation18 [shape = 'u8[512]{0}', space=vmem, size = 0x400, scoped, tag = 'input window, operand 9, single buffered']
    #allocation19 [shape = 's32[1]{0}', space=sflag, size = 0x4, scoped, tag = 'scoped memory for _lambda_.1']
    #allocation20 [shape = 'u8[6144]{0}', space=vmem, size = 0x1800, scoped, tag = 'input window, operand 10, single buffered']
    #allocation21 [shape = 'u8[6144]{0}', space=vmem, size = 0x1800, scoped, tag = 'input window, operand 11, single buffered']
    #allocation22 [shape = 's32[1]{0}', space=sflag, size = 0x4, scoped, tag = 'scoped memory for _lambda_.1']
    #allocation23 [shape = 'u8[12288]{0}', space=vmem, size = 0x3000, scoped, tag = 'input window, operand 14, single buffered']
    #allocation24 [shape = 'u8[24576]{0}', space=vmem, size = 0x6000, scoped, tag = 'input window, operand 18, single buffered']
    #allocation25 [shape = 's32[1]{0}', space=sflag, size = 0x4, scoped, tag = 'scoped memory for _lambda_.1']
    #allocation26 [shape = 'u8[24576]{0}', space=vmem, size = 0x6000, scoped, tag = 'input window, operand 19, single buffered']
    %33 = vsyncpa [#allocation11], 0
    %34 = vsyncpa [#allocation13], 0
    %35 = vsyncpa [#allocation16], 0
    %36 = vsyncpa [#allocation19], 0
    %37 = vsyncpa [#allocation22], 0
    %38 = vsyncpa [#allocation25], 0
    loop: start=0, step=1, limit=4
    $region2: #{_lambda_.1} parent=1 // loop_pre_header
      _
    $region3: #{_lambda_.1} parent=1 // loop_header
      %s40 = sphi 0, %s44
      %p41 = scmp.ge.s32.totalorder %s40, 4
      %s50 = sphi 0, %s52
      %s53 = sphi 0, %s50
      %s54 = sphi 0, %s53
      %s70 = sphi 0, %s54
      %s74 = sphi 0, %s74
      %s76 = sphi 0, %s74
      %s77 = sphi 0, %s76
      %s91 = sphi 0, %s77
      %s95 = sphi 0, %s95
      %s97 = sphi 0, %s95
      %s98 = sphi 0, %s97
      %s112 = sphi 0, %s98
      %s116 = sphi 0, %s116
      %s118 = sphi 0, %s116
      %s119 = sphi 0, %s118
      %s133 = sphi 0, %s119
      %s137 = sphi 0, %s137
      %s139 = sphi 0, %s137
      %s140 = sphi 0, %s139
      %s154 = sphi 0, %s140
      %s158 = sphi 0, %s158
      %s160 = sphi 0, %s158
      %s161 = sphi 0, %s160
      %s175 = sphi 0, %s161
      %s179 = sphi 0, %s179
      %s181 = sphi 0, %s179
      %s182 = sphi 0, %s181
      %s196 = sphi 0, %s182
      %s200 = sphi 0, %s200
      %s202 = sphi 0, %s200
      %s203 = sphi 0, %s202
      %s217 = sphi 0, %s203
      %s221 = sphi 0, %s221
      %s223 = sphi 0, %s221
      %s224 = sphi 0, %s223
      %s238 = sphi 0, %s224
      %s242 = sphi 0, %s242
      %s244 = sphi 0, %s242
      %s245 = sphi 0, %s244
      %s259 = sphi 0, %s245
      %s263 = sphi 0, %s263
      %s265 = sphi 0, %s263
      %s266 = sphi 0, %s265
      %s280 = sphi 0, %s266
      %s284 = sphi 0, %s284
      %s286 = sphi 0, %s284
      %s287 = sphi 0, %s286
      %s301 = sphi 0, %s287
      %s305 = sphi 0, %s305
      %s307 = sphi 0, %s305
      %s308 = sphi 0, %s307
      %s322 = sphi 0, %s308
      %s326 = sphi 0, %s326
      %s328 = sphi 0, %s326
      %s329 = sphi 0, %s328
      %s343 = sphi 0, %s329
      %s347 = sphi 0, %s347
      %s349 = sphi 0, %s347
      %s350 = sphi 0, %s349
      %s364 = sphi 0, %s350
      %s368 = sphi 0, %s368
      %s370 = sphi 0, %s368
      %s371 = sphi 0, %s370
      %s385 = sphi 0, %s371
      %s389 = sphi 0, %s389
      %s391 = sphi 0, %s389
      %s392 = sphi 0, %s391
      %s406 = sphi 0, %s392
      %s410 = sphi 0, %s410
      %s412 = sphi 0, %s410
      %s413 = sphi 0, %s412
      %s427 = sphi 0, %s413
      %s431 = sphi 0, %s431
      %s433 = sphi 0, %s431
      %s434 = sphi 0, %s433
      %s448 = sphi 0, %s434
      %s452 = sphi 0, %s452
      %s454 = sphi 0, %s452
      %s455 = sphi 0, %s454
      %s469 = sphi 0, %s455
      %s473 = sphi 0, %s473
      %s475 = sphi 0, %s473
      %s476 = sphi 0, %s475
      %s490 = sphi 0, %s476
      %s494 = sphi 0, %s494
      %s496 = sphi 0, %s494
      %s497 = sphi 0, %s496
      %s511 = sphi 0, %s497
      %s515 = sphi 0, %s515
      %s517 = sphi 0, %s515
      %s518 = sphi 0, %s517
      %s532 = sphi 0, %s518
      %s536 = sphi 0, %s536
      %s538 = sphi 0, %s536
      %s539 = sphi 0, %s538
      %s553 = sphi 0, %s539
      %s559 = sphi 0, %s561
      %s562 = sphi 0, %s559
      %s563 = sphi 0, %s562
      %s579 = sphi 0, %s563
    $region4: #{_lambda_.1} parent=1 // loop_header_branch
      %43 = sbr.rel (%p41) target = $region8
    $region5: #{_lambda_.1} parent=1 // loop_body
      %s45 = ssub.s32 %s40, 1
      %s46 = ssub.s32 %s40, 2
      %s47 = sadd.s32 %s40, 1
      %s48 = ssub.s32 %s40, %s47
      %p49 = scmp.eq.s32.totalorder %s48, 0
      %s51 = sadd.s32 %s50, 1
      %s52 = scalar_select %p49, %s50, %s51
      %p55 = pneg %p49
      %p56 = scmp.eq.s32.totalorder %s40, 1
      %p57 = por %p55, %p56
      %p58 = scmp.ne.s32.totalorder %s50, %s53
      %p59 = scmp.eq.s32.totalorder %s40, 0
      %p60 = por %p58, %p59
      %p61 = scmp.ne.s32.totalorder %s50, %s53
      %p62 = scmp.eq.s32.totalorder %s45, 1
      %p63 = por %p61, %p62
      %p64 = scmp.ne.s32.totalorder %s53, %s54
      %p65 = scmp.eq.s32.totalorder %s45, 0
      %p66 = por %p64, %p65
      %p67 = scmp.ne.s32.totalorder %s53, %s54
      %p68 = scmp.eq.s32.totalorder %s46, 1
      %p69 = por %p67, %p68
      %p71 = scmp.ne.s32.totalorder %s54, %s70
      %p72 = scmp.eq.s32.totalorder %s46, 0
      %p73 = por %p71, %p72
      %s75 = sadd.s32 %s74, 1
      %p78 = scmp.eq.s32.totalorder %s40, 1
      %p79 = scmp.ne.s32.totalorder %s74, %s76
      %p80 = scmp.eq.s32.totalorder %s40, 0
      %p81 = por %p79, %p80
      %p82 = scmp.ne.s32.totalorder %s74, %s76
      %p83 = scmp.eq.s32.totalorder %s45, 1
      %p84 = por %p82, %p83
      %p85 = scmp.ne.s32.totalorder %s76, %s77
      %p86 = scmp.eq.s32.totalorder %s45, 0
      %p87 = por %p85, %p86
      %p88 = scmp.ne.s32.totalorder %s76, %s77
      %p89 = scmp.eq.s32.totalorder %s46, 1
      %p90 = por %p88, %p89
      %p92 = scmp.ne.s32.totalorder %s77, %s91
      %p93 = scmp.eq.s32.totalorder %s46, 0
      %p94 = por %p92, %p93
      %s96 = sadd.s32 %s95, 1
      %p99 = scmp.eq.s32.totalorder %s40, 1
      %p100 = scmp.ne.s32.totalorder %s95, %s97
      %p101 = scmp.eq.s32.totalorder %s40, 0
      %p102 = por %p100, %p101
      %p103 = scmp.ne.s32.totalorder %s95, %s97
      %p104 = scmp.eq.s32.totalorder %s45, 1
      %p105 = por %p103, %p104
      %p106 = scmp.ne.s32.totalorder %s97, %s98
      %p107 = scmp.eq.s32.totalorder %s45, 0
      %p108 = por %p106, %p107
      %p109 = scmp.ne.s32.totalorder %s97, %s98
      %p110 = scmp.eq.s32.totalorder %s46, 1
      %p111 = por %p109, %p110
      %p113 = scmp.ne.s32.totalorder %s98, %s112
      %p114 = scmp.eq.s32.totalorder %s46, 0
      %p115 = por %p113, %p114
      %s117 = sadd.s32 %s116, 1
      %p120 = scmp.eq.s32.totalorder %s40, 1
      %p121 = scmp.ne.s32.totalorder %s116, %s118
      %p122 = scmp.eq.s32.totalorder %s40, 0
      %p123 = por %p121, %p122
      %p124 = scmp.ne.s32.totalorder %s116, %s118
      %p125 = scmp.eq.s32.totalorder %s45, 1
      %p126 = por %p124, %p125
      %p127 = scmp.ne.s32.totalorder %s118, %s119
      %p128 = scmp.eq.s32.totalorder %s45, 0
      %p129 = por %p127, %p128
      %p130 = scmp.ne.s32.totalorder %s118, %s119
      %p131 = scmp.eq.s32.totalorder %s46, 1
      %p132 = por %p130, %p131
      %p134 = scmp.ne.s32.totalorder %s119, %s133
      %p135 = scmp.eq.s32.totalorder %s46, 0
      %p136 = por %p134, %p135
      %s138 = sadd.s32 %s137, 1
      %p141 = scmp.eq.s32.totalorder %s40, 1
      %p142 = scmp.ne.s32.totalorder %s137, %s139
      %p143 = scmp.eq.s32.totalorder %s40, 0
      %p144 = por %p142, %p143
      %p145 = scmp.ne.s32.totalorder %s137, %s139
      %p146 = scmp.eq.s32.totalorder %s45, 1
      %p147 = por %p145, %p146
      %p148 = scmp.ne.s32.totalorder %s139, %s140
      %p149 = scmp.eq.s32.totalorder %s45, 0
      %p150 = por %p148, %p149
      %p151 = scmp.ne.s32.totalorder %s139, %s140
      %p152 = scmp.eq.s32.totalorder %s46, 1
      %p153 = por %p151, %p152
      %p155 = scmp.ne.s32.totalorder %s140, %s154
      %p156 = scmp.eq.s32.totalorder %s46, 0
      %p157 = por %p155, %p156
      %s159 = sadd.s32 %s158, 1
      %p162 = scmp.eq.s32.totalorder %s40, 1
      %p163 = scmp.ne.s32.totalorder %s158, %s160
      %p164 = scmp.eq.s32.totalorder %s40, 0
      %p165 = por %p163, %p164
      %p166 = scmp.ne.s32.totalorder %s158, %s160
      %p167 = scmp.eq.s32.totalorder %s45, 1
      %p168 = por %p166, %p167
      %p169 = scmp.ne.s32.totalorder %s160, %s161
      %p170 = scmp.eq.s32.totalorder %s45, 0
      %p171 = por %p169, %p170
      %p172 = scmp.ne.s32.totalorder %s160, %s161
      %p173 = scmp.eq.s32.totalorder %s46, 1
      %p174 = por %p172, %p173
      %p176 = scmp.ne.s32.totalorder %s161, %s175
      %p177 = scmp.eq.s32.totalorder %s46, 0
      %p178 = por %p176, %p177
      %s180 = sadd.s32 %s179, 1
      %p183 = scmp.eq.s32.totalorder %s40, 1
      %p184 = scmp.ne.s32.totalorder %s179, %s181
      %p185 = scmp.eq.s32.totalorder %s40, 0
      %p186 = por %p184, %p185
      %p187 = scmp.ne.s32.totalorder %s179, %s181
      %p188 = scmp.eq.s32.totalorder %s45, 1
      %p189 = por %p187, %p188
      %p190 = scmp.ne.s32.totalorder %s181, %s182
      %p191 = scmp.eq.s32.totalorder %s45, 0
      %p192 = por %p190, %p191
      %p193 = scmp.ne.s32.totalorder %s181, %s182
      %p194 = scmp.eq.s32.totalorder %s46, 1
      %p195 = por %p193, %p194
      %p197 = scmp.ne.s32.totalorder %s182, %s196
      %p198 = scmp.eq.s32.totalorder %s46, 0
      %p199 = por %p197, %p198
      %s201 = sadd.s32 %s200, 1
      %p204 = scmp.eq.s32.totalorder %s40, 1
      %p205 = scmp.ne.s32.totalorder %s200, %s202
      %p206 = scmp.eq.s32.totalorder %s40, 0
      %p207 = por %p205, %p206
      %p208 = scmp.ne.s32.totalorder %s200, %s202
      %p209 = scmp.eq.s32.totalorder %s45, 1
      %p210 = por %p208, %p209
      %p211 = scmp.ne.s32.totalorder %s202, %s203
      %p212 = scmp.eq.s32.totalorder %s45, 0
      %p213 = por %p211, %p212
      %p214 = scmp.ne.s32.totalorder %s202, %s203
      %p215 = scmp.eq.s32.totalorder %s46, 1
      %p216 = por %p214, %p215
      %p218 = scmp.ne.s32.totalorder %s203, %s217
      %p219 = scmp.eq.s32.totalorder %s46, 0
      %p220 = por %p218, %p219
      %s222 = sadd.s32 %s221, 1
      %p225 = scmp.eq.s32.totalorder %s40, 1
      %p226 = scmp.ne.s32.totalorder %s221, %s223
      %p227 = scmp.eq.s32.totalorder %s40, 0
      %p228 = por %p226, %p227
      %p229 = scmp.ne.s32.totalorder %s221, %s223
      %p230 = scmp.eq.s32.totalorder %s45, 1
      %p231 = por %p229, %p230
      %p232 = scmp.ne.s32.totalorder %s223, %s224
      %p233 = scmp.eq.s32.totalorder %s45, 0
      %p234 = por %p232, %p233
      %p235 = scmp.ne.s32.totalorder %s223, %s224
      %p236 = scmp.eq.s32.totalorder %s46, 1
      %p237 = por %p235, %p236
      %p239 = scmp.ne.s32.totalorder %s224, %s238
      %p240 = scmp.eq.s32.totalorder %s46, 0
      %p241 = por %p239, %p240
      %s243 = sadd.s32 %s242, 1
      %p246 = scmp.eq.s32.totalorder %s40, 1
      %p247 = scmp.ne.s32.totalorder %s242, %s244
      %p248 = scmp.eq.s32.totalorder %s40, 0
      %p249 = por %p247, %p248
      %p250 = scmp.ne.s32.totalorder %s242, %s244
      %p251 = scmp.eq.s32.totalorder %s45, 1
      %p252 = por %p250, %p251
      %p253 = scmp.ne.s32.totalorder %s244, %s245
      %p254 = scmp.eq.s32.totalorder %s45, 0
      %p255 = por %p253, %p254
      %p256 = scmp.ne.s32.totalorder %s244, %s245
      %p257 = scmp.eq.s32.totalorder %s46, 1
      %p258 = por %p256, %p257
      %p260 = scmp.ne.s32.totalorder %s245, %s259
      %p261 = scmp.eq.s32.totalorder %s46, 0
      %p262 = por %p260, %p261
      %s264 = sadd.s32 %s263, 1
      %p267 = scmp.eq.s32.totalorder %s40, 1
      %p268 = scmp.ne.s32.totalorder %s263, %s265
      %p269 = scmp.eq.s32.totalorder %s40, 0
      %p270 = por %p268, %p269
      %p271 = scmp.ne.s32.totalorder %s263, %s265
      %p272 = scmp.eq.s32.totalorder %s45, 1
      %p273 = por %p271, %p272
      %p274 = scmp.ne.s32.totalorder %s265, %s266
      %p275 = scmp.eq.s32.totalorder %s45, 0
      %p276 = por %p274, %p275
      %p277 = scmp.ne.s32.totalorder %s265, %s266
      %p278 = scmp.eq.s32.totalorder %s46, 1
      %p279 = por %p277, %p278
      %p281 = scmp.ne.s32.totalorder %s266, %s280
      %p282 = scmp.eq.s32.totalorder %s46, 0
      %p283 = por %p281, %p282
      %s285 = sadd.s32 %s284, 1
      %p288 = scmp.eq.s32.totalorder %s40, 1
      %p289 = scmp.ne.s32.totalorder %s284, %s286
      %p290 = scmp.eq.s32.totalorder %s40, 0
      %p291 = por %p289, %p290
      %p292 = scmp.ne.s32.totalorder %s284, %s286
      %p293 = scmp.eq.s32.totalorder %s45, 1
      %p294 = por %p292, %p293
      %p295 = scmp.ne.s32.totalorder %s286, %s287
      %p296 = scmp.eq.s32.totalorder %s45, 0
      %p297 = por %p295, %p296
      %p298 = scmp.ne.s32.totalorder %s286, %s287
      %p299 = scmp.eq.s32.totalorder %s46, 1
      %p300 = por %p298, %p299
      %p302 = scmp.ne.s32.totalorder %s287, %s301
      %p303 = scmp.eq.s32.totalorder %s46, 0
      %p304 = por %p302, %p303
      %s306 = sadd.s32 %s305, 1
      %p309 = scmp.eq.s32.totalorder %s40, 1
      %p310 = scmp.ne.s32.totalorder %s305, %s307
      %p311 = scmp.eq.s32.totalorder %s40, 0
      %p312 = por %p310, %p311
      %p313 = scmp.ne.s32.totalorder %s305, %s307
      %p314 = scmp.eq.s32.totalorder %s45, 1
      %p315 = por %p313, %p314
      %p316 = scmp.ne.s32.totalorder %s307, %s308
      %p317 = scmp.eq.s32.totalorder %s45, 0
      %p318 = por %p316, %p317
      %p319 = scmp.ne.s32.totalorder %s307, %s308
      %p320 = scmp.eq.s32.totalorder %s46, 1
      %p321 = por %p319, %p320
      %p323 = scmp.ne.s32.totalorder %s308, %s322
      %p324 = scmp.eq.s32.totalorder %s46, 0
      %p325 = por %p323, %p324
      %s327 = sadd.s32 %s326, 1
      %p330 = scmp.eq.s32.totalorder %s40, 1
      %p331 = scmp.ne.s32.totalorder %s326, %s328
      %p332 = scmp.eq.s32.totalorder %s40, 0
      %p333 = por %p331, %p332
      %p334 = scmp.ne.s32.totalorder %s326, %s328
      %p335 = scmp.eq.s32.totalorder %s45, 1
      %p336 = por %p334, %p335
      %p337 = scmp.ne.s32.totalorder %s328, %s329
      %p338 = scmp.eq.s32.totalorder %s45, 0
      %p339 = por %p337, %p338
      %p340 = scmp.ne.s32.totalorder %s328, %s329
      %p341 = scmp.eq.s32.totalorder %s46, 1
      %p342 = por %p340, %p341
      %p344 = scmp.ne.s32.totalorder %s329, %s343
      %p345 = scmp.eq.s32.totalorder %s46, 0
      %p346 = por %p344, %p345
      %s348 = sadd.s32 %s347, 1
      %p351 = scmp.eq.s32.totalorder %s40, 1
      %p352 = scmp.ne.s32.totalorder %s347, %s349
      %p353 = scmp.eq.s32.totalorder %s40, 0
      %p354 = por %p352, %p353
      %p355 = scmp.ne.s32.totalorder %s347, %s349
      %p356 = scmp.eq.s32.totalorder %s45, 1
      %p357 = por %p355, %p356
      %p358 = scmp.ne.s32.totalorder %s349, %s350
      %p359 = scmp.eq.s32.totalorder %s45, 0
      %p360 = por %p358, %p359
      %p361 = scmp.ne.s32.totalorder %s349, %s350
      %p362 = scmp.eq.s32.totalorder %s46, 1
      %p363 = por %p361, %p362
      %p365 = scmp.ne.s32.totalorder %s350, %s364
      %p366 = scmp.eq.s32.totalorder %s46, 0
      %p367 = por %p365, %p366
      %s369 = sadd.s32 %s368, 1
      %p372 = scmp.eq.s32.totalorder %s40, 1
      %p373 = scmp.ne.s32.totalorder %s368, %s370
      %p374 = scmp.eq.s32.totalorder %s40, 0
      %p375 = por %p373, %p374
      %p376 = scmp.ne.s32.totalorder %s368, %s370
      %p377 = scmp.eq.s32.totalorder %s45, 1
      %p378 = por %p376, %p377
      %p379 = scmp.ne.s32.totalorder %s370, %s371
      %p380 = scmp.eq.s32.totalorder %s45, 0
      %p381 = por %p379, %p380
      %p382 = scmp.ne.s32.totalorder %s370, %s371
      %p383 = scmp.eq.s32.totalorder %s46, 1
      %p384 = por %p382, %p383
      %p386 = scmp.ne.s32.totalorder %s371, %s385
      %p387 = scmp.eq.s32.totalorder %s46, 0
      %p388 = por %p386, %p387
      %s390 = sadd.s32 %s389, 1
      %p393 = scmp.eq.s32.totalorder %s40, 1
      %p394 = scmp.ne.s32.totalorder %s389, %s391
      %p395 = scmp.eq.s32.totalorder %s40, 0
      %p396 = por %p394, %p395
      %p397 = scmp.ne.s32.totalorder %s389, %s391
      %p398 = scmp.eq.s32.totalorder %s45, 1
      %p399 = por %p397, %p398
      %p400 = scmp.ne.s32.totalorder %s391, %s392
      %p401 = scmp.eq.s32.totalorder %s45, 0
      %p402 = por %p400, %p401
      %p403 = scmp.ne.s32.totalorder %s391, %s392
      %p404 = scmp.eq.s32.totalorder %s46, 1
      %p405 = por %p403, %p404
      %p407 = scmp.ne.s32.totalorder %s392, %s406
      %p408 = scmp.eq.s32.totalorder %s46, 0
      %p409 = por %p407, %p408
      %s411 = sadd.s32 %s410, 1
      %p414 = scmp.eq.s32.totalorder %s40, 1
      %p415 = scmp.ne.s32.totalorder %s410, %s412
      %p416 = scmp.eq.s32.totalorder %s40, 0
      %p417 = por %p415, %p416
      %p418 = scmp.ne.s32.totalorder %s410, %s412
      %p419 = scmp.eq.s32.totalorder %s45, 1
      %p420 = por %p418, %p419
      %p421 = scmp.ne.s32.totalorder %s412, %s413
      %p422 = scmp.eq.s32.totalorder %s45, 0
      %p423 = por %p421, %p422
      %p424 = scmp.ne.s32.totalorder %s412, %s413
      %p425 = scmp.eq.s32.totalorder %s46, 1
      %p426 = por %p424, %p425
      %p428 = scmp.ne.s32.totalorder %s413, %s427
      %p429 = scmp.eq.s32.totalorder %s46, 0
      %p430 = por %p428, %p429
      %s432 = sadd.s32 %s431, 1
      %p435 = scmp.eq.s32.totalorder %s40, 1
      %p436 = scmp.ne.s32.totalorder %s431, %s433
      %p437 = scmp.eq.s32.totalorder %s40, 0
      %p438 = por %p436, %p437
      %p439 = scmp.ne.s32.totalorder %s431, %s433
      %p440 = scmp.eq.s32.totalorder %s45, 1
      %p441 = por %p439, %p440
      %p442 = scmp.ne.s32.totalorder %s433, %s434
      %p443 = scmp.eq.s32.totalorder %s45, 0
      %p444 = por %p442, %p443
      %p445 = scmp.ne.s32.totalorder %s433, %s434
      %p446 = scmp.eq.s32.totalorder %s46, 1
      %p447 = por %p445, %p446
      %p449 = scmp.ne.s32.totalorder %s434, %s448
      %p450 = scmp.eq.s32.totalorder %s46, 0
      %p451 = por %p449, %p450
      %s453 = sadd.s32 %s452, 1
      %p456 = scmp.eq.s32.totalorder %s40, 1
      %p457 = scmp.ne.s32.totalorder %s452, %s454
      %p458 = scmp.eq.s32.totalorder %s40, 0
      %p459 = por %p457, %p458
      %p460 = scmp.ne.s32.totalorder %s452, %s454
      %p461 = scmp.eq.s32.totalorder %s45, 1
      %p462 = por %p460, %p461
      %p463 = scmp.ne.s32.totalorder %s454, %s455
      %p464 = scmp.eq.s32.totalorder %s45, 0
      %p465 = por %p463, %p464
      %p466 = scmp.ne.s32.totalorder %s454, %s455
      %p467 = scmp.eq.s32.totalorder %s46, 1
      %p468 = por %p466, %p467
      %p470 = scmp.ne.s32.totalorder %s455, %s469
      %p471 = scmp.eq.s32.totalorder %s46, 0
      %p472 = por %p470, %p471
      %s474 = sadd.s32 %s473, 1
      %p477 = scmp.eq.s32.totalorder %s40, 1
      %p478 = scmp.ne.s32.totalorder %s473, %s475
      %p479 = scmp.eq.s32.totalorder %s40, 0
      %p480 = por %p478, %p479
      %p481 = scmp.ne.s32.totalorder %s473, %s475
      %p482 = scmp.eq.s32.totalorder %s45, 1
      %p483 = por %p481, %p482
      %p484 = scmp.ne.s32.totalorder %s475, %s476
      %p485 = scmp.eq.s32.totalorder %s45, 0
      %p486 = por %p484, %p485
      %p487 = scmp.ne.s32.totalorder %s475, %s476
      %p488 = scmp.eq.s32.totalorder %s46, 1
      %p489 = por %p487, %p488
      %p491 = scmp.ne.s32.totalorder %s476, %s490
      %p492 = scmp.eq.s32.totalorder %s46, 0
      %p493 = por %p491, %p492
      %s495 = sadd.s32 %s494, 1
      %p498 = scmp.eq.s32.totalorder %s40, 1
      %p499 = scmp.ne.s32.totalorder %s494, %s496
      %p500 = scmp.eq.s32.totalorder %s40, 0
      %p501 = por %p499, %p500
      %p502 = scmp.ne.s32.totalorder %s494, %s496
      %p503 = scmp.eq.s32.totalorder %s45, 1
      %p504 = por %p502, %p503
      %p505 = scmp.ne.s32.totalorder %s496, %s497
      %p506 = scmp.eq.s32.totalorder %s45, 0
      %p507 = por %p505, %p506
      %p508 = scmp.ne.s32.totalorder %s496, %s497
      %p509 = scmp.eq.s32.totalorder %s46, 1
      %p510 = por %p508, %p509
      %p512 = scmp.ne.s32.totalorder %s497, %s511
      %p513 = scmp.eq.s32.totalorder %s46, 0
      %p514 = por %p512, %p513
      %s516 = sadd.s32 %s515, 1
      %p519 = scmp.eq.s32.totalorder %s40, 1
      %p520 = scmp.ne.s32.totalorder %s515, %s517
      %p521 = scmp.eq.s32.totalorder %s40, 0
      %p522 = por %p520, %p521
      %p523 = scmp.ne.s32.totalorder %s515, %s517
      %p524 = scmp.eq.s32.totalorder %s45, 1
      %p525 = por %p523, %p524
      %p526 = scmp.ne.s32.totalorder %s517, %s518
      %p527 = scmp.eq.s32.totalorder %s45, 0
      %p528 = por %p526, %p527
      %p529 = scmp.ne.s32.totalorder %s517, %s518
      %p530 = scmp.eq.s32.totalorder %s46, 1
      %p531 = por %p529, %p530
      %p533 = scmp.ne.s32.totalorder %s518, %s532
      %p534 = scmp.eq.s32.totalorder %s46, 0
      %p535 = por %p533, %p534
      %s537 = sadd.s32 %s536, 1
      %p540 = scmp.eq.s32.totalorder %s40, 1
      %p541 = scmp.ne.s32.totalorder %s536, %s538
      %p542 = scmp.eq.s32.totalorder %s40, 0
      %p543 = por %p541, %p542
      %p544 = scmp.ne.s32.totalorder %s536, %s538
      %p545 = scmp.eq.s32.totalorder %s45, 1
      %p546 = por %p544, %p545
      %p547 = scmp.ne.s32.totalorder %s538, %s539
      %p548 = scmp.eq.s32.totalorder %s45, 0
      %p549 = por %p547, %p548
      %p550 = scmp.ne.s32.totalorder %s538, %s539
      %p551 = scmp.eq.s32.totalorder %s46, 1
      %p552 = por %p550, %p551
      %p554 = scmp.ne.s32.totalorder %s539, %s553
      %p555 = scmp.eq.s32.totalorder %s46, 0
      %p556 = por %p554, %p555
      %s557 = ssub.s32 %s40, %s47
      %p558 = scmp.eq.s32.totalorder %s557, 0
      %s560 = sadd.s32 %s559, 1
      %s561 = scalar_select %p558, %s559, %s560
      %p564 = pneg %p558
      %p565 = scmp.eq.s32.totalorder %s40, 1
      %p566 = por %p564, %p565
      %p567 = scmp.ne.s32.totalorder %s559, %s562
      %p568 = scmp.eq.s32.totalorder %s40, 0
      %p569 = por %p567, %p568
      %p570 = scmp.ne.s32.totalorder %s559, %s562
      %p571 = scmp.eq.s32.totalorder %s45, 1
      %p572 = por %p570, %p571
      %p573 = scmp.ne.s32.totalorder %s562, %s563
      %p574 = scmp.eq.s32.totalorder %s45, 0
      %p575 = por %p573, %p574
      %p576 = scmp.ne.s32.totalorder %s562, %s563
      %p577 = scmp.eq.s32.totalorder %s46, 1
      %p578 = por %p576, %p577
      %p580 = scmp.ne.s32.totalorder %s563, %s579
      %p581 = scmp.eq.s32.totalorder %s46, 0
      %p582 = por %p580, %p581
      %p583 = scmp.le.s32.totalorder 1, %s40
      %p584 = scmp.lt.s32.totalorder %s40, 3
      %p585 = pnand %p583, %p584
      %p586 = pneg %p585
      // Predicated region
      $region9: #{_lambda_.1} parent=5 // pred_check
        _
      $region10: #{_lambda_.1} parent=5 // pred_check_branch
        %588 = sbr.rel (%p585) target = $region12
      $region11: #{_lambda_.1} parent=5 // pred_region
        %s589 = ssub.s32 %s40, 1
        // Predicated region
        $region13: #{_lambda_.1} parent=11 // pred_check
          %p590 = pneg %p87
        $region14: #{_lambda_.1} parent=11 // pred_check_branch
          %592 = sbr.rel (%p590) target = $region16
        $region15: #{_lambda_.1} parent=11 // pred_region
          %s594 = ssub.s32 32, 32
          %595 = vsyncadd [#allocation11], %s594
          %s597 = sshll.u32 [#allocation10], 4
          %s598 = int_to_ptr.vmem [resolvable:$true] %s597
          %600 = dma.hbm_to_vmem [thread:$0]  %s1, 32, %s598, [#allocation11]
        $region16: #{_lambda_.1} parent=11 // pred_fallthru
          _
        // Predicated region
        $region17: #{_lambda_.1} parent=11 // pred_check
          %p601 = pneg %p108
        $region18: #{_lambda_.1} parent=11 // pred_check_branch
          %603 = sbr.rel (%p601) target = $region20
        $region19: #{_lambda_.1} parent=11 // pred_region
          _
        $region20: #{_lambda_.1} parent=11 // pred_fallthru
          _
        // Predicated region
        $region21: #{_lambda_.1} parent=11 // pred_check
          %p604 = pneg %p129
        $region22: #{_lambda_.1} parent=11 // pred_check_branch
          %606 = sbr.rel (%p604) target = $region24
        $region23: #{_lambda_.1} parent=11 // pred_region
          %s608 = ssub.s32 16, 16
          %609 = vsyncadd [#allocation13], %s608
          %s611 = sshll.u32 [#allocation12], 4
          %s612 = int_to_ptr.vmem [resolvable:$true] %s611
          %614 = dma.hbm_to_vmem [thread:$0]  %s3, 16, %s612, [#allocation13]
        $region24: #{_lambda_.1} parent=11 // pred_fallthru
          _
        // Predicated region
        $region25: #{_lambda_.1} parent=11 // pred_check
          %p615 = pneg %p150
        $region26: #{_lambda_.1} parent=11 // pred_check_branch
          %617 = sbr.rel (%p615) target = $region28
        $region27: #{_lambda_.1} parent=11 // pred_region
          %s619 = ssub.s32 768, 768
          %620 = vsyncadd [#allocation13], %s619
          %s621 = sshll.u32 [#allocation14], 4
          %s622 = int_to_ptr.vmem [resolvable:$true] %s621
          %627 = dma.hbm_to_vmem [thread:$0]  %s4, 768, %s622, [#allocation13], 64, 64, 4
        $region28: #{_lambda_.1} parent=11 // pred_fallthru
          _
        // Predicated region
        $region29: #{_lambda_.1} parent=11 // pred_check
          %p628 = pneg %p171
        $region30: #{_lambda_.1} parent=11 // pred_check_branch
          %630 = sbr.rel (%p628) target = $region32
        $region31: #{_lambda_.1} parent=11 // pred_region
          _
        $region32: #{_lambda_.1} parent=11 // pred_fallthru
          _
        // Predicated region
        $region33: #{_lambda_.1} parent=11 // pred_check
          %p631 = pneg %p192
        $region34: #{_lambda_.1} parent=11 // pred_check_branch
          %633 = sbr.rel (%p631) target = $region36
        $region35: #{_lambda_.1} parent=11 // pred_region
          %s635 = ssub.s32 16, 16
          %636 = vsyncadd [#allocation16], %s635
          %s638 = sshll.u32 [#allocation15], 4
          %s639 = int_to_ptr.vmem [resolvable:$true] %s638
          %641 = dma.hbm_to_vmem [thread:$0]  %s6, 16, %s639, [#allocation16]
        $region36: #{_lambda_.1} parent=11 // pred_fallthru
          _
        // Predicated region
        $region37: #{_lambda_.1} parent=11 // pred_check
          %p642 = pneg %p213
        $region38: #{_lambda_.1} parent=11 // pred_check_branch
          %644 = sbr.rel (%p642) target = $region40
        $region39: #{_lambda_.1} parent=11 // pred_region
          %s646 = ssub.s32 384, 384
          %647 = vsyncadd [#allocation16], %s646
          %s648 = sshll.u32 [#allocation17], 4
          %s649 = int_to_ptr.vmem [resolvable:$true] %s648
          %654 = dma.hbm_to_vmem [thread:$0]  %s7, 384, %s649, [#allocation16], 64, 64, 4
        $region40: #{_lambda_.1} parent=11 // pred_fallthru
          _
        // Predicated region
        $region41: #{_lambda_.1} parent=11 // pred_check
          %p655 = pneg %p234
        $region42: #{_lambda_.1} parent=11 // pred_check_branch
          %657 = sbr.rel (%p655) target = $region44
        $region43: #{_lambda_.1} parent=11 // pred_region
          _
        $region44: #{_lambda_.1} parent=11 // pred_fallthru
          _
        // Predicated region
        $region45: #{_lambda_.1} parent=11 // pred_check
          %p658 = pneg %p255
        $region46: #{_lambda_.1} parent=11 // pred_check_branch
          %660 = sbr.rel (%p658) target = $region48
        $region47: #{_lambda_.1} parent=11 // pred_region
          %s662 = ssub.s32 16, 16
          %663 = vsyncadd [#allocation19], %s662
          %s665 = sshll.u32 [#allocation18], 4
          %s666 = int_to_ptr.vmem [resolvable:$true] %s665
          %668 = dma.hbm_to_vmem [thread:$0]  %s9, 16, %s666, [#allocation19]
        $region48: #{_lambda_.1} parent=11 // pred_fallthru
          _
        // Predicated region
        $region49: #{_lambda_.1} parent=11 // pred_check
          %p669 = pneg %p276
        $region50: #{_lambda_.1} parent=11 // pred_check_branch
          %671 = sbr.rel (%p669) target = $region52
        $region51: #{_lambda_.1} parent=11 // pred_region
          %s673 = ssub.s32 192, 192
          %674 = vsyncadd [#allocation19], %s673
          %s675 = sshll.u32 [#allocation20], 4
          %s676 = int_to_ptr.vmem [resolvable:$true] %s675
          %681 = dma.hbm_to_vmem [thread:$0]  %s10, 192, %s676, [#allocation19], 64, 64, 4
        $region52: #{_lambda_.1} parent=11 // pred_fallthru
          _
        // Predicated region
        $region53: #{_lambda_.1} parent=11 // pred_check
          %p682 = pneg %p297
        $region54: #{_lambda_.1} parent=11 // pred_check_branch
          %684 = sbr.rel (%p682) target = $region56
        $region55: #{_lambda_.1} parent=11 // pred_region
          %s686 = ssub.s32 192, 192
          %687 = vsyncadd [#allocation22], %s686
          %s688 = sshll.u32 [#allocation21], 4
          %s689 = int_to_ptr.vmem [resolvable:$true] %s688
          %694 = dma.hbm_to_vmem [thread:$0]  %s11, 192, %s689, [#allocation22], 64, 64, 4
        $region56: #{_lambda_.1} parent=11 // pred_fallthru
          _
        // Predicated region
        $region57: #{_lambda_.1} parent=11 // pred_check
          %p695 = pneg %p318
        $region58: #{_lambda_.1} parent=11 // pred_check_branch
          %697 = sbr.rel (%p695) target = $region60
        $region59: #{_lambda_.1} parent=11 // pred_region
          _
        $region60: #{_lambda_.1} parent=11 // pred_fallthru
          _
        // Predicated region
        $region61: #{_lambda_.1} parent=11 // pred_check
          %p698 = pneg %p339
        $region62: #{_lambda_.1} parent=11 // pred_check_branch
          %700 = sbr.rel (%p698) target = $region64
        $region63: #{_lambda_.1} parent=11 // pred_region
          _
        $region64: #{_lambda_.1} parent=11 // pred_fallthru
          _
        // Predicated region
        $region65: #{_lambda_.1} parent=11 // pred_check
          %p701 = pneg %p360
        $region66: #{_lambda_.1} parent=11 // pred_check_branch
          %703 = sbr.rel (%p701) target = $region68
        $region67: #{_lambda_.1} parent=11 // pred_region
          %s705 = ssub.s32 384, 384
          %706 = vsyncadd [#allocation22], %s705
          %s707 = sshll.u32 [#allocation23], 4
          %s708 = int_to_ptr.vmem [resolvable:$true] %s707
          %713 = dma.hbm_to_vmem [thread:$0]  %s14, 384, %s708, [#allocation22], 64, 64, 4
        $region68: #{_lambda_.1} parent=11 // pred_fallthru
          _
        // Predicated region
        $region69: #{_lambda_.1} parent=11 // pred_check
          %p714 = pneg %p381
        $region70: #{_lambda_.1} parent=11 // pred_check_branch
          %716 = sbr.rel (%p714) target = $region72
        $region71: #{_lambda_.1} parent=11 // pred_region
          _
        $region72: #{_lambda_.1} parent=11 // pred_fallthru
          _
        // Predicated region
        $region73: #{_lambda_.1} parent=11 // pred_check
          %p717 = pneg %p402
        $region74: #{_lambda_.1} parent=11 // pred_check_branch
          %719 = sbr.rel (%p717) target = $region76
        $region75: #{_lambda_.1} parent=11 // pred_region
          _
        $region76: #{_lambda_.1} parent=11 // pred_fallthru
          _
        // Predicated region
        $region77: #{_lambda_.1} parent=11 // pred_check
          %p720 = pneg %p423
        $region78: #{_lambda_.1} parent=11 // pred_check_branch
          %722 = sbr.rel (%p720) target = $region80
        $region79: #{_lambda_.1} parent=11 // pred_region
          _
        $region80: #{_lambda_.1} parent=11 // pred_fallthru
          _
        // Predicated region
        $region81: #{_lambda_.1} parent=11 // pred_check
          %p723 = pneg %p444
        $region82: #{_lambda_.1} parent=11 // pred_check_branch
          %725 = sbr.rel (%p723) target = $region84
        $region83: #{_lambda_.1} parent=11 // pred_region
          %s727 = ssub.s32 768, 768
          %728 = vsyncadd [#allocation25], %s727
          %s729 = sshll.u32 [#allocation24], 4
          %s730 = int_to_ptr.vmem [resolvable:$true] %s729
          %735 = dma.hbm_to_vmem [thread:$0]  %s18, 768, %s730, [#allocation25], 64, 64, 4
        $region84: #{_lambda_.1} parent=11 // pred_fallthru
          _
        // Predicated region
        $region85: #{_lambda_.1} parent=11 // pred_check
          %p736 = pneg %p465
        $region86: #{_lambda_.1} parent=11 // pred_check_branch
          %738 = sbr.rel (%p736) target = $region88
        $region87: #{_lambda_.1} parent=11 // pred_region
          %s740 = ssub.s32 768, 768
          %741 = vsyncadd [#allocation25], %s740
          %s742 = sshll.u32 [#allocation26], 4
          %s743 = int_to_ptr.vmem [resolvable:$true] %s742
          %748 = dma.hbm_to_vmem [thread:$0]  %s19, 768, %s743, [#allocation25], 64, 64, 4
        $region88: #{_lambda_.1} parent=11 // pred_fallthru
          _
        // Predicated region
        $region89: #{_lambda_.1} parent=11 // pred_check
          %p749 = pneg %p486
        $region90: #{_lambda_.1} parent=11 // pred_check_branch
          %751 = sbr.rel (%p749) target = $region92
        $region91: #{_lambda_.1} parent=11 // pred_region
          _
        $region92: #{_lambda_.1} parent=11 // pred_fallthru
          _
        // Predicated region
        $region93: #{_lambda_.1} parent=11 // pred_check
          %p752 = pneg %p507
        $region94: #{_lambda_.1} parent=11 // pred_check_branch
          %754 = sbr.rel (%p752) target = $region96
        $region95: #{_lambda_.1} parent=11 // pred_region
          _
        $region96: #{_lambda_.1} parent=11 // pred_fallthru
          _
        // Predicated region
        $region97: #{_lambda_.1} parent=11 // pred_check
          %p755 = pneg %p528
        $region98: #{_lambda_.1} parent=11 // pred_check_branch
          %757 = sbr.rel (%p755) target = $region100
        $region99: #{_lambda_.1} parent=11 // pred_region
          _
        $region100: #{_lambda_.1} parent=11 // pred_fallthru
          _
        // Predicated region
        $region101: #{_lambda_.1} parent=11 // pred_check
          %p758 = pneg %p549
        $region102: #{_lambda_.1} parent=11 // pred_check_branch
          %760 = sbr.rel (%p758) target = $region104
        $region103: #{_lambda_.1} parent=11 // pred_region
          _
        $region104: #{_lambda_.1} parent=11 // pred_fallthru
          _
      $region12: #{_lambda_.1} parent=5 // pred_fallthru
        _
      %p761 = scmp.lt.s32.totalorder %s40, 2
      // Predicated region
      $region105: #{_lambda_.1} parent=5 // pred_check
        %p762 = pneg %p761
      $region106: #{_lambda_.1} parent=5 // pred_check_branch
        %764 = sbr.rel (%p762) target = $region108
      $region107: #{_lambda_.1} parent=5 // pred_region
        // Predicated region
        $region109: #{_lambda_.1} parent=107 // pred_check
          %p765 = pneg %p60
        $region110: #{_lambda_.1} parent=107 // pred_check_branch
          %767 = sbr.rel (%p765) target = $region112
        $region111: #{_lambda_.1} parent=107 // pred_region
          %p768 = scmp.lt.s32.totalorder %s40, 1
          %s769 = scalar_select %p768, %s40, 1
          %s770 = smul.addr %s769, 16
          %s771 = smul.addr %s770, 8
          %s772 = scalar_lea.vmem %s0, %s771
        $region112: #{_lambda_.1} parent=107 // pred_fallthru
          _
      $region108: #{_lambda_.1} parent=5 // pred_fallthru
        _
      %p773 = scmp.le.s32.totalorder 1, %s40
      %p774 = scmp.lt.s32.totalorder %s40, 3
      %p775 = pnand %p773, %p774
      %p776 = pneg %p775
      // Predicated region
      $region113: #{_lambda_.1} parent=5 // pred_check
        _
      $region114: #{_lambda_.1} parent=5 // pred_check_branch
        %778 = sbr.rel (%p775) target = $region116
      $region115: #{_lambda_.1} parent=5 // pred_region
        %s779 = ssub.s32 %s40, 1
        // Predicated region
        $region117: #{_lambda_.1} parent=115 // pred_check
          %p780 = pneg %p87
        $region118: #{_lambda_.1} parent=115 // pred_check_branch
          %782 = sbr.rel (%p780) target = $region120
        $region119: #{_lambda_.1} parent=115 // pred_region
          %783 = dma.done [#allocation11], 32
        $region120: #{_lambda_.1} parent=115 // pred_fallthru
          _
        // Predicated region
        $region121: #{_lambda_.1} parent=115 // pred_check
          %p784 = pneg %p129
        $region122: #{_lambda_.1} parent=115 // pred_check_branch
          %786 = sbr.rel (%p784) target = $region124
        $region123: #{_lambda_.1} parent=115 // pred_region
          %787 = dma.done [#allocation13], 16
        $region124: #{_lambda_.1} parent=115 // pred_fallthru
          _
        // Predicated region
        $region125: #{_lambda_.1} parent=115 // pred_check
          %p788 = pneg %p150
        $region126: #{_lambda_.1} parent=115 // pred_check_branch
          %790 = sbr.rel (%p788) target = $region128
        $region127: #{_lambda_.1} parent=115 // pred_region
          %791 = dma.done [#allocation13], 768
        $region128: #{_lambda_.1} parent=115 // pred_fallthru
          _
        // Predicated region
        $region129: #{_lambda_.1} parent=115 // pred_check
          %p792 = pneg %p192
        $region130: #{_lambda_.1} parent=115 // pred_check_branch
          %794 = sbr.rel (%p792) target = $region132
        $region131: #{_lambda_.1} parent=115 // pred_region
          %795 = dma.done [#allocation16], 16
        $region132: #{_lambda_.1} parent=115 // pred_fallthru
          _
        // Predicated region
        $region133: #{_lambda_.1} parent=115 // pred_check
          %p796 = pneg %p213
        $region134: #{_lambda_.1} parent=115 // pred_check_branch
          %798 = sbr.rel (%p796) target = $region136
        $region135: #{_lambda_.1} parent=115 // pred_region
          %799 = dma.done [#allocation16], 384
        $region136: #{_lambda_.1} parent=115 // pred_fallthru
          _
        // Predicated region
        $region137: #{_lambda_.1} parent=115 // pred_check
          %p800 = pneg %p255
        $region138: #{_lambda_.1} parent=115 // pred_check_branch
          %802 = sbr.rel (%p800) target = $region140
        $region139: #{_lambda_.1} parent=115 // pred_region
          %803 = dma.done [#allocation19], 16
        $region140: #{_lambda_.1} parent=115 // pred_fallthru
          _
        // Predicated region
        $region141: #{_lambda_.1} parent=115 // pred_check
          %p804 = pneg %p276
        $region142: #{_lambda_.1} parent=115 // pred_check_branch
          %806 = sbr.rel (%p804) target = $region144
        $region143: #{_lambda_.1} parent=115 // pred_region
          %807 = dma.done [#allocation19], 192
        $region144: #{_lambda_.1} parent=115 // pred_fallthru
          _
        // Predicated region
        $region145: #{_lambda_.1} parent=115 // pred_check
          %p808 = pneg %p297
        $region146: #{_lambda_.1} parent=115 // pred_check_branch
          %810 = sbr.rel (%p808) target = $region148
        $region147: #{_lambda_.1} parent=115 // pred_region
          %811 = dma.done [#allocation22], 192
        $region148: #{_lambda_.1} parent=115 // pred_fallthru
          _
        // Predicated region
        $region149: #{_lambda_.1} parent=115 // pred_check
          %p812 = pneg %p360
        $region150: #{_lambda_.1} parent=115 // pred_check_branch
          %814 = sbr.rel (%p812) target = $region152
        $region151: #{_lambda_.1} parent=115 // pred_region
          %815 = dma.done [#allocation22], 384
        $region152: #{_lambda_.1} parent=115 // pred_fallthru
          _
        // Predicated region
        $region153: #{_lambda_.1} parent=115 // pred_check
          %p816 = pneg %p444
        $region154: #{_lambda_.1} parent=115 // pred_check_branch
          %818 = sbr.rel (%p816) target = $region156
        $region155: #{_lambda_.1} parent=115 // pred_region
          %819 = dma.done [#allocation25], 768
        $region156: #{_lambda_.1} parent=115 // pred_fallthru
          _
        // Predicated region
        $region157: #{_lambda_.1} parent=115 // pred_check
          %p820 = pneg %p465
        $region158: #{_lambda_.1} parent=115 // pred_check_branch
          %822 = sbr.rel (%p820) target = $region160
        $region159: #{_lambda_.1} parent=115 // pred_region
          %823 = dma.done [#allocation25], 768
        $region160: #{_lambda_.1} parent=115 // pred_fallthru
          _
        %p824 = scmp.lt.s32.totalorder %s45, 1
        %s825 = scalar_select %p824, %s45, 1
        %s826 = smul.addr %s825, 16
        %s827 = smul.addr %s826, 8
        %s828 = scalar_lea.vmem %s0, %s827
        %p829 = pneg %p66
        %p830 = pneg %p63
        %p831 = pneg %p87
        %p832 = pneg %p84
        %p833 = pneg %p108
        %p834 = pneg %p105
        %p835 = pneg %p129
        %p836 = pneg %p126
        %p837 = pneg %p150
        %p838 = pneg %p147
        %p839 = pneg %p171
        %p840 = pneg %p168
        %p841 = pneg %p192
        %p842 = pneg %p189
        %p843 = pneg %p213
        %p844 = pneg %p210
        %p845 = pneg %p234
        %p846 = pneg %p231
        %p847 = pneg %p255
        %p848 = pneg %p252
        %p849 = pneg %p276
        %p850 = pneg %p273
        %p851 = pneg %p297
        %p852 = pneg %p294
        %p853 = pneg %p318
        %p854 = pneg %p315
        %p855 = pneg %p339
        %p856 = pneg %p336
        %p857 = pneg %p360
        %p858 = pneg %p357
        %p859 = pneg %p381
        %p860 = pneg %p378
        %p861 = pneg %p402
        %p862 = pneg %p399
        %p863 = pneg %p423
        %p864 = pneg %p420
        %p865 = pneg %p444
        %p866 = pneg %p441
        %p867 = pneg %p465
        %p868 = pneg %p462
        %p869 = pneg %p486
        %p870 = pneg %p483
        %p871 = pneg %p507
        %p872 = pneg %p504
        %p873 = pneg %p528
        %p874 = pneg %p525
        %p875 = pneg %p549
        %p876 = pneg %p546
        %p877 = pneg %p575
        %p878 = pneg %p572
        %p879 = scmp.lt.s32.totalorder %s45, 1
        %s880 = scalar_select %p879, %s45, 1
        %s881 = smul.addr %s880, 16
        %s882 = smul.addr %s881, 8
        %s883 = scalar_lea.vmem %s24, %s882
        %p884 = scmp.lt.s32.totalorder %s45, 1
        %s885 = scalar_select %p884, %s45, 1
        %s886 = smul.addr %s885, 16
        %s887 = smul.addr %s886, 8
        %s888 = scalar_lea.vmem %s0, %s887
        %p889 = scmp.lt.s32.totalorder %s45, 1
        %s890 = scalar_select %p889, %s45, 1
        %s891 = smul.addr %s890, 16
        %s892 = smul.addr %s891, 8
        %s893 = scalar_lea.vmem %s24, %s892
        %v895 = vld [vmem:[%s888] sm:$0xff]
        %v896 = vld [vmem:[%s888 + $0x8] sm:$0xff]
        %v897 = vld [vmem:[%s888 + $0x10] sm:$0xff]
        %v898 = vld [vmem:[%s888 + $0x18] sm:$0xff]
        %v899 = vld [vmem:[%s888 + $0x20] sm:$0xff]
        %v900 = vld [vmem:[%s888 + $0x28] sm:$0xff]
        %v901 = vld [vmem:[%s888 + $0x30] sm:$0xff]
        %v902 = vld [vmem:[%s888 + $0x38] sm:$0xff]
        %v903 = vld [vmem:[%s888 + $0x40] sm:$0xff]
        %v904 = vld [vmem:[%s888 + $0x48] sm:$0xff]
        %v905 = vld [vmem:[%s888 + $0x50] sm:$0xff]
        %v906 = vld [vmem:[%s888 + $0x58] sm:$0xff]
        %v907 = vld [vmem:[%s888 + $0x60] sm:$0xff]
        %v908 = vld [vmem:[%s888 + $0x68] sm:$0xff]
        %v909 = vld [vmem:[%s888 + $0x70] sm:$0xff]
        %v910 = vld [vmem:[%s888 + $0x78] sm:$0xff]
        %vm911 = vcmask 7168
        %912 = vst.msk [vmem:[#allocation2] sm:$0xff] %vm911, 0.0
        %913 = vst.msk [vmem:[#allocation2 + $0x8] sm:$0xff] %vm911, 0.0
        %914 = vst.msk [vmem:[#allocation2 + $0x10] sm:$0xff] %vm911, 0.0
        %915 = vst.msk [vmem:[#allocation2 + $0x18] sm:$0xff] %vm911, 0.0
        %916 = vst.msk [vmem:[#allocation2 + $0x20] sm:$0xff] %vm911, 0.0
        %917 = vst.msk [vmem:[#allocation2 + $0x28] sm:$0xff] %vm911, 0.0
        %918 = vst.msk [vmem:[#allocation2 + $0x30] sm:$0xff] %vm911, 0.0
        %919 = vst.msk [vmem:[#allocation2 + $0x38] sm:$0xff] %vm911, 0.0
        %920 = vst.msk [vmem:[#allocation2 + $0x40] sm:$0xff] %vm911, 0.0
        %921 = vst.msk [vmem:[#allocation2 + $0x48] sm:$0xff] %vm911, 0.0
        %922 = vst.msk [vmem:[#allocation2 + $0x50] sm:$0xff] %vm911, 0.0
        %923 = vst.msk [vmem:[#allocation2 + $0x58] sm:$0xff] %vm911, 0.0
        %924 = vst.msk [vmem:[#allocation2 + $0x60] sm:$0xff] %vm911, 0.0
        %925 = vst.msk [vmem:[#allocation2 + $0x68] sm:$0xff] %vm911, 0.0
        %926 = vst.msk [vmem:[#allocation2 + $0x70] sm:$0xff] %vm911, 0.0
        %927 = vst.msk [vmem:[#allocation2 + $0x78] sm:$0xff] %vm911, 0.0
        %vm928 = vcmask 1024
        %929 = vst.msk [vmem:[#allocation2 + $0x80] sm:$0x3] %vm928, 0.0
        %930 = vst.msk [vmem:[#allocation2 + $0x1] sm:$0xff] %vm911, %v895
        %931 = vst.msk [vmem:[#allocation2 + $0x9] sm:$0xff] %vm911, %v896
        %932 = vst.msk [vmem:[#allocation2 + $0x11] sm:$0xff] %vm911, %v897
        %933 = vst.msk [vmem:[#allocation2 + $0x19] sm:$0xff] %vm911, %v898
        %934 = vst.msk [vmem:[#allocation2 + $0x21] sm:$0xff] %vm911, %v899
        %935 = vst.msk [vmem:[#allocation2 + $0x29] sm:$0xff] %vm911, %v900
        %936 = vst.msk [vmem:[#allocation2 + $0x31] sm:$0xff] %vm911, %v901
        %937 = vst.msk [vmem:[#allocation2 + $0x39] sm:$0xff] %vm911, %v902
        %938 = vst.msk [vmem:[#allocation2 + $0x41] sm:$0xff] %vm911, %v903
        %939 = vst.msk [vmem:[#allocation2 + $0x49] sm:$0xff] %vm911, %v904
        %940 = vst.msk [vmem:[#allocation2 + $0x51] sm:$0xff] %vm911, %v905
        %941 = vst.msk [vmem:[#allocation2 + $0x59] sm:$0xff] %vm911, %v906
        %942 = vst.msk [vmem:[#allocation2 + $0x61] sm:$0xff] %vm911, %v907
        %943 = vst.msk [vmem:[#allocation2 + $0x69] sm:$0xff] %vm911, %v908
        %944 = vst.msk [vmem:[#allocation2 + $0x71] sm:$0xff] %vm911, %v909
        %945 = vst.msk [vmem:[#allocation2 + $0x79] sm:$0xff] %vm911, %v910
        %v946 = vld [vmem:[#allocation2] sm:$0xff]
        %v947 = vld [vmem:[#allocation2 + $0x8] sm:$0xff]
        %v948 = vld [vmem:[#allocation2 + $0x10] sm:$0xff]
        %v949 = vld [vmem:[#allocation2 + $0x18] sm:$0xff]
        %v950 = vld [vmem:[#allocation2 + $0x20] sm:$0xff]
        %v951 = vld [vmem:[#allocation2 + $0x28] sm:$0xff]
        %v952 = vld [vmem:[#allocation2 + $0x30] sm:$0xff]
        %v953 = vld [vmem:[#allocation2 + $0x38] sm:$0xff]
        %v954 = vld [vmem:[#allocation2 + $0x40] sm:$0xff]
        %v955 = vld [vmem:[#allocation2 + $0x48] sm:$0xff]
        %v956 = vld [vmem:[#allocation2 + $0x50] sm:$0xff]
        %v957 = vld [vmem:[#allocation2 + $0x58] sm:$0xff]
        %v958 = vld [vmem:[#allocation2 + $0x60] sm:$0xff]
        %v959 = vld [vmem:[#allocation2 + $0x68] sm:$0xff]
        %v960 = vld [vmem:[#allocation2 + $0x70] sm:$0xff]
        %v961 = vld [vmem:[#allocation2 + $0x78] sm:$0xff]
        %v962 = vld [vmem:[#allocation2 + $0x1] sm:$0xff]
        %v963 = vld [vmem:[#allocation2 + $0x9] sm:$0xff]
        %v964 = vld [vmem:[#allocation2 + $0x11] sm:$0xff]
        %v965 = vld [vmem:[#allocation2 + $0x19] sm:$0xff]
        %v966 = vld [vmem:[#allocation2 + $0x21] sm:$0xff]
        %v967 = vld [vmem:[#allocation2 + $0x29] sm:$0xff]
        %v968 = vld [vmem:[#allocation2 + $0x31] sm:$0xff]
        %v969 = vld [vmem:[#allocation2 + $0x39] sm:$0xff]
        %v970 = vld [vmem:[#allocation2 + $0x41] sm:$0xff]
        %v971 = vld [vmem:[#allocation2 + $0x49] sm:$0xff]
        %v972 = vld [vmem:[#allocation2 + $0x51] sm:$0xff]
        %v973 = vld [vmem:[#allocation2 + $0x59] sm:$0xff]
        %v974 = vld [vmem:[#allocation2 + $0x61] sm:$0xff]
        %v975 = vld [vmem:[#allocation2 + $0x69] sm:$0xff]
        %v976 = vld [vmem:[#allocation2 + $0x71] sm:$0xff]
        %v977 = vld [vmem:[#allocation2 + $0x79] sm:$0xff]
        %v978 = vld [vmem:[#allocation2 + $0x2] sm:$0xff]
        %v979 = vld [vmem:[#allocation2 + $0xa] sm:$0xff]
        %v980 = vld [vmem:[#allocation2 + $0x12] sm:$0xff]
        %v981 = vld [vmem:[#allocation2 + $0x1a] sm:$0xff]
        %v982 = vld [vmem:[#allocation2 + $0x22] sm:$0xff]
        %v983 = vld [vmem:[#allocation2 + $0x2a] sm:$0xff]
        %v984 = vld [vmem:[#allocation2 + $0x32] sm:$0xff]
        %v985 = vld [vmem:[#allocation2 + $0x3a] sm:$0xff]
        %v986 = vld [vmem:[#allocation2 + $0x42] sm:$0xff]
        %v987 = vld [vmem:[#allocation2 + $0x4a] sm:$0xff]
        %v988 = vld [vmem:[#allocation2 + $0x52] sm:$0xff]
        %v989 = vld [vmem:[#allocation2 + $0x5a] sm:$0xff]
        %v990 = vld [vmem:[#allocation2 + $0x62] sm:$0xff]
        %v991 = vld [vmem:[#allocation2 + $0x6a] sm:$0xff]
        %v992 = vld [vmem:[#allocation2 + $0x72] sm:$0xff]
        %v993 = vld [vmem:[#allocation2 + $0x7a] sm:$0xff]
        %1010 = vrot.lane.b32.xlu0 %v962, 1
        %v1011 = vpop.permute.xlu0 %1010
        %1012 = vrot.lane.b32.xlu0 %v963, 1
        %v1013 = vpop.permute.xlu0 %1012
        %1014 = vrot.lane.b32.xlu0 %v964, 1
        %v1015 = vpop.permute.xlu0 %1014
        %1016 = vrot.lane.b32.xlu0 %v965, 1
        %v1017 = vpop.permute.xlu0 %1016
        %1018 = vrot.lane.b32.xlu0 %v966, 1
        %v1019 = vpop.permute.xlu0 %1018
        %1020 = vrot.lane.b32.xlu0 %v967, 1
        %v1021 = vpop.permute.xlu0 %1020
        %1022 = vrot.lane.b32.xlu0 %v968, 1
        %v1023 = vpop.permute.xlu0 %1022
        %1024 = vrot.lane.b32.xlu0 %v969, 1
        %v1025 = vpop.permute.xlu0 %1024
        %1026 = vrot.lane.b32.xlu0 %v970, 1
        %v1027 = vpop.permute.xlu0 %1026
        %1028 = vrot.lane.b32.xlu0 %v971, 1
        %v1029 = vpop.permute.xlu0 %1028
        %1030 = vrot.lane.b32.xlu0 %v972, 1
        %v1031 = vpop.permute.xlu0 %1030
        %1032 = vrot.lane.b32.xlu0 %v973, 1
        %v1033 = vpop.permute.xlu0 %1032
        %1034 = vrot.lane.b32.xlu0 %v974, 1
        %v1035 = vpop.permute.xlu0 %1034
        %1036 = vrot.lane.b32.xlu0 %v975, 1
        %v1037 = vpop.permute.xlu0 %1036
        %1038 = vrot.lane.b32.xlu0 %v976, 1
        %v1039 = vpop.permute.xlu0 %1038
        %1040 = vrot.lane.b32.xlu0 %v977, 1
        %v1041 = vpop.permute.xlu0 %1040
        %1074 = vrot.lane.b32.xlu0 %v978, 2
        %v1075 = vpop.permute.xlu0 %1074
        %1076 = vrot.lane.b32.xlu0 %v979, 2
        %v1077 = vpop.permute.xlu0 %1076
        %1078 = vrot.lane.b32.xlu0 %v980, 2
        %v1079 = vpop.permute.xlu0 %1078
        %1080 = vrot.lane.b32.xlu0 %v981, 2
        %v1081 = vpop.permute.xlu0 %1080
        %1082 = vrot.lane.b32.xlu0 %v982, 2
        %v1083 = vpop.permute.xlu0 %1082
        %1084 = vrot.lane.b32.xlu0 %v983, 2
        %v1085 = vpop.permute.xlu0 %1084
        %1086 = vrot.lane.b32.xlu0 %v984, 2
        %v1087 = vpop.permute.xlu0 %1086
        %1088 = vrot.lane.b32.xlu0 %v985, 2
        %v1089 = vpop.permute.xlu0 %1088
        %1090 = vrot.lane.b32.xlu0 %v986, 2
        %v1091 = vpop.permute.xlu0 %1090
        %1092 = vrot.lane.b32.xlu0 %v987, 2
        %v1093 = vpop.permute.xlu0 %1092
        %1094 = vrot.lane.b32.xlu0 %v988, 2
        %v1095 = vpop.permute.xlu0 %1094
        %1096 = vrot.lane.b32.xlu0 %v989, 2
        %v1097 = vpop.permute.xlu0 %1096
        %1098 = vrot.lane.b32.xlu0 %v990, 2
        %v1099 = vpop.permute.xlu0 %1098
        %1100 = vrot.lane.b32.xlu0 %v991, 2
        %v1101 = vpop.permute.xlu0 %1100
        %1102 = vrot.lane.b32.xlu0 %v992, 2
        %v1103 = vpop.permute.xlu0 %1102
        %1104 = vrot.lane.b32.xlu0 %v993, 2
        %v1105 = vpop.permute.xlu0 %1104
        %v1122 = vsel %vm911, %v946, %v1011
        %v1123 = vsel %vm911, %v947, %v1013
        %v1124 = vsel %vm911, %v948, %v1015
        %v1125 = vsel %vm911, %v949, %v1017
        %v1126 = vsel %vm911, %v950, %v1019
        %v1127 = vsel %vm911, %v951, %v1021
        %v1128 = vsel %vm911, %v952, %v1023
        %v1129 = vsel %vm911, %v953, %v1025
        %v1130 = vsel %vm911, %v954, %v1027
        %v1131 = vsel %vm911, %v955, %v1029
        %v1132 = vsel %vm911, %v956, %v1031
        %v1133 = vsel %vm911, %v957, %v1033
        %v1134 = vsel %vm911, %v958, %v1035
        %v1135 = vsel %vm911, %v959, %v1037
        %v1136 = vsel %vm911, %v960, %v1039
        %v1137 = vsel %vm911, %v961, %v1041
        %vm1138 = vcmask 15360
        %v1139 = vsel %vm1138, %v1122, %v1075
        %v1140 = vsel %vm1138, %v1123, %v1077
        %v1141 = vsel %vm1138, %v1124, %v1079
        %v1142 = vsel %vm1138, %v1125, %v1081
        %v1143 = vsel %vm1138, %v1126, %v1083
        %v1144 = vsel %vm1138, %v1127, %v1085
        %v1145 = vsel %vm1138, %v1128, %v1087
        %v1146 = vsel %vm1138, %v1129, %v1089
        %v1147 = vsel %vm1138, %v1130, %v1091
        %v1148 = vsel %vm1138, %v1131, %v1093
        %v1149 = vsel %vm1138, %v1132, %v1095
        %v1150 = vsel %vm1138, %v1133, %v1097
        %v1151 = vsel %vm1138, %v1134, %v1099
        %v1152 = vsel %vm1138, %v1135, %v1101
        %v1153 = vsel %vm1138, %v1136, %v1103
        %v1154 = vsel %vm1138, %v1137, %v1105
        %v1155 = vpack.c.bf16 %v1140, %v1139
        %v1156 = vpack.c.bf16 %v1142, %v1141
        %v1157 = vpack.c.bf16 %v1144, %v1143
        %v1158 = vpack.c.bf16 %v1146, %v1145
        %v1159 = vpack.c.bf16 %v1148, %v1147
        %v1160 = vpack.c.bf16 %v1150, %v1149
        %v1161 = vpack.c.bf16 %v1152, %v1151
        %v1162 = vpack.c.bf16 %v1154, %v1153
        %v1163 = vld [vmem:[#allocation10] sm:$0x3]
        %vm1164 = vcmask 23552
        %v1166 = vsel %vm1164, %v1155, 0
        %v1169 = vsel %vm1164, %v1156, 0
        %v1172 = vsel %vm1164, %v1157, 0
        %v1175 = vsel %vm1164, %v1158, 0
        %v1178 = vsel %vm1164, %v1159, 0
        %v1181 = vsel %vm1164, %v1160, 0
        %v1184 = vsel %vm1164, %v1161, 0
        %v1187 = vsel %vm1164, %v1162, 0
        %vm1189 = vcmask 1040384
        %vm1190 = vcmask 1041408
        %v1191 = vsel %vm1189, 4294967295, 65535
        %v1192 = vsel %vm1190, %v1191, 0
        %v1194 = vand.u32 %v1163, %v1192
        %1196 = vmatprep.subr.bf16.mxu0 0
        %1197 = vmatpush1.bf16.msra.mxu0 0
        %1198 = vmatprep.subr.bf16.mxu0 0
        %1199 = vmatpush1.bf16.msra.mxu0 0
        %1200 = vmatprep.subr.bf16.mxu0 0
        %1201 = vmatpush1.bf16.msra.mxu0 0
        %1202 = vmatprep.subr.bf16.mxu0 0
        %1203 = vmatpush1.bf16.msra.mxu0 0
        %1204 = vmatprep.subr.bf16.mxu0 0
        %1205 = vmatpush1.bf16.msra.mxu0 0
        %1206 = vmatprep.subr.bf16.mxu0 0
        %1207 = vmatpush1.bf16.msra.mxu0 0
        %1208 = vmatprep.subr.bf16.mxu0 0
        %1209 = vmatpush1.bf16.msra.mxu0 0
        %1210 = vmatprep.subr.bf16.mxu0 0
        %1211 = vmatpush1.bf16.msra.mxu0 %v1194
        %1212 = vmatprep.subr.bf16.mxu0 0
        %1213 = vmatpush2.bf16.msra.mxu0 0
        %1214 = vmatprep.subr.bf16.mxu0 0
        %1215 = vmatpush2.bf16.msra.mxu0 0
        %1216 = vmatprep.subr.bf16.mxu0 0
        %1217 = vmatpush2.bf16.msra.mxu0 0
        %1218 = vmatprep.subr.bf16.mxu0 0
        %1219 = vmatpush2.bf16.msra.mxu0 0
        %1220 = vmatprep.subr.bf16.mxu0 0
        %1221 = vmatpush2.bf16.msra.mxu0 0
        %1222 = vmatprep.subr.bf16.mxu0 0
        %1223 = vmatpush2.bf16.msra.mxu0 0
        %1224 = vmatprep.subr.bf16.mxu0 0
        %1225 = vmatpush2.bf16.msra.mxu0 0
        %1226 = vmatprep.subr.bf16.mxu0 0
        %1227 = vmatpush2.bf16.msra.mxu0 0
        %1228 = vmatprep.mubr.bf16.mxu0 0
        %1229 = vmatmul.mubr.bf16.gmra.mxu0 %v1166
        %v1230 = vpop.f32.mrf.mxu0
        %v1231 = vadd.f32 0.0, %v1230
        %v1232 = vpop.f32.mrf.mxu0
        %v1233 = vpop.f32.mrf.mxu0
        %v1234 = vadd.f32 0.0, %v1233
        %v1235 = vpop.f32.mrf.mxu0
        %1236 = vmatprep.mubr.bf16.mxu0 0
        %1237 = vmatmul.mubr.bf16.gmra.mxu0 %v1169
        %v1238 = vpop.f32.mrf.mxu0
        %v1239 = vadd.f32 0.0, %v1238
        %v1240 = vpop.f32.mrf.mxu0
        %v1241 = vpop.f32.mrf.mxu0
        %v1242 = vadd.f32 0.0, %v1241
        %v1243 = vpop.f32.mrf.mxu0
        %1244 = vmatprep.mubr.bf16.mxu0 0
        %1245 = vmatmul.mubr.bf16.gmra.mxu0 %v1172
        %v1246 = vpop.f32.mrf.mxu0
        %v1247 = vadd.f32 0.0, %v1246
        %v1248 = vpop.f32.mrf.mxu0
        %v1249 = vpop.f32.mrf.mxu0
        %v1250 = vadd.f32 0.0, %v1249
        %v1251 = vpop.f32.mrf.mxu0
        %1252 = vmatprep.mubr.bf16.mxu0 0
        %1253 = vmatmul.mubr.bf16.gmra.mxu0 %v1175
        %v1254 = vpop.f32.mrf.mxu0
        %v1255 = vadd.f32 0.0, %v1254
        %v1256 = vpop.f32.mrf.mxu0
        %v1257 = vpop.f32.mrf.mxu0
        %v1258 = vadd.f32 0.0, %v1257
        %v1259 = vpop.f32.mrf.mxu0
        %1260 = vmatprep.mubr.bf16.mxu0 0
        %1261 = vmatmul.mubr.bf16.gmra.mxu0 %v1178
        %v1262 = vpop.f32.mrf.mxu0
        %v1263 = vadd.f32 0.0, %v1262
        %v1264 = vpop.f32.mrf.mxu0
        %v1265 = vpop.f32.mrf.mxu0
        %v1266 = vadd.f32 0.0, %v1265
        %v1267 = vpop.f32.mrf.mxu0
        %1268 = vmatprep.mubr.bf16.mxu0 0
        %1269 = vmatmul.mubr.bf16.gmra.mxu0 %v1181
        %v1270 = vpop.f32.mrf.mxu0
        %v1271 = vadd.f32 0.0, %v1270
        %v1272 = vpop.f32.mrf.mxu0
        %v1273 = vpop.f32.mrf.mxu0
        %v1274 = vadd.f32 0.0, %v1273
        %v1275 = vpop.f32.mrf.mxu0
        %1276 = vmatprep.mubr.bf16.mxu0 0
        %1277 = vmatmul.mubr.bf16.gmra.mxu0 %v1184
        %v1278 = vpop.f32.mrf.mxu0
        %v1279 = vadd.f32 0.0, %v1278
        %v1280 = vpop.f32.mrf.mxu0
        %v1281 = vpop.f32.mrf.mxu0
        %v1282 = vadd.f32 0.0, %v1281
        %v1283 = vpop.f32.mrf.mxu0
        %1284 = vmatprep.mubr.bf16.mxu0 0
        %1285 = vmatmul.mubr.bf16.gmra.mxu0 %v1187
        %v1286 = vpop.f32.mrf.mxu0
        %v1287 = vadd.f32 0.0, %v1286
        %v1288 = vpop.f32.mrf.mxu0
        %v1289 = vpop.f32.mrf.mxu0
        %v1290 = vadd.f32 0.0, %v1289
        %v1291 = vpop.f32.mrf.mxu0
        %1292 = vdwg.mxu0
        %v1293 = vld [vmem:[%s2] sm:$0x1]
        %v1295 = vlaneseq
        %v1296 = vshrl.u32 %v1295, 7
        %v1297 = vsub.s32 0, %v1296
        %v1298 = vrot.slane %v1293, %v1297
        %v1300 = vmul.f32 %v1231, %v1298
        %v1301 = vmul.f32 %v1234, %v1298
        %v1302 = vmul.f32 %v1239, %v1298
        %v1303 = vmul.f32 %v1242, %v1298
        %v1304 = vmul.f32 %v1247, %v1298
        %v1305 = vmul.f32 %v1250, %v1298
        %v1306 = vmul.f32 %v1255, %v1298
        %v1307 = vmul.f32 %v1258, %v1298
        %v1308 = vmul.f32 %v1263, %v1298
        %v1309 = vmul.f32 %v1266, %v1298
        %v1310 = vmul.f32 %v1271, %v1298
        %v1311 = vmul.f32 %v1274, %v1298
        %v1312 = vmul.f32 %v1279, %v1298
        %v1313 = vmul.f32 %v1282, %v1298
        %v1314 = vmul.f32 %v1287, %v1298
        %v1315 = vmul.f32 %v1290, %v1298
        %v1316 = vld [vmem:[#allocation12] sm:$0x1]
        %v1318 = vlaneseq
        %v1319 = vshrl.u32 %v1318, 7
        %v1320 = vsub.s32 0, %v1319
        %v1321 = vrot.slane %v1316, %v1320
        %v1323 = vadd.f32 %v1300, %v1321
        %v1324 = vadd.f32 %v1301, %v1321
        %v1325 = vadd.f32 %v1302, %v1321
        %v1326 = vadd.f32 %v1303, %v1321
        %v1327 = vadd.f32 %v1304, %v1321
        %v1328 = vadd.f32 %v1305, %v1321
        %v1329 = vadd.f32 %v1306, %v1321
        %v1330 = vadd.f32 %v1307, %v1321
        %v1331 = vadd.f32 %v1308, %v1321
        %v1332 = vadd.f32 %v1309, %v1321
        %v1333 = vadd.f32 %v1310, %v1321
        %v1334 = vadd.f32 %v1311, %v1321
        %v1335 = vadd.f32 %v1312, %v1321
        %v1336 = vadd.f32 %v1313, %v1321
        %v1337 = vadd.f32 %v1314, %v1321
        %v1338 = vadd.f32 %v1315, %v1321
        %v1339 = vmax.f32 %v1323, 0.0
        %v1340 = vmax.f32 %v1324, 0.0
        %v1341 = vmax.f32 %v1325, 0.0
        %v1342 = vmax.f32 %v1326, 0.0
        %v1343 = vmax.f32 %v1327, 0.0
        %v1344 = vmax.f32 %v1328, 0.0
        %v1345 = vmax.f32 %v1329, 0.0
        %v1346 = vmax.f32 %v1330, 0.0
        %v1347 = vmax.f32 %v1331, 0.0
        %v1348 = vmax.f32 %v1332, 0.0
        %v1349 = vmax.f32 %v1333, 0.0
        %v1350 = vmax.f32 %v1334, 0.0
        %v1351 = vmax.f32 %v1335, 0.0
        %v1352 = vmax.f32 %v1336, 0.0
        %v1353 = vmax.f32 %v1337, 0.0
        %v1354 = vmax.f32 %v1338, 0.0
        %v1371 = vcombine.high %v1339, %v1339
        %v1373 = vunpack.c.l.s4 1983009808
        %v1374 = vunpack.c.0.s8 %v1373
        %v1375 = vlaneseq
        %v1376 = vshrl.u32 %v1375, 7
        %v1377 = vsub.s32 %v1374, %v1376
        %v1378 = vrot.slane %v1339, %v1377
        %v1380 = vunpack.c.l.s4 1983009808
        %v1381 = vunpack.c.0.s8 %v1380
        %v1382 = vlaneseq
        %v1383 = vshrl.u32 %v1382, 7
        %v1384 = vsub.s32 %v1381, %v1383
        %v1385 = vrot.slane %v1371, %v1384
        %v1386 = vcombine.high %v1378, %v1378
        %v1387 = vcombine.high %v1385, %v1385
        %v1388 = vcombine.high %v1340, %v1340
        %v1390 = vunpack.c.l.s4 1983009808
        %v1391 = vunpack.c.0.s8 %v1390
        %v1392 = vlaneseq
        %v1393 = vshrl.u32 %v1392, 7
        %v1394 = vsub.s32 %v1391, %v1393
        %v1395 = vrot.slane %v1340, %v1394
        %v1397 = vunpack.c.l.s4 1983009808
        %v1398 = vunpack.c.0.s8 %v1397
        %v1399 = vlaneseq
        %v1400 = vshrl.u32 %v1399, 7
        %v1401 = vsub.s32 %v1398, %v1400
        %v1402 = vrot.slane %v1388, %v1401
        %v1403 = vcombine.high %v1395, %v1395
        %v1404 = vcombine.high %v1402, %v1402
        %v1405 = vcombine.high %v1341, %v1341
        %v1407 = vunpack.c.l.s4 1983009808
        %v1408 = vunpack.c.0.s8 %v1407
        %v1409 = vlaneseq
        %v1410 = vshrl.u32 %v1409, 7
        %v1411 = vsub.s32 %v1408, %v1410
        %v1412 = vrot.slane %v1341, %v1411
        %v1414 = vunpack.c.l.s4 1983009808
        %v1415 = vunpack.c.0.s8 %v1414
        %v1416 = vlaneseq
        %v1417 = vshrl.u32 %v1416, 7
        %v1418 = vsub.s32 %v1415, %v1417
        %v1419 = vrot.slane %v1405, %v1418
        %v1420 = vcombine.high %v1412, %v1412
        %v1421 = vcombine.high %v1419, %v1419
        %v1422 = vcombine.high %v1342, %v1342
        %v1424 = vunpack.c.l.s4 1983009808
        %v1425 = vunpack.c.0.s8 %v1424
        %v1426 = vlaneseq
        %v1427 = vshrl.u32 %v1426, 7
        %v1428 = vsub.s32 %v1425, %v1427
        %v1429 = vrot.slane %v1342, %v1428
        %v1431 = vunpack.c.l.s4 1983009808
        %v1432 = vunpack.c.0.s8 %v1431
        %v1433 = vlaneseq
        %v1434 = vshrl.u32 %v1433, 7
        %v1435 = vsub.s32 %v1432, %v1434
        %v1436 = vrot.slane %v1422, %v1435
        %v1437 = vcombine.high %v1429, %v1429
        %v1438 = vcombine.high %v1436, %v1436
        %v1439 = vcombine.high %v1343, %v1343
        %v1441 = vunpack.c.l.s4 1983009808
        %v1442 = vunpack.c.0.s8 %v1441
        %v1443 = vlaneseq
        %v1444 = vshrl.u32 %v1443, 7
        %v1445 = vsub.s32 %v1442, %v1444
        %v1446 = vrot.slane %v1343, %v1445
        %v1448 = vunpack.c.l.s4 1983009808
        %v1449 = vunpack.c.0.s8 %v1448
        %v1450 = vlaneseq
        %v1451 = vshrl.u32 %v1450, 7
        %v1452 = vsub.s32 %v1449, %v1451
        %v1453 = vrot.slane %v1439, %v1452
        %v1454 = vcombine.high %v1446, %v1446
        %v1455 = vcombine.high %v1453, %v1453
        %v1456 = vcombine.high %v1344, %v1344
        %v1458 = vunpack.c.l.s4 1983009808
        %v1459 = vunpack.c.0.s8 %v1458
        %v1460 = vlaneseq
        %v1461 = vshrl.u32 %v1460, 7
        %v1462 = vsub.s32 %v1459, %v1461
        %v1463 = vrot.slane %v1344, %v1462
        %v1465 = vunpack.c.l.s4 1983009808
        %v1466 = vunpack.c.0.s8 %v1465
        %v1467 = vlaneseq
        %v1468 = vshrl.u32 %v1467, 7
        %v1469 = vsub.s32 %v1466, %v1468
        %v1470 = vrot.slane %v1456, %v1469
        %v1471 = vcombine.high %v1463, %v1463
        %v1472 = vcombine.high %v1470, %v1470
        %v1473 = vcombine.high %v1345, %v1345
        %v1475 = vunpack.c.l.s4 1983009808
        %v1476 = vunpack.c.0.s8 %v1475
        %v1477 = vlaneseq
        %v1478 = vshrl.u32 %v1477, 7
        %v1479 = vsub.s32 %v1476, %v1478
        %v1480 = vrot.slane %v1345, %v1479
        %v1482 = vunpack.c.l.s4 1983009808
        %v1483 = vunpack.c.0.s8 %v1482
        %v1484 = vlaneseq
        %v1485 = vshrl.u32 %v1484, 7
        %v1486 = vsub.s32 %v1483, %v1485
        %v1487 = vrot.slane %v1473, %v1486
        %v1488 = vcombine.high %v1480, %v1480
        %v1489 = vcombine.high %v1487, %v1487
        %v1490 = vcombine.high %v1346, %v1346
        %v1492 = vunpack.c.l.s4 1983009808
        %v1493 = vunpack.c.0.s8 %v1492
        %v1494 = vlaneseq
        %v1495 = vshrl.u32 %v1494, 7
        %v1496 = vsub.s32 %v1493, %v1495
        %v1497 = vrot.slane %v1346, %v1496
        %v1499 = vunpack.c.l.s4 1983009808
        %v1500 = vunpack.c.0.s8 %v1499
        %v1501 = vlaneseq
        %v1502 = vshrl.u32 %v1501, 7
        %v1503 = vsub.s32 %v1500, %v1502
        %v1504 = vrot.slane %v1490, %v1503
        %v1505 = vcombine.high %v1497, %v1497
        %v1506 = vcombine.high %v1504, %v1504
        %v1507 = vcombine.high %v1347, %v1347
        %v1509 = vunpack.c.l.s4 1983009808
        %v1510 = vunpack.c.0.s8 %v1509
        %v1511 = vlaneseq
        %v1512 = vshrl.u32 %v1511, 7
        %v1513 = vsub.s32 %v1510, %v1512
        %v1514 = vrot.slane %v1347, %v1513
        %v1516 = vunpack.c.l.s4 1983009808
        %v1517 = vunpack.c.0.s8 %v1516
        %v1518 = vlaneseq
        %v1519 = vshrl.u32 %v1518, 7
        %v1520 = vsub.s32 %v1517, %v1519
        %v1521 = vrot.slane %v1507, %v1520
        %v1522 = vcombine.high %v1514, %v1514
        %v1523 = vcombine.high %v1521, %v1521
        %v1524 = vcombine.high %v1348, %v1348
        %v1526 = vunpack.c.l.s4 1983009808
        %v1527 = vunpack.c.0.s8 %v1526
        %v1528 = vlaneseq
        %v1529 = vshrl.u32 %v1528, 7
        %v1530 = vsub.s32 %v1527, %v1529
        %v1531 = vrot.slane %v1348, %v1530
        %v1533 = vunpack.c.l.s4 1983009808
        %v1534 = vunpack.c.0.s8 %v1533
        %v1535 = vlaneseq
        %v1536 = vshrl.u32 %v1535, 7
        %v1537 = vsub.s32 %v1534, %v1536
        %v1538 = vrot.slane %v1524, %v1537
        %v1539 = vcombine.high %v1531, %v1531
        %v1540 = vcombine.high %v1538, %v1538
        %v1541 = vcombine.high %v1349, %v1349
        %v1543 = vunpack.c.l.s4 1983009808
        %v1544 = vunpack.c.0.s8 %v1543
        %v1545 = vlaneseq
        %v1546 = vshrl.u32 %v1545, 7
        %v1547 = vsub.s32 %v1544, %v1546
        %v1548 = vrot.slane %v1349, %v1547
        %v1550 = vunpack.c.l.s4 1983009808
        %v1551 = vunpack.c.0.s8 %v1550
        %v1552 = vlaneseq
        %v1553 = vshrl.u32 %v1552, 7
        %v1554 = vsub.s32 %v1551, %v1553
        %v1555 = vrot.slane %v1541, %v1554
        %v1556 = vcombine.high %v1548, %v1548
        %v1557 = vcombine.high %v1555, %v1555
        %v1558 = vcombine.high %v1350, %v1350
        %v1560 = vunpack.c.l.s4 1983009808
        %v1561 = vunpack.c.0.s8 %v1560
        %v1562 = vlaneseq
        %v1563 = vshrl.u32 %v1562, 7
        %v1564 = vsub.s32 %v1561, %v1563
        %v1565 = vrot.slane %v1350, %v1564
        %v1567 = vunpack.c.l.s4 1983009808
        %v1568 = vunpack.c.0.s8 %v1567
        %v1569 = vlaneseq
        %v1570 = vshrl.u32 %v1569, 7
        %v1571 = vsub.s32 %v1568, %v1570
        %v1572 = vrot.slane %v1558, %v1571
        %v1573 = vcombine.high %v1565, %v1565
        %v1574 = vcombine.high %v1572, %v1572
        %v1575 = vcombine.high %v1351, %v1351
        %v1577 = vunpack.c.l.s4 1983009808
        %v1578 = vunpack.c.0.s8 %v1577
        %v1579 = vlaneseq
        %v1580 = vshrl.u32 %v1579, 7
        %v1581 = vsub.s32 %v1578, %v1580
        %v1582 = vrot.slane %v1351, %v1581
        %v1584 = vunpack.c.l.s4 1983009808
        %v1585 = vunpack.c.0.s8 %v1584
        %v1586 = vlaneseq
        %v1587 = vshrl.u32 %v1586, 7
        %v1588 = vsub.s32 %v1585, %v1587
        %v1589 = vrot.slane %v1575, %v1588
        %v1590 = vcombine.high %v1582, %v1582
        %v1591 = vcombine.high %v1589, %v1589
        %v1592 = vcombine.high %v1352, %v1352
        %v1594 = vunpack.c.l.s4 1983009808
        %v1595 = vunpack.c.0.s8 %v1594
        %v1596 = vlaneseq
        %v1597 = vshrl.u32 %v1596, 7
        %v1598 = vsub.s32 %v1595, %v1597
        %v1599 = vrot.slane %v1352, %v1598
        %v1601 = vunpack.c.l.s4 1983009808
        %v1602 = vunpack.c.0.s8 %v1601
        %v1603 = vlaneseq
        %v1604 = vshrl.u32 %v1603, 7
        %v1605 = vsub.s32 %v1602, %v1604
        %v1606 = vrot.slane %v1592, %v1605
        %v1607 = vcombine.high %v1599, %v1599
        %v1608 = vcombine.high %v1606, %v1606
        %v1609 = vcombine.high %v1353, %v1353
        %v1611 = vunpack.c.l.s4 1983009808
        %v1612 = vunpack.c.0.s8 %v1611
        %v1613 = vlaneseq
        %v1614 = vshrl.u32 %v1613, 7
        %v1615 = vsub.s32 %v1612, %v1614
        %v1616 = vrot.slane %v1353, %v1615
        %v1618 = vunpack.c.l.s4 1983009808
        %v1619 = vunpack.c.0.s8 %v1618
        %v1620 = vlaneseq
        %v1621 = vshrl.u32 %v1620, 7
        %v1622 = vsub.s32 %v1619, %v1621
        %v1623 = vrot.slane %v1609, %v1622
        %v1624 = vcombine.high %v1616, %v1616
        %v1625 = vcombine.high %v1623, %v1623
        %v1626 = vcombine.high %v1354, %v1354
        %v1628 = vunpack.c.l.s4 1983009808
        %v1629 = vunpack.c.0.s8 %v1628
        %v1630 = vlaneseq
        %v1631 = vshrl.u32 %v1630, 7
        %v1632 = vsub.s32 %v1629, %v1631
        %v1633 = vrot.slane %v1354, %v1632
        %v1635 = vunpack.c.l.s4 1983009808
        %v1636 = vunpack.c.0.s8 %v1635
        %v1637 = vlaneseq
        %v1638 = vshrl.u32 %v1637, 7
        %v1639 = vsub.s32 %v1636, %v1638
        %v1640 = vrot.slane %v1626, %v1639
        %v1641 = vcombine.high %v1633, %v1633
        %v1642 = vcombine.high %v1640, %v1640
        %vm1707 = vcmask 254976
        %v1708 = vsel %vm1707, %v1378, -inf
        %v1709 = vrot.slane %v1708, 4
        %v1710 = vmax.f32 %v1708, %v1709
        %v1711 = vrot.slane %v1710, 2
        %v1712 = vmax.f32 %v1710, %v1711
        %v1713 = vrot.slane %v1712, 1
        %v1714 = vmax.f32 %v1712, %v1713
        %v1715 = vsel %vm1707, %v1386, -inf
        %v1716 = vrot.slane %v1715, 4
        %v1717 = vmax.f32 %v1715, %v1716
        %v1718 = vrot.slane %v1717, 2
        %v1719 = vmax.f32 %v1717, %v1718
        %v1720 = vrot.slane %v1719, 1
        %v1721 = vmax.f32 %v1719, %v1720
        %v1722 = vsel %vm1707, %v1385, -inf
        %v1723 = vrot.slane %v1722, 4
        %v1724 = vmax.f32 %v1722, %v1723
        %v1725 = vrot.slane %v1724, 2
        %v1726 = vmax.f32 %v1724, %v1725
        %v1727 = vrot.slane %v1726, 1
        %v1728 = vmax.f32 %v1726, %v1727
        %v1729 = vsel %vm1707, %v1387, -inf
        %v1730 = vrot.slane %v1729, 4
        %v1731 = vmax.f32 %v1729, %v1730
        %v1732 = vrot.slane %v1731, 2
        %v1733 = vmax.f32 %v1731, %v1732
        %v1734 = vrot.slane %v1733, 1
        %v1735 = vmax.f32 %v1733, %v1734
        %v1736 = vsel %vm1707, %v1395, -inf
        %v1737 = vrot.slane %v1736, 4
        %v1738 = vmax.f32 %v1736, %v1737
        %v1739 = vrot.slane %v1738, 2
        %v1740 = vmax.f32 %v1738, %v1739
        %v1741 = vrot.slane %v1740, 1
        %v1742 = vmax.f32 %v1740, %v1741
        %v1743 = vsel %vm1707, %v1403, -inf
        %v1744 = vrot.slane %v1743, 4
        %v1745 = vmax.f32 %v1743, %v1744
        %v1746 = vrot.slane %v1745, 2
        %v1747 = vmax.f32 %v1745, %v1746
        %v1748 = vrot.slane %v1747, 1
        %v1749 = vmax.f32 %v1747, %v1748
        %v1750 = vsel %vm1707, %v1402, -inf
        %v1751 = vrot.slane %v1750, 4
        %v1752 = vmax.f32 %v1750, %v1751
        %v1753 = vrot.slane %v1752, 2
        %v1754 = vmax.f32 %v1752, %v1753
        %v1755 = vrot.slane %v1754, 1
        %v1756 = vmax.f32 %v1754, %v1755
        %v1757 = vsel %vm1707, %v1404, -inf
        %v1758 = vrot.slane %v1757, 4
        %v1759 = vmax.f32 %v1757, %v1758
        %v1760 = vrot.slane %v1759, 2
        %v1761 = vmax.f32 %v1759, %v1760
        %v1762 = vrot.slane %v1761, 1
        %v1763 = vmax.f32 %v1761, %v1762
        %v1764 = vsel %vm1707, %v1412, -inf
        %v1765 = vrot.slane %v1764, 4
        %v1766 = vmax.f32 %v1764, %v1765
        %v1767 = vrot.slane %v1766, 2
        %v1768 = vmax.f32 %v1766, %v1767
        %v1769 = vrot.slane %v1768, 1
        %v1770 = vmax.f32 %v1768, %v1769
        %v1771 = vsel %vm1707, %v1420, -inf
        %v1772 = vrot.slane %v1771, 4
        %v1773 = vmax.f32 %v1771, %v1772
        %v1774 = vrot.slane %v1773, 2
        %v1775 = vmax.f32 %v1773, %v1774
        %v1776 = vrot.slane %v1775, 1
        %v1777 = vmax.f32 %v1775, %v1776
        %v1778 = vsel %vm1707, %v1419, -inf
        %v1779 = vrot.slane %v1778, 4
        %v1780 = vmax.f32 %v1778, %v1779
        %v1781 = vrot.slane %v1780, 2
        %v1782 = vmax.f32 %v1780, %v1781
        %v1783 = vrot.slane %v1782, 1
        %v1784 = vmax.f32 %v1782, %v1783
        %v1785 = vsel %vm1707, %v1421, -inf
        %v1786 = vrot.slane %v1785, 4
        %v1787 = vmax.f32 %v1785, %v1786
        %v1788 = vrot.slane %v1787, 2
        %v1789 = vmax.f32 %v1787, %v1788
        %v1790 = vrot.slane %v1789, 1
        %v1791 = vmax.f32 %v1789, %v1790
        %v1792 = vsel %vm1707, %v1429, -inf
        %v1793 = vrot.slane %v1792, 4
        %v1794 = vmax.f32 %v1792, %v1793
        %v1795 = vrot.slane %v1794, 2
        %v1796 = vmax.f32 %v1794, %v1795
        %v1797 = vrot.slane %v1796, 1
        %v1798 = vmax.f32 %v1796, %v1797
        %v1799 = vsel %vm1707, %v1437, -inf
        %v1800 = vrot.slane %v1799, 4
        %v1801 = vmax.f32 %v1799, %v1800
        %v1802 = vrot.slane %v1801, 2
        %v1803 = vmax.f32 %v1801, %v1802
        %v1804 = vrot.slane %v1803, 1
        %v1805 = vmax.f32 %v1803, %v1804
        %v1806 = vsel %vm1707, %v1436, -inf
        %v1807 = vrot.slane %v1806, 4
        %v1808 = vmax.f32 %v1806, %v1807
        %v1809 = vrot.slane %v1808, 2
        %v1810 = vmax.f32 %v1808, %v1809
        %v1811 = vrot.slane %v1810, 1
        %v1812 = vmax.f32 %v1810, %v1811
        %v1813 = vsel %vm1707, %v1438, -inf
        %v1814 = vrot.slane %v1813, 4
        %v1815 = vmax.f32 %v1813, %v1814
        %v1816 = vrot.slane %v1815, 2
        %v1817 = vmax.f32 %v1815, %v1816
        %v1818 = vrot.slane %v1817, 1
        %v1819 = vmax.f32 %v1817, %v1818
        %v1820 = vsel %vm1707, %v1446, -inf
        %v1821 = vrot.slane %v1820, 4
        %v1822 = vmax.f32 %v1820, %v1821
        %v1823 = vrot.slane %v1822, 2
        %v1824 = vmax.f32 %v1822, %v1823
        %v1825 = vrot.slane %v1824, 1
        %v1826 = vmax.f32 %v1824, %v1825
        %v1827 = vsel %vm1707, %v1454, -inf
        %v1828 = vrot.slane %v1827, 4
        %v1829 = vmax.f32 %v1827, %v1828
        %v1830 = vrot.slane %v1829, 2
        %v1831 = vmax.f32 %v1829, %v1830
        %v1832 = vrot.slane %v1831, 1
        %v1833 = vmax.f32 %v1831, %v1832
        %v1834 = vsel %vm1707, %v1453, -inf
        %v1835 = vrot.slane %v1834, 4
        %v1836 = vmax.f32 %v1834, %v1835
        %v1837 = vrot.slane %v1836, 2
        %v1838 = vmax.f32 %v1836, %v1837
        %v1839 = vrot.slane %v1838, 1
        %v1840 = vmax.f32 %v1838, %v1839
        %v1841 = vsel %vm1707, %v1455, -inf
        %v1842 = vrot.slane %v1841, 4
        %v1843 = vmax.f32 %v1841, %v1842
        %v1844 = vrot.slane %v1843, 2
        %v1845 = vmax.f32 %v1843, %v1844
        %v1846 = vrot.slane %v1845, 1
        %v1847 = vmax.f32 %v1845, %v1846
        %v1848 = vsel %vm1707, %v1463, -inf
        %v1849 = vrot.slane %v1848, 4
        %v1850 = vmax.f32 %v1848, %v1849
        %v1851 = vrot.slane %v1850, 2
        %v1852 = vmax.f32 %v1850, %v1851
        %v1853 = vrot.slane %v1852, 1
        %v1854 = vmax.f32 %v1852, %v1853
        %v1855 = vsel %vm1707, %v1471, -inf
        %v1856 = vrot.slane %v1855, 4
        %v1857 = vmax.f32 %v1855, %v1856
        %v1858 = vrot.slane %v1857, 2
        %v1859 = vmax.f32 %v1857, %v1858
        %v1860 = vrot.slane %v1859, 1
        %v1861 = vmax.f32 %v1859, %v1860
        %v1862 = vsel %vm1707, %v1470, -inf
        %v1863 = vrot.slane %v1862, 4
        %v1864 = vmax.f32 %v1862, %v1863
        %v1865 = vrot.slane %v1864, 2
        %v1866 = vmax.f32 %v1864, %v1865
        %v1867 = vrot.slane %v1866, 1
        %v1868 = vmax.f32 %v1866, %v1867
        %v1869 = vsel %vm1707, %v1472, -inf
        %v1870 = vrot.slane %v1869, 4
        %v1871 = vmax.f32 %v1869, %v1870
        %v1872 = vrot.slane %v1871, 2
        %v1873 = vmax.f32 %v1871, %v1872
        %v1874 = vrot.slane %v1873, 1
        %v1875 = vmax.f32 %v1873, %v1874
        %v1876 = vsel %vm1707, %v1480, -inf
        %v1877 = vrot.slane %v1876, 4
        %v1878 = vmax.f32 %v1876, %v1877
        %v1879 = vrot.slane %v1878, 2
        %v1880 = vmax.f32 %v1878, %v1879
        %v1881 = vrot.slane %v1880, 1
        %v1882 = vmax.f32 %v1880, %v1881
        %v1883 = vsel %vm1707, %v1488, -inf
        %v1884 = vrot.slane %v1883, 4
        %v1885 = vmax.f32 %v1883, %v1884
        %v1886 = vrot.slane %v1885, 2
        %v1887 = vmax.f32 %v1885, %v1886
        %v1888 = vrot.slane %v1887, 1
        %v1889 = vmax.f32 %v1887, %v1888
        %v1890 = vsel %vm1707, %v1487, -inf
        %v1891 = vrot.slane %v1890, 4
        %v1892 = vmax.f32 %v1890, %v1891
        %v1893 = vrot.slane %v1892, 2
        %v1894 = vmax.f32 %v1892, %v1893
        %v1895 = vrot.slane %v1894, 1
        %v1896 = vmax.f32 %v1894, %v1895
        %v1897 = vsel %vm1707, %v1489, -inf
        %v1898 = vrot.slane %v1897, 4
        %v1899 = vmax.f32 %v1897, %v1898
        %v1900 = vrot.slane %v1899, 2
        %v1901 = vmax.f32 %v1899, %v1900
        %v1902 = vrot.slane %v1901, 1
        %v1903 = vmax.f32 %v1901, %v1902
        %v1904 = vsel %vm1707, %v1497, -inf
        %v1905 = vrot.slane %v1904, 4
        %v1906 = vmax.f32 %v1904, %v1905
        %v1907 = vrot.slane %v1906, 2
        %v1908 = vmax.f32 %v1906, %v1907
        %v1909 = vrot.slane %v1908, 1
        %v1910 = vmax.f32 %v1908, %v1909
        %v1911 = vsel %vm1707, %v1505, -inf
        %v1912 = vrot.slane %v1911, 4
        %v1913 = vmax.f32 %v1911, %v1912
        %v1914 = vrot.slane %v1913, 2
        %v1915 = vmax.f32 %v1913, %v1914
        %v1916 = vrot.slane %v1915, 1
        %v1917 = vmax.f32 %v1915, %v1916
        %v1918 = vsel %vm1707, %v1504, -inf
        %v1919 = vrot.slane %v1918, 4
        %v1920 = vmax.f32 %v1918, %v1919
        %v1921 = vrot.slane %v1920, 2
        %v1922 = vmax.f32 %v1920, %v1921
        %v1923 = vrot.slane %v1922, 1
        %v1924 = vmax.f32 %v1922, %v1923
        %v1925 = vsel %vm1707, %v1506, -inf
        %v1926 = vrot.slane %v1925, 4
        %v1927 = vmax.f32 %v1925, %v1926
        %v1928 = vrot.slane %v1927, 2
        %v1929 = vmax.f32 %v1927, %v1928
        %v1930 = vrot.slane %v1929, 1
        %v1931 = vmax.f32 %v1929, %v1930
        %v1932 = vsel %vm1707, %v1514, -inf
        %v1933 = vrot.slane %v1932, 4
        %v1934 = vmax.f32 %v1932, %v1933
        %v1935 = vrot.slane %v1934, 2
        %v1936 = vmax.f32 %v1934, %v1935
        %v1937 = vrot.slane %v1936, 1
        %v1938 = vmax.f32 %v1936, %v1937
        %v1939 = vsel %vm1707, %v1522, -inf
        %v1940 = vrot.slane %v1939, 4
        %v1941 = vmax.f32 %v1939, %v1940
        %v1942 = vrot.slane %v1941, 2
        %v1943 = vmax.f32 %v1941, %v1942
        %v1944 = vrot.slane %v1943, 1
        %v1945 = vmax.f32 %v1943, %v1944
        %v1946 = vsel %vm1707, %v1521, -inf
        %v1947 = vrot.slane %v1946, 4
        %v1948 = vmax.f32 %v1946, %v1947
        %v1949 = vrot.slane %v1948, 2
        %v1950 = vmax.f32 %v1948, %v1949
        %v1951 = vrot.slane %v1950, 1
        %v1952 = vmax.f32 %v1950, %v1951
        %v1953 = vsel %vm1707, %v1523, -inf
        %v1954 = vrot.slane %v1953, 4
        %v1955 = vmax.f32 %v1953, %v1954
        %v1956 = vrot.slane %v1955, 2
        %v1957 = vmax.f32 %v1955, %v1956
        %v1958 = vrot.slane %v1957, 1
        %v1959 = vmax.f32 %v1957, %v1958
        %v1960 = vsel %vm1707, %v1531, -inf
        %v1961 = vrot.slane %v1960, 4
        %v1962 = vmax.f32 %v1960, %v1961
        %v1963 = vrot.slane %v1962, 2
        %v1964 = vmax.f32 %v1962, %v1963
        %v1965 = vrot.slane %v1964, 1
        %v1966 = vmax.f32 %v1964, %v1965
        %v1967 = vsel %vm1707, %v1539, -inf
        %v1968 = vrot.slane %v1967, 4
        %v1969 = vmax.f32 %v1967, %v1968
        %v1970 = vrot.slane %v1969, 2
        %v1971 = vmax.f32 %v1969, %v1970
        %v1972 = vrot.slane %v1971, 1
        %v1973 = vmax.f32 %v1971, %v1972
        %v1974 = vsel %vm1707, %v1538, -inf
        %v1975 = vrot.slane %v1974, 4
        %v1976 = vmax.f32 %v1974, %v1975
        %v1977 = vrot.slane %v1976, 2
        %v1978 = vmax.f32 %v1976, %v1977
        %v1979 = vrot.slane %v1978, 1
        %v1980 = vmax.f32 %v1978, %v1979
        %v1981 = vsel %vm1707, %v1540, -inf
        %v1982 = vrot.slane %v1981, 4
        %v1983 = vmax.f32 %v1981, %v1982
        %v1984 = vrot.slane %v1983, 2
        %v1985 = vmax.f32 %v1983, %v1984
        %v1986 = vrot.slane %v1985, 1
        %v1987 = vmax.f32 %v1985, %v1986
        %v1988 = vsel %vm1707, %v1548, -inf
        %v1989 = vrot.slane %v1988, 4
        %v1990 = vmax.f32 %v1988, %v1989
        %v1991 = vrot.slane %v1990, 2
        %v1992 = vmax.f32 %v1990, %v1991
        %v1993 = vrot.slane %v1992, 1
        %v1994 = vmax.f32 %v1992, %v1993
        %v1995 = vsel %vm1707, %v1556, -inf
        %v1996 = vrot.slane %v1995, 4
        %v1997 = vmax.f32 %v1995, %v1996
        %v1998 = vrot.slane %v1997, 2
        %v1999 = vmax.f32 %v1997, %v1998
        %v2000 = vrot.slane %v1999, 1
        %v2001 = vmax.f32 %v1999, %v2000
        %v2002 = vsel %vm1707, %v1555, -inf
        %v2003 = vrot.slane %v2002, 4
        %v2004 = vmax.f32 %v2002, %v2003
        %v2005 = vrot.slane %v2004, 2
        %v2006 = vmax.f32 %v2004, %v2005
        %v2007 = vrot.slane %v2006, 1
        %v2008 = vmax.f32 %v2006, %v2007
        %v2009 = vsel %vm1707, %v1557, -inf
        %v2010 = vrot.slane %v2009, 4
        %v2011 = vmax.f32 %v2009, %v2010
        %v2012 = vrot.slane %v2011, 2
        %v2013 = vmax.f32 %v2011, %v2012
        %v2014 = vrot.slane %v2013, 1
        %v2015 = vmax.f32 %v2013, %v2014
        %v2016 = vsel %vm1707, %v1565, -inf
        %v2017 = vrot.slane %v2016, 4
        %v2018 = vmax.f32 %v2016, %v2017
        %v2019 = vrot.slane %v2018, 2
        %v2020 = vmax.f32 %v2018, %v2019
        %v2021 = vrot.slane %v2020, 1
        %v2022 = vmax.f32 %v2020, %v2021
        %v2023 = vsel %vm1707, %v1573, -inf
        %v2024 = vrot.slane %v2023, 4
        %v2025 = vmax.f32 %v2023, %v2024
        %v2026 = vrot.slane %v2025, 2
        %v2027 = vmax.f32 %v2025, %v2026
        %v2028 = vrot.slane %v2027, 1
        %v2029 = vmax.f32 %v2027, %v2028
        %v2030 = vsel %vm1707, %v1572, -inf
        %v2031 = vrot.slane %v2030, 4
        %v2032 = vmax.f32 %v2030, %v2031
        %v2033 = vrot.slane %v2032, 2
        %v2034 = vmax.f32 %v2032, %v2033
        %v2035 = vrot.slane %v2034, 1
        %v2036 = vmax.f32 %v2034, %v2035
        %v2037 = vsel %vm1707, %v1574, -inf
        %v2038 = vrot.slane %v2037, 4
        %v2039 = vmax.f32 %v2037, %v2038
        %v2040 = vrot.slane %v2039, 2
        %v2041 = vmax.f32 %v2039, %v2040
        %v2042 = vrot.slane %v2041, 1
        %v2043 = vmax.f32 %v2041, %v2042
        %v2044 = vsel %vm1707, %v1582, -inf
        %v2045 = vrot.slane %v2044, 4
        %v2046 = vmax.f32 %v2044, %v2045
        %v2047 = vrot.slane %v2046, 2
        %v2048 = vmax.f32 %v2046, %v2047
        %v2049 = vrot.slane %v2048, 1
        %v2050 = vmax.f32 %v2048, %v2049
        %v2051 = vsel %vm1707, %v1590, -inf
        %v2052 = vrot.slane %v2051, 4
        %v2053 = vmax.f32 %v2051, %v2052
        %v2054 = vrot.slane %v2053, 2
        %v2055 = vmax.f32 %v2053, %v2054
        %v2056 = vrot.slane %v2055, 1
        %v2057 = vmax.f32 %v2055, %v2056
        %v2058 = vsel %vm1707, %v1589, -inf
        %v2059 = vrot.slane %v2058, 4
        %v2060 = vmax.f32 %v2058, %v2059
        %v2061 = vrot.slane %v2060, 2
        %v2062 = vmax.f32 %v2060, %v2061
        %v2063 = vrot.slane %v2062, 1
        %v2064 = vmax.f32 %v2062, %v2063
        %v2065 = vsel %vm1707, %v1591, -inf
        %v2066 = vrot.slane %v2065, 4
        %v2067 = vmax.f32 %v2065, %v2066
        %v2068 = vrot.slane %v2067, 2
        %v2069 = vmax.f32 %v2067, %v2068
        %v2070 = vrot.slane %v2069, 1
        %v2071 = vmax.f32 %v2069, %v2070
        %v2072 = vsel %vm1707, %v1599, -inf
        %v2073 = vrot.slane %v2072, 4
        %v2074 = vmax.f32 %v2072, %v2073
        %v2075 = vrot.slane %v2074, 2
        %v2076 = vmax.f32 %v2074, %v2075
        %v2077 = vrot.slane %v2076, 1
        %v2078 = vmax.f32 %v2076, %v2077
        %v2079 = vsel %vm1707, %v1607, -inf
        %v2080 = vrot.slane %v2079, 4
        %v2081 = vmax.f32 %v2079, %v2080
        %v2082 = vrot.slane %v2081, 2
        %v2083 = vmax.f32 %v2081, %v2082
        %v2084 = vrot.slane %v2083, 1
        %v2085 = vmax.f32 %v2083, %v2084
        %v2086 = vsel %vm1707, %v1606, -inf
        %v2087 = vrot.slane %v2086, 4
        %v2088 = vmax.f32 %v2086, %v2087
        %v2089 = vrot.slane %v2088, 2
        %v2090 = vmax.f32 %v2088, %v2089
        %v2091 = vrot.slane %v2090, 1
        %v2092 = vmax.f32 %v2090, %v2091
        %v2093 = vsel %vm1707, %v1608, -inf
        %v2094 = vrot.slane %v2093, 4
        %v2095 = vmax.f32 %v2093, %v2094
        %v2096 = vrot.slane %v2095, 2
        %v2097 = vmax.f32 %v2095, %v2096
        %v2098 = vrot.slane %v2097, 1
        %v2099 = vmax.f32 %v2097, %v2098
        %v2100 = vsel %vm1707, %v1616, -inf
        %v2101 = vrot.slane %v2100, 4
        %v2102 = vmax.f32 %v2100, %v2101
        %v2103 = vrot.slane %v2102, 2
        %v2104 = vmax.f32 %v2102, %v2103
        %v2105 = vrot.slane %v2104, 1
        %v2106 = vmax.f32 %v2104, %v2105
        %v2107 = vsel %vm1707, %v1624, -inf
        %v2108 = vrot.slane %v2107, 4
        %v2109 = vmax.f32 %v2107, %v2108
        %v2110 = vrot.slane %v2109, 2
        %v2111 = vmax.f32 %v2109, %v2110
        %v2112 = vrot.slane %v2111, 1
        %v2113 = vmax.f32 %v2111, %v2112
        %v2114 = vsel %vm1707, %v1623, -inf
        %v2115 = vrot.slane %v2114, 4
        %v2116 = vmax.f32 %v2114, %v2115
        %v2117 = vrot.slane %v2116, 2
        %v2118 = vmax.f32 %v2116, %v2117
        %v2119 = vrot.slane %v2118, 1
        %v2120 = vmax.f32 %v2118, %v2119
        %v2121 = vsel %vm1707, %v1625, -inf
        %v2122 = vrot.slane %v2121, 4
        %v2123 = vmax.f32 %v2121, %v2122
        %v2124 = vrot.slane %v2123, 2
        %v2125 = vmax.f32 %v2123, %v2124
        %v2126 = vrot.slane %v2125, 1
        %v2127 = vmax.f32 %v2125, %v2126
        %v2128 = vsel %vm1707, %v1633, -inf
        %v2129 = vrot.slane %v2128, 4
        %v2130 = vmax.f32 %v2128, %v2129
        %v2131 = vrot.slane %v2130, 2
        %v2132 = vmax.f32 %v2130, %v2131
        %v2133 = vrot.slane %v2132, 1
        %v2134 = vmax.f32 %v2132, %v2133
        %v2135 = vsel %vm1707, %v1641, -inf
        %v2136 = vrot.slane %v2135, 4
        %v2137 = vmax.f32 %v2135, %v2136
        %v2138 = vrot.slane %v2137, 2
        %v2139 = vmax.f32 %v2137, %v2138
        %v2140 = vrot.slane %v2139, 1
        %v2141 = vmax.f32 %v2139, %v2140
        %v2142 = vsel %vm1707, %v1640, -inf
        %v2143 = vrot.slane %v2142, 4
        %v2144 = vmax.f32 %v2142, %v2143
        %v2145 = vrot.slane %v2144, 2
        %v2146 = vmax.f32 %v2144, %v2145
        %v2147 = vrot.slane %v2146, 1
        %v2148 = vmax.f32 %v2146, %v2147
        %v2149 = vsel %vm1707, %v1642, -inf
        %v2150 = vrot.slane %v2149, 4
        %v2151 = vmax.f32 %v2149, %v2150
        %v2152 = vrot.slane %v2151, 2
        %v2153 = vmax.f32 %v2151, %v2152
        %v2154 = vrot.slane %v2153, 1
        %v2155 = vmax.f32 %v2153, %v2154
        %vm2156 = vcmask 261120
        %2157 = vst.msk [vmem:[#allocation3] sm:$0xff] %vm2156, 0.0
        %2158 = vst.msk [vmem:[#allocation3 + $0x8] sm:$0xff] %vm2156, 0.0
        %2159 = vst.msk [vmem:[#allocation3 + $0x10] sm:$0xff] %vm2156, 0.0
        %2160 = vst.msk [vmem:[#allocation3 + $0x18] sm:$0xff] %vm2156, 0.0
        %2161 = vst.msk [vmem:[#allocation3 + $0x20] sm:$0xff] %vm2156, 0.0
        %2162 = vst.msk [vmem:[#allocation3 + $0x28] sm:$0xff] %vm2156, 0.0
        %2163 = vst.msk [vmem:[#allocation3 + $0x30] sm:$0xff] %vm2156, 0.0
        %2164 = vst.msk [vmem:[#allocation3 + $0x38] sm:$0xff] %vm2156, 0.0
        %2165 = vst.msk [vmem:[#allocation3 + $0x40] sm:$0x3] %vm1707, 0.0
        %vm2230 = vcmask 1041409
        %v2231 = vsel %vm2230, %v1721, %v1714
        %vm2232 = vcmask 1042434
        %v2233 = vsel %vm2232, %v1728, %v2231
        %vm2234 = vcmask 1043459
        %v2235 = vsel %vm2234, %v1735, %v2233
        %vm2236 = vcmask 1044484
        %v2237 = vsel %vm2236, %v1742, %v2235
        %vm2238 = vcmask 1045509
        %v2239 = vsel %vm2238, %v1749, %v2237
        %vm2240 = vcmask 1046534
        %v2241 = vsel %vm2240, %v1756, %v2239
        %vm2242 = vcmask 1047559
        %v2243 = vsel %vm2242, %v1763, %v2241
        %v2244 = vsel %vm2230, %v1777, %v1770
        %v2245 = vsel %vm2232, %v1784, %v2244
        %v2246 = vsel %vm2234, %v1791, %v2245
        %v2247 = vsel %vm2236, %v1798, %v2246
        %v2248 = vsel %vm2238, %v1805, %v2247
        %v2249 = vsel %vm2240, %v1812, %v2248
        %v2250 = vsel %vm2242, %v1819, %v2249
        %v2251 = vsel %vm2230, %v1833, %v1826
        %v2252 = vsel %vm2232, %v1840, %v2251
        %v2253 = vsel %vm2234, %v1847, %v2252
        %v2254 = vsel %vm2236, %v1854, %v2253
        %v2255 = vsel %vm2238, %v1861, %v2254
        %v2256 = vsel %vm2240, %v1868, %v2255
        %v2257 = vsel %vm2242, %v1875, %v2256
        %v2258 = vsel %vm2230, %v1889, %v1882
        %v2259 = vsel %vm2232, %v1896, %v2258
        %v2260 = vsel %vm2234, %v1903, %v2259
        %v2261 = vsel %vm2236, %v1910, %v2260
        %v2262 = vsel %vm2238, %v1917, %v2261
        %v2263 = vsel %vm2240, %v1924, %v2262
        %v2264 = vsel %vm2242, %v1931, %v2263
        %v2265 = vsel %vm2230, %v1945, %v1938
        %v2266 = vsel %vm2232, %v1952, %v2265
        %v2267 = vsel %vm2234, %v1959, %v2266
        %v2268 = vsel %vm2236, %v1966, %v2267
        %v2269 = vsel %vm2238, %v1973, %v2268
        %v2270 = vsel %vm2240, %v1980, %v2269
        %v2271 = vsel %vm2242, %v1987, %v2270
        %v2272 = vsel %vm2230, %v2001, %v1994
        %v2273 = vsel %vm2232, %v2008, %v2272
        %v2274 = vsel %vm2234, %v2015, %v2273
        %v2275 = vsel %vm2236, %v2022, %v2274
        %v2276 = vsel %vm2238, %v2029, %v2275
        %v2277 = vsel %vm2240, %v2036, %v2276
        %v2278 = vsel %vm2242, %v2043, %v2277
        %v2279 = vsel %vm2230, %v2057, %v2050
        %v2280 = vsel %vm2232, %v2064, %v2279
        %v2281 = vsel %vm2234, %v2071, %v2280
        %v2282 = vsel %vm2236, %v2078, %v2281
        %v2283 = vsel %vm2238, %v2085, %v2282
        %v2284 = vsel %vm2240, %v2092, %v2283
        %v2285 = vsel %vm2242, %v2099, %v2284
        %v2286 = vsel %vm2230, %v2113, %v2106
        %v2287 = vsel %vm2232, %v2120, %v2286
        %v2288 = vsel %vm2234, %v2127, %v2287
        %v2289 = vsel %vm2236, %v2134, %v2288
        %v2290 = vsel %vm2238, %v2141, %v2289
        %v2291 = vsel %vm2240, %v2148, %v2290
        %v2292 = vsel %vm2242, %v2155, %v2291
        %2301 = vst.msk [vmem:[#allocation3 + $0x1] sm:$0xff] %vm2156, %v2243
        %2302 = vst.msk [vmem:[#allocation3 + $0x9] sm:$0xff] %vm2156, %v2250
        %2303 = vst.msk [vmem:[#allocation3 + $0x11] sm:$0xff] %vm2156, %v2257
        %2304 = vst.msk [vmem:[#allocation3 + $0x19] sm:$0xff] %vm2156, %v2264
        %2305 = vst.msk [vmem:[#allocation3 + $0x21] sm:$0xff] %vm2156, %v2271
        %2306 = vst.msk [vmem:[#allocation3 + $0x29] sm:$0xff] %vm2156, %v2278
        %2307 = vst.msk [vmem:[#allocation3 + $0x31] sm:$0xff] %vm2156, %v2285
        %2308 = vst.msk [vmem:[#allocation3 + $0x39] sm:$0xff] %vm2156, %v2292
        %v2309 = vld [vmem:[#allocation3] sm:$0xff]
        %v2310 = vld [vmem:[#allocation3 + $0x8] sm:$0xff]
        %v2311 = vld [vmem:[#allocation3 + $0x10] sm:$0xff]
        %v2312 = vld [vmem:[#allocation3 + $0x18] sm:$0xff]
        %v2313 = vld [vmem:[#allocation3 + $0x20] sm:$0xff]
        %v2314 = vld [vmem:[#allocation3 + $0x28] sm:$0xff]
        %v2315 = vld [vmem:[#allocation3 + $0x30] sm:$0xff]
        %v2316 = vld [vmem:[#allocation3 + $0x38] sm:$0xff]
        %v2317 = vld [vmem:[#allocation3 + $0x1] sm:$0xff]
        %v2318 = vld [vmem:[#allocation3 + $0x9] sm:$0xff]
        %v2319 = vld [vmem:[#allocation3 + $0x11] sm:$0xff]
        %v2320 = vld [vmem:[#allocation3 + $0x19] sm:$0xff]
        %v2321 = vld [vmem:[#allocation3 + $0x21] sm:$0xff]
        %v2322 = vld [vmem:[#allocation3 + $0x29] sm:$0xff]
        %v2323 = vld [vmem:[#allocation3 + $0x31] sm:$0xff]
        %v2324 = vld [vmem:[#allocation3 + $0x39] sm:$0xff]
        %v2325 = vld [vmem:[#allocation3 + $0x2] sm:$0xff]
        %v2326 = vld [vmem:[#allocation3 + $0xa] sm:$0xff]
        %v2327 = vld [vmem:[#allocation3 + $0x12] sm:$0xff]
        %v2328 = vld [vmem:[#allocation3 + $0x1a] sm:$0xff]
        %v2329 = vld [vmem:[#allocation3 + $0x22] sm:$0xff]
        %v2330 = vld [vmem:[#allocation3 + $0x2a] sm:$0xff]
        %v2331 = vld [vmem:[#allocation3 + $0x32] sm:$0xff]
        %v2332 = vld [vmem:[#allocation3 + $0x3a] sm:$0xff]
        %2341 = vrot.lane.b32.xlu0 %v2317, 32
        %v2342 = vpop.permute.xlu0 %2341
        %2343 = vrot.lane.b32.xlu0 %v2318, 32
        %v2344 = vpop.permute.xlu0 %2343
        %2345 = vrot.lane.b32.xlu0 %v2319, 32
        %v2346 = vpop.permute.xlu0 %2345
        %2347 = vrot.lane.b32.xlu0 %v2320, 32
        %v2348 = vpop.permute.xlu0 %2347
        %2349 = vrot.lane.b32.xlu0 %v2321, 32
        %v2350 = vpop.permute.xlu0 %2349
        %2351 = vrot.lane.b32.xlu0 %v2322, 32
        %v2352 = vpop.permute.xlu0 %2351
        %2353 = vrot.lane.b32.xlu0 %v2323, 32
        %v2354 = vpop.permute.xlu0 %2353
        %2355 = vrot.lane.b32.xlu0 %v2324, 32
        %v2356 = vpop.permute.xlu0 %2355
        %2373 = vrot.lane.b32.xlu0 %v2325, 64
        %v2374 = vpop.permute.xlu0 %2373
        %2375 = vrot.lane.b32.xlu0 %v2326, 64
        %v2376 = vpop.permute.xlu0 %2375
        %2377 = vrot.lane.b32.xlu0 %v2327, 64
        %v2378 = vpop.permute.xlu0 %2377
        %2379 = vrot.lane.b32.xlu0 %v2328, 64
        %v2380 = vpop.permute.xlu0 %2379
        %2381 = vrot.lane.b32.xlu0 %v2329, 64
        %v2382 = vpop.permute.xlu0 %2381
        %2383 = vrot.lane.b32.xlu0 %v2330, 64
        %v2384 = vpop.permute.xlu0 %2383
        %2385 = vrot.lane.b32.xlu0 %v2331, 64
        %v2386 = vpop.permute.xlu0 %2385
        %2387 = vrot.lane.b32.xlu0 %v2332, 64
        %v2388 = vpop.permute.xlu0 %2387
        %v2397 = vsel %vm2156, %v2309, %v2342
        %v2398 = vsel %vm2156, %v2310, %v2344
        %v2399 = vsel %vm2156, %v2311, %v2346
        %v2400 = vsel %vm2156, %v2312, %v2348
        %v2401 = vsel %vm2156, %v2313, %v2350
        %v2402 = vsel %vm2156, %v2314, %v2352
        %v2403 = vsel %vm2156, %v2315, %v2354
        %v2404 = vsel %vm2156, %v2316, %v2356
        %vm2405 = vcmask 523264
        %v2406 = vsel %vm2405, %v2397, %v2374
        %v2407 = vsel %vm2405, %v2398, %v2376
        %v2408 = vsel %vm2405, %v2399, %v2378
        %v2409 = vsel %vm2405, %v2400, %v2380
        %v2410 = vsel %vm2405, %v2401, %v2382
        %v2411 = vsel %vm2405, %v2402, %v2384
        %v2412 = vsel %vm2405, %v2403, %v2386
        %v2413 = vsel %vm2405, %v2404, %v2388
        %v2414 = vpack.c.bf16 %v2407, %v2406
        %v2415 = vpack.c.bf16 %v2409, %v2408
        %v2416 = vpack.c.bf16 %v2411, %v2410
        %v2417 = vpack.c.bf16 %v2413, %v2412
        %v2418 = vld [vmem:[#allocation14] sm:$0xf]
        %v2419 = vld [vmem:[#allocation14 + $0x4] sm:$0xf]
        %v2420 = vld [vmem:[#allocation14 + $0x8] sm:$0xf]
        %v2421 = vld [vmem:[#allocation14 + $0xc] sm:$0xf]
        %v2422 = vld [vmem:[#allocation14 + $0x10] sm:$0xf]
        %v2423 = vld [vmem:[#allocation14 + $0x14] sm:$0xf]
        %v2424 = vld [vmem:[#allocation14 + $0x18] sm:$0xf]
        %v2425 = vld [vmem:[#allocation14 + $0x1c] sm:$0xf]
        %v2426 = vld [vmem:[#allocation14 + $0x20] sm:$0xf]
        %v2427 = vld [vmem:[#allocation14 + $0x24] sm:$0xf]
        %v2428 = vld [vmem:[#allocation14 + $0x28] sm:$0xf]
        %v2429 = vld [vmem:[#allocation14 + $0x2c] sm:$0xf]
        %v2442 = vunpack.c.l.b16 %v2418
        %v2443 = vunpack.c.l.b16 %v2419
        %v2444 = vunpack.c.l.b16 %v2420
        %v2445 = vunpack.c.l.b16 %v2421
        %v2446 = vunpack.c.l.b16 %v2422
        %v2447 = vunpack.c.l.b16 %v2423
        %v2448 = vunpack.c.l.b16 %v2424
        %v2449 = vunpack.c.l.b16 %v2425
        %v2450 = vunpack.c.l.b16 %v2426
        %v2451 = vunpack.c.l.b16 %v2427
        %v2452 = vunpack.c.l.b16 %v2428
        %v2453 = vunpack.c.l.b16 %v2429
        %v2454 = vpack.c.b16 %v2443, %v2442
        %v2455 = vpack.c.b16 %v2445, %v2444
        %v2456 = vpack.c.b16 %v2447, %v2446
        %v2457 = vpack.c.b16 %v2449, %v2448
        %v2458 = vpack.c.b16 %v2451, %v2450
        %v2459 = vpack.c.b16 %v2453, %v2452
        %vm2466 = vcmask 785408
        %v2468 = vsel %vm2466, %v2414, 0
        %v2471 = vsel %vm2466, %v2415, 0
        %v2474 = vsel %vm2466, %v2416, 0
        %v2477 = vsel %vm2466, %v2417, 0
        %2479 = vmatprep.subr.bf16.mxu0 0
        %2480 = vmatpush1.bf16.msra.mxu0 0
        %2481 = vmatprep.subr.bf16.mxu0 0
        %2482 = vmatpush1.bf16.msra.mxu0 0
        %2483 = vmatprep.subr.bf16.mxu0 0
        %2484 = vmatpush1.bf16.msra.mxu0 %v2459
        %2485 = vmatprep.subr.bf16.mxu0 0
        %2486 = vmatpush1.bf16.msra.mxu0 %v2458
        %2487 = vmatprep.subr.bf16.mxu0 0
        %2488 = vmatpush1.bf16.msra.mxu0 %v2457
        %2489 = vmatprep.subr.bf16.mxu0 0
        %2490 = vmatpush1.bf16.msra.mxu0 %v2456
        %2491 = vmatprep.subr.bf16.mxu0 0
        %2492 = vmatpush1.bf16.msra.mxu0 %v2455
        %2493 = vmatprep.subr.bf16.mxu0 0
        %2494 = vmatpush1.bf16.msra.mxu0 %v2454
        %2495 = vmatprep.subr.bf16.mxu0 0
        %2496 = vmatpush2.bf16.msra.mxu0 0
        %2497 = vmatprep.subr.bf16.mxu0 0
        %2498 = vmatpush2.bf16.msra.mxu0 0
        %2499 = vmatprep.subr.bf16.mxu0 0
        %2500 = vmatpush2.bf16.msra.mxu0 0
        %2501 = vmatprep.subr.bf16.mxu0 0
        %2502 = vmatpush2.bf16.msra.mxu0 0
        %2503 = vmatprep.subr.bf16.mxu0 0
        %2504 = vmatpush2.bf16.msra.mxu0 0
        %2505 = vmatprep.subr.bf16.mxu0 0
        %2506 = vmatpush2.bf16.msra.mxu0 0
        %2507 = vmatprep.subr.bf16.mxu0 0
        %2508 = vmatpush2.bf16.msra.mxu0 0
        %2509 = vmatprep.subr.bf16.mxu0 0
        %2510 = vmatpush2.bf16.msra.mxu0 0
        %2511 = vmatprep.mubr.bf16.mxu0 0
        %2512 = vmatmul.mubr.bf16.gmra.mxu0 %v2468
        %v2513 = vpop.f32.mrf.mxu0
        %v2514 = vadd.f32 0.0, %v2513
        %v2515 = vpop.f32.mrf.mxu0
        %v2516 = vpop.f32.mrf.mxu0
        %v2517 = vadd.f32 0.0, %v2516
        %v2518 = vpop.f32.mrf.mxu0
        %2519 = vmatprep.mubr.bf16.mxu0 0
        %2520 = vmatmul.mubr.bf16.gmra.mxu0 %v2471
        %v2521 = vpop.f32.mrf.mxu0
        %v2522 = vadd.f32 0.0, %v2521
        %v2523 = vpop.f32.mrf.mxu0
        %v2524 = vpop.f32.mrf.mxu0
        %v2525 = vadd.f32 0.0, %v2524
        %v2526 = vpop.f32.mrf.mxu0
        %2527 = vmatprep.mubr.bf16.mxu0 0
        %2528 = vmatmul.mubr.bf16.gmra.mxu0 %v2474
        %v2529 = vpop.f32.mrf.mxu0
        %v2530 = vadd.f32 0.0, %v2529
        %v2531 = vpop.f32.mrf.mxu0
        %v2532 = vpop.f32.mrf.mxu0
        %v2533 = vadd.f32 0.0, %v2532
        %v2534 = vpop.f32.mrf.mxu0
        %2535 = vmatprep.mubr.bf16.mxu0 0
        %2536 = vmatmul.mubr.bf16.gmra.mxu0 %v2477
        %v2537 = vpop.f32.mrf.mxu0
        %v2538 = vadd.f32 0.0, %v2537
        %v2539 = vpop.f32.mrf.mxu0
        %v2540 = vpop.f32.mrf.mxu0
        %v2541 = vadd.f32 0.0, %v2540
        %v2542 = vpop.f32.mrf.mxu0
        %2543 = vdwg.mxu0
        %v2544 = vld [vmem:[%s5] sm:$0x1]
        %v2546 = vlaneseq
        %v2547 = vshrl.u32 %v2546, 7
        %v2548 = vsub.s32 0, %v2547
        %v2549 = vrot.slane %v2544, %v2548
        %v2551 = vmul.f32 %v2514, %v2549
        %v2552 = vmul.f32 %v2517, %v2549
        %v2553 = vmul.f32 %v2522, %v2549
        %v2554 = vmul.f32 %v2525, %v2549
        %v2555 = vmul.f32 %v2530, %v2549
        %v2556 = vmul.f32 %v2533, %v2549
        %v2557 = vmul.f32 %v2538, %v2549
        %v2558 = vmul.f32 %v2541, %v2549
        %v2559 = vld [vmem:[#allocation15] sm:$0x1]
        %v2561 = vlaneseq
        %v2562 = vshrl.u32 %v2561, 7
        %v2563 = vsub.s32 0, %v2562
        %v2564 = vrot.slane %v2559, %v2563
        %v2566 = vadd.f32 %v2551, %v2564
        %v2567 = vadd.f32 %v2552, %v2564
        %v2568 = vadd.f32 %v2553, %v2564
        %v2569 = vadd.f32 %v2554, %v2564
        %v2570 = vadd.f32 %v2555, %v2564
        %v2571 = vadd.f32 %v2556, %v2564
        %v2572 = vadd.f32 %v2557, %v2564
        %v2573 = vadd.f32 %v2558, %v2564
        %v2574 = vmax.f32 %v2566, 0.0
        %v2575 = vmax.f32 %v2567, 0.0
        %v2576 = vmax.f32 %v2568, 0.0
        %v2577 = vmax.f32 %v2569, 0.0
        %v2578 = vmax.f32 %v2570, 0.0
        %v2579 = vmax.f32 %v2571, 0.0
        %v2580 = vmax.f32 %v2572, 0.0
        %v2581 = vmax.f32 %v2573, 0.0
        %v2590 = vcombine.high %v2574, %v2574
        %v2592 = vunpack.c.l.s4 1983009808
        %v2593 = vunpack.c.0.s8 %v2592
        %v2594 = vlaneseq
        %v2595 = vshrl.u32 %v2594, 7
        %v2596 = vsub.s32 %v2593, %v2595
        %v2597 = vrot.slane %v2574, %v2596
        %v2599 = vunpack.c.l.s4 1983009808
        %v2600 = vunpack.c.0.s8 %v2599
        %v2601 = vlaneseq
        %v2602 = vshrl.u32 %v2601, 7
        %v2603 = vsub.s32 %v2600, %v2602
        %v2604 = vrot.slane %v2590, %v2603
        %v2605 = vcombine.high %v2597, %v2597
        %v2606 = vcombine.high %v2604, %v2604
        %v2607 = vcombine.high %v2575, %v2575
        %v2609 = vunpack.c.l.s4 1983009808
        %v2610 = vunpack.c.0.s8 %v2609
        %v2611 = vlaneseq
        %v2612 = vshrl.u32 %v2611, 7
        %v2613 = vsub.s32 %v2610, %v2612
        %v2614 = vrot.slane %v2575, %v2613
        %v2616 = vunpack.c.l.s4 1983009808
        %v2617 = vunpack.c.0.s8 %v2616
        %v2618 = vlaneseq
        %v2619 = vshrl.u32 %v2618, 7
        %v2620 = vsub.s32 %v2617, %v2619
        %v2621 = vrot.slane %v2607, %v2620
        %v2622 = vcombine.high %v2614, %v2614
        %v2623 = vcombine.high %v2621, %v2621
        %v2624 = vcombine.high %v2576, %v2576
        %v2626 = vunpack.c.l.s4 1983009808
        %v2627 = vunpack.c.0.s8 %v2626
        %v2628 = vlaneseq
        %v2629 = vshrl.u32 %v2628, 7
        %v2630 = vsub.s32 %v2627, %v2629
        %v2631 = vrot.slane %v2576, %v2630
        %v2633 = vunpack.c.l.s4 1983009808
        %v2634 = vunpack.c.0.s8 %v2633
        %v2635 = vlaneseq
        %v2636 = vshrl.u32 %v2635, 7
        %v2637 = vsub.s32 %v2634, %v2636
        %v2638 = vrot.slane %v2624, %v2637
        %v2639 = vcombine.high %v2631, %v2631
        %v2640 = vcombine.high %v2638, %v2638
        %v2641 = vcombine.high %v2577, %v2577
        %v2643 = vunpack.c.l.s4 1983009808
        %v2644 = vunpack.c.0.s8 %v2643
        %v2645 = vlaneseq
        %v2646 = vshrl.u32 %v2645, 7
        %v2647 = vsub.s32 %v2644, %v2646
        %v2648 = vrot.slane %v2577, %v2647
        %v2650 = vunpack.c.l.s4 1983009808
        %v2651 = vunpack.c.0.s8 %v2650
        %v2652 = vlaneseq
        %v2653 = vshrl.u32 %v2652, 7
        %v2654 = vsub.s32 %v2651, %v2653
        %v2655 = vrot.slane %v2641, %v2654
        %v2656 = vcombine.high %v2648, %v2648
        %v2657 = vcombine.high %v2655, %v2655
        %v2658 = vcombine.high %v2578, %v2578
        %v2660 = vunpack.c.l.s4 1983009808
        %v2661 = vunpack.c.0.s8 %v2660
        %v2662 = vlaneseq
        %v2663 = vshrl.u32 %v2662, 7
        %v2664 = vsub.s32 %v2661, %v2663
        %v2665 = vrot.slane %v2578, %v2664
        %v2667 = vunpack.c.l.s4 1983009808
        %v2668 = vunpack.c.0.s8 %v2667
        %v2669 = vlaneseq
        %v2670 = vshrl.u32 %v2669, 7
        %v2671 = vsub.s32 %v2668, %v2670
        %v2672 = vrot.slane %v2658, %v2671
        %v2673 = vcombine.high %v2665, %v2665
        %v2674 = vcombine.high %v2672, %v2672
        %v2675 = vcombine.high %v2579, %v2579
        %v2677 = vunpack.c.l.s4 1983009808
        %v2678 = vunpack.c.0.s8 %v2677
        %v2679 = vlaneseq
        %v2680 = vshrl.u32 %v2679, 7
        %v2681 = vsub.s32 %v2678, %v2680
        %v2682 = vrot.slane %v2579, %v2681
        %v2684 = vunpack.c.l.s4 1983009808
        %v2685 = vunpack.c.0.s8 %v2684
        %v2686 = vlaneseq
        %v2687 = vshrl.u32 %v2686, 7
        %v2688 = vsub.s32 %v2685, %v2687
        %v2689 = vrot.slane %v2675, %v2688
        %v2690 = vcombine.high %v2682, %v2682
        %v2691 = vcombine.high %v2689, %v2689
        %v2692 = vcombine.high %v2580, %v2580
        %v2694 = vunpack.c.l.s4 1983009808
        %v2695 = vunpack.c.0.s8 %v2694
        %v2696 = vlaneseq
        %v2697 = vshrl.u32 %v2696, 7
        %v2698 = vsub.s32 %v2695, %v2697
        %v2699 = vrot.slane %v2580, %v2698
        %v2701 = vunpack.c.l.s4 1983009808
        %v2702 = vunpack.c.0.s8 %v2701
        %v2703 = vlaneseq
        %v2704 = vshrl.u32 %v2703, 7
        %v2705 = vsub.s32 %v2702, %v2704
        %v2706 = vrot.slane %v2692, %v2705
        %v2707 = vcombine.high %v2699, %v2699
        %v2708 = vcombine.high %v2706, %v2706
        %v2709 = vcombine.high %v2581, %v2581
        %v2711 = vunpack.c.l.s4 1983009808
        %v2712 = vunpack.c.0.s8 %v2711
        %v2713 = vlaneseq
        %v2714 = vshrl.u32 %v2713, 7
        %v2715 = vsub.s32 %v2712, %v2714
        %v2716 = vrot.slane %v2581, %v2715
        %v2718 = vunpack.c.l.s4 1983009808
        %v2719 = vunpack.c.0.s8 %v2718
        %v2720 = vlaneseq
        %v2721 = vshrl.u32 %v2720, 7
        %v2722 = vsub.s32 %v2719, %v2721
        %v2723 = vrot.slane %v2709, %v2722
        %v2724 = vcombine.high %v2716, %v2716
        %v2725 = vcombine.high %v2723, %v2723
        %vm2758 = vcmask 123904
        %v2759 = vsel %vm2758, %v2597, -inf
        %v2760 = vrot.slane %v2759, 4
        %v2761 = vmax.f32 %v2759, %v2760
        %v2762 = vrot.slane %v2761, 2
        %v2763 = vmax.f32 %v2761, %v2762
        %v2764 = vrot.slane %v2763, 1
        %v2765 = vmax.f32 %v2763, %v2764
        %v2766 = vsel %vm2758, %v2605, -inf
        %v2767 = vrot.slane %v2766, 4
        %v2768 = vmax.f32 %v2766, %v2767
        %v2769 = vrot.slane %v2768, 2
        %v2770 = vmax.f32 %v2768, %v2769
        %v2771 = vrot.slane %v2770, 1
        %v2772 = vmax.f32 %v2770, %v2771
        %v2773 = vsel %vm2758, %v2604, -inf
        %v2774 = vrot.slane %v2773, 4
        %v2775 = vmax.f32 %v2773, %v2774
        %v2776 = vrot.slane %v2775, 2
        %v2777 = vmax.f32 %v2775, %v2776
        %v2778 = vrot.slane %v2777, 1
        %v2779 = vmax.f32 %v2777, %v2778
        %v2780 = vsel %vm2758, %v2606, -inf
        %v2781 = vrot.slane %v2780, 4
        %v2782 = vmax.f32 %v2780, %v2781
        %v2783 = vrot.slane %v2782, 2
        %v2784 = vmax.f32 %v2782, %v2783
        %v2785 = vrot.slane %v2784, 1
        %v2786 = vmax.f32 %v2784, %v2785
        %v2787 = vsel %vm2758, %v2614, -inf
        %v2788 = vrot.slane %v2787, 4
        %v2789 = vmax.f32 %v2787, %v2788
        %v2790 = vrot.slane %v2789, 2
        %v2791 = vmax.f32 %v2789, %v2790
        %v2792 = vrot.slane %v2791, 1
        %v2793 = vmax.f32 %v2791, %v2792
        %v2794 = vsel %vm2758, %v2622, -inf
        %v2795 = vrot.slane %v2794, 4
        %v2796 = vmax.f32 %v2794, %v2795
        %v2797 = vrot.slane %v2796, 2
        %v2798 = vmax.f32 %v2796, %v2797
        %v2799 = vrot.slane %v2798, 1
        %v2800 = vmax.f32 %v2798, %v2799
        %v2801 = vsel %vm2758, %v2621, -inf
        %v2802 = vrot.slane %v2801, 4
        %v2803 = vmax.f32 %v2801, %v2802
        %v2804 = vrot.slane %v2803, 2
        %v2805 = vmax.f32 %v2803, %v2804
        %v2806 = vrot.slane %v2805, 1
        %v2807 = vmax.f32 %v2805, %v2806
        %v2808 = vsel %vm2758, %v2623, -inf
        %v2809 = vrot.slane %v2808, 4
        %v2810 = vmax.f32 %v2808, %v2809
        %v2811 = vrot.slane %v2810, 2
        %v2812 = vmax.f32 %v2810, %v2811
        %v2813 = vrot.slane %v2812, 1
        %v2814 = vmax.f32 %v2812, %v2813
        %v2815 = vsel %vm2758, %v2631, -inf
        %v2816 = vrot.slane %v2815, 4
        %v2817 = vmax.f32 %v2815, %v2816
        %v2818 = vrot.slane %v2817, 2
        %v2819 = vmax.f32 %v2817, %v2818
        %v2820 = vrot.slane %v2819, 1
        %v2821 = vmax.f32 %v2819, %v2820
        %v2822 = vsel %vm2758, %v2639, -inf
        %v2823 = vrot.slane %v2822, 4
        %v2824 = vmax.f32 %v2822, %v2823
        %v2825 = vrot.slane %v2824, 2
        %v2826 = vmax.f32 %v2824, %v2825
        %v2827 = vrot.slane %v2826, 1
        %v2828 = vmax.f32 %v2826, %v2827
        %v2829 = vsel %vm2758, %v2638, -inf
        %v2830 = vrot.slane %v2829, 4
        %v2831 = vmax.f32 %v2829, %v2830
        %v2832 = vrot.slane %v2831, 2
        %v2833 = vmax.f32 %v2831, %v2832
        %v2834 = vrot.slane %v2833, 1
        %v2835 = vmax.f32 %v2833, %v2834
        %v2836 = vsel %vm2758, %v2640, -inf
        %v2837 = vrot.slane %v2836, 4
        %v2838 = vmax.f32 %v2836, %v2837
        %v2839 = vrot.slane %v2838, 2
        %v2840 = vmax.f32 %v2838, %v2839
        %v2841 = vrot.slane %v2840, 1
        %v2842 = vmax.f32 %v2840, %v2841
        %v2843 = vsel %vm2758, %v2648, -inf
        %v2844 = vrot.slane %v2843, 4
        %v2845 = vmax.f32 %v2843, %v2844
        %v2846 = vrot.slane %v2845, 2
        %v2847 = vmax.f32 %v2845, %v2846
        %v2848 = vrot.slane %v2847, 1
        %v2849 = vmax.f32 %v2847, %v2848
        %v2850 = vsel %vm2758, %v2656, -inf
        %v2851 = vrot.slane %v2850, 4
        %v2852 = vmax.f32 %v2850, %v2851
        %v2853 = vrot.slane %v2852, 2
        %v2854 = vmax.f32 %v2852, %v2853
        %v2855 = vrot.slane %v2854, 1
        %v2856 = vmax.f32 %v2854, %v2855
        %v2857 = vsel %vm2758, %v2655, -inf
        %v2858 = vrot.slane %v2857, 4
        %v2859 = vmax.f32 %v2857, %v2858
        %v2860 = vrot.slane %v2859, 2
        %v2861 = vmax.f32 %v2859, %v2860
        %v2862 = vrot.slane %v2861, 1
        %v2863 = vmax.f32 %v2861, %v2862
        %v2864 = vsel %vm2758, %v2657, -inf
        %v2865 = vrot.slane %v2864, 4
        %v2866 = vmax.f32 %v2864, %v2865
        %v2867 = vrot.slane %v2866, 2
        %v2868 = vmax.f32 %v2866, %v2867
        %v2869 = vrot.slane %v2868, 1
        %v2870 = vmax.f32 %v2868, %v2869
        %v2871 = vsel %vm2758, %v2665, -inf
        %v2872 = vrot.slane %v2871, 4
        %v2873 = vmax.f32 %v2871, %v2872
        %v2874 = vrot.slane %v2873, 2
        %v2875 = vmax.f32 %v2873, %v2874
        %v2876 = vrot.slane %v2875, 1
        %v2877 = vmax.f32 %v2875, %v2876
        %v2878 = vsel %vm2758, %v2673, -inf
        %v2879 = vrot.slane %v2878, 4
        %v2880 = vmax.f32 %v2878, %v2879
        %v2881 = vrot.slane %v2880, 2
        %v2882 = vmax.f32 %v2880, %v2881
        %v2883 = vrot.slane %v2882, 1
        %v2884 = vmax.f32 %v2882, %v2883
        %v2885 = vsel %vm2758, %v2672, -inf
        %v2886 = vrot.slane %v2885, 4
        %v2887 = vmax.f32 %v2885, %v2886
        %v2888 = vrot.slane %v2887, 2
        %v2889 = vmax.f32 %v2887, %v2888
        %v2890 = vrot.slane %v2889, 1
        %v2891 = vmax.f32 %v2889, %v2890
        %v2892 = vsel %vm2758, %v2674, -inf
        %v2893 = vrot.slane %v2892, 4
        %v2894 = vmax.f32 %v2892, %v2893
        %v2895 = vrot.slane %v2894, 2
        %v2896 = vmax.f32 %v2894, %v2895
        %v2897 = vrot.slane %v2896, 1
        %v2898 = vmax.f32 %v2896, %v2897
        %v2899 = vsel %vm2758, %v2682, -inf
        %v2900 = vrot.slane %v2899, 4
        %v2901 = vmax.f32 %v2899, %v2900
        %v2902 = vrot.slane %v2901, 2
        %v2903 = vmax.f32 %v2901, %v2902
        %v2904 = vrot.slane %v2903, 1
        %v2905 = vmax.f32 %v2903, %v2904
        %v2906 = vsel %vm2758, %v2690, -inf
        %v2907 = vrot.slane %v2906, 4
        %v2908 = vmax.f32 %v2906, %v2907
        %v2909 = vrot.slane %v2908, 2
        %v2910 = vmax.f32 %v2908, %v2909
        %v2911 = vrot.slane %v2910, 1
        %v2912 = vmax.f32 %v2910, %v2911
        %v2913 = vsel %vm2758, %v2689, -inf
        %v2914 = vrot.slane %v2913, 4
        %v2915 = vmax.f32 %v2913, %v2914
        %v2916 = vrot.slane %v2915, 2
        %v2917 = vmax.f32 %v2915, %v2916
        %v2918 = vrot.slane %v2917, 1
        %v2919 = vmax.f32 %v2917, %v2918
        %v2920 = vsel %vm2758, %v2691, -inf
        %v2921 = vrot.slane %v2920, 4
        %v2922 = vmax.f32 %v2920, %v2921
        %v2923 = vrot.slane %v2922, 2
        %v2924 = vmax.f32 %v2922, %v2923
        %v2925 = vrot.slane %v2924, 1
        %v2926 = vmax.f32 %v2924, %v2925
        %v2927 = vsel %vm2758, %v2699, -inf
        %v2928 = vrot.slane %v2927, 4
        %v2929 = vmax.f32 %v2927, %v2928
        %v2930 = vrot.slane %v2929, 2
        %v2931 = vmax.f32 %v2929, %v2930
        %v2932 = vrot.slane %v2931, 1
        %v2933 = vmax.f32 %v2931, %v2932
        %v2934 = vsel %vm2758, %v2707, -inf
        %v2935 = vrot.slane %v2934, 4
        %v2936 = vmax.f32 %v2934, %v2935
        %v2937 = vrot.slane %v2936, 2
        %v2938 = vmax.f32 %v2936, %v2937
        %v2939 = vrot.slane %v2938, 1
        %v2940 = vmax.f32 %v2938, %v2939
        %v2941 = vsel %vm2758, %v2706, -inf
        %v2942 = vrot.slane %v2941, 4
        %v2943 = vmax.f32 %v2941, %v2942
        %v2944 = vrot.slane %v2943, 2
        %v2945 = vmax.f32 %v2943, %v2944
        %v2946 = vrot.slane %v2945, 1
        %v2947 = vmax.f32 %v2945, %v2946
        %v2948 = vsel %vm2758, %v2708, -inf
        %v2949 = vrot.slane %v2948, 4
        %v2950 = vmax.f32 %v2948, %v2949
        %v2951 = vrot.slane %v2950, 2
        %v2952 = vmax.f32 %v2950, %v2951
        %v2953 = vrot.slane %v2952, 1
        %v2954 = vmax.f32 %v2952, %v2953
        %v2955 = vsel %vm2758, %v2716, -inf
        %v2956 = vrot.slane %v2955, 4
        %v2957 = vmax.f32 %v2955, %v2956
        %v2958 = vrot.slane %v2957, 2
        %v2959 = vmax.f32 %v2957, %v2958
        %v2960 = vrot.slane %v2959, 1
        %v2961 = vmax.f32 %v2959, %v2960
        %v2962 = vsel %vm2758, %v2724, -inf
        %v2963 = vrot.slane %v2962, 4
        %v2964 = vmax.f32 %v2962, %v2963
        %v2965 = vrot.slane %v2964, 2
        %v2966 = vmax.f32 %v2964, %v2965
        %v2967 = vrot.slane %v2966, 1
        %v2968 = vmax.f32 %v2966, %v2967
        %v2969 = vsel %vm2758, %v2723, -inf
        %v2970 = vrot.slane %v2969, 4
        %v2971 = vmax.f32 %v2969, %v2970
        %v2972 = vrot.slane %v2971, 2
        %v2973 = vmax.f32 %v2971, %v2972
        %v2974 = vrot.slane %v2973, 1
        %v2975 = vmax.f32 %v2973, %v2974
        %v2976 = vsel %vm2758, %v2725, -inf
        %v2977 = vrot.slane %v2976, 4
        %v2978 = vmax.f32 %v2976, %v2977
        %v2979 = vrot.slane %v2978, 2
        %v2980 = vmax.f32 %v2978, %v2979
        %v2981 = vrot.slane %v2980, 1
        %v2982 = vmax.f32 %v2980, %v2981
        %vm2983 = vcmask 130048
        %2984 = vst.msk [vmem:[#allocation4] sm:$0xff] %vm2983, 0.0
        %2985 = vst.msk [vmem:[#allocation4 + $0x8] sm:$0xff] %vm2983, 0.0
        %2986 = vst.msk [vmem:[#allocation4 + $0x10] sm:$0xff] %vm2983, 0.0
        %2987 = vst.msk [vmem:[#allocation4 + $0x18] sm:$0xff] %vm2983, 0.0
        %2988 = vst.msk [vmem:[#allocation4 + $0x20] sm:$0x3] %vm2758, 0.0
        %v3021 = vsel %vm2230, %v2772, %v2765
        %v3022 = vsel %vm2232, %v2779, %v3021
        %v3023 = vsel %vm2234, %v2786, %v3022
        %v3024 = vsel %vm2236, %v2793, %v3023
        %v3025 = vsel %vm2238, %v2800, %v3024
        %v3026 = vsel %vm2240, %v2807, %v3025
        %v3027 = vsel %vm2242, %v2814, %v3026
        %v3028 = vsel %vm2230, %v2828, %v2821
        %v3029 = vsel %vm2232, %v2835, %v3028
        %v3030 = vsel %vm2234, %v2842, %v3029
        %v3031 = vsel %vm2236, %v2849, %v3030
        %v3032 = vsel %vm2238, %v2856, %v3031
        %v3033 = vsel %vm2240, %v2863, %v3032
        %v3034 = vsel %vm2242, %v2870, %v3033
        %v3035 = vsel %vm2230, %v2884, %v2877
        %v3036 = vsel %vm2232, %v2891, %v3035
        %v3037 = vsel %vm2234, %v2898, %v3036
        %v3038 = vsel %vm2236, %v2905, %v3037
        %v3039 = vsel %vm2238, %v2912, %v3038
        %v3040 = vsel %vm2240, %v2919, %v3039
        %v3041 = vsel %vm2242, %v2926, %v3040
        %v3042 = vsel %vm2230, %v2940, %v2933
        %v3043 = vsel %vm2232, %v2947, %v3042
        %v3044 = vsel %vm2234, %v2954, %v3043
        %v3045 = vsel %vm2236, %v2961, %v3044
        %v3046 = vsel %vm2238, %v2968, %v3045
        %v3047 = vsel %vm2240, %v2975, %v3046
        %v3048 = vsel %vm2242, %v2982, %v3047
        %3053 = vst.msk [vmem:[#allocation4 + $0x1] sm:$0xff] %vm2983, %v3027
        %3054 = vst.msk [vmem:[#allocation4 + $0x9] sm:$0xff] %vm2983, %v3034
        %3055 = vst.msk [vmem:[#allocation4 + $0x11] sm:$0xff] %vm2983, %v3041
        %3056 = vst.msk [vmem:[#allocation4 + $0x19] sm:$0xff] %vm2983, %v3048
        %v3057 = vld [vmem:[#allocation4] sm:$0xff]
        %v3058 = vld [vmem:[#allocation4 + $0x8] sm:$0xff]
        %v3059 = vld [vmem:[#allocation4 + $0x10] sm:$0xff]
        %v3060 = vld [vmem:[#allocation4 + $0x18] sm:$0xff]
        %v3061 = vld [vmem:[#allocation4 + $0x1] sm:$0xff]
        %v3062 = vld [vmem:[#allocation4 + $0x9] sm:$0xff]
        %v3063 = vld [vmem:[#allocation4 + $0x11] sm:$0xff]
        %v3064 = vld [vmem:[#allocation4 + $0x19] sm:$0xff]
        %v3065 = vld [vmem:[#allocation4 + $0x2] sm:$0xff]
        %v3066 = vld [vmem:[#allocation4 + $0xa] sm:$0xff]
        %v3067 = vld [vmem:[#allocation4 + $0x12] sm:$0xff]
        %v3068 = vld [vmem:[#allocation4 + $0x1a] sm:$0xff]
        %3073 = vrot.lane.b32.xlu0 %v3061, 16
        %v3074 = vpop.permute.xlu0 %3073
        %3075 = vrot.lane.b32.xlu0 %v3062, 16
        %v3076 = vpop.permute.xlu0 %3075
        %3077 = vrot.lane.b32.xlu0 %v3063, 16
        %v3078 = vpop.permute.xlu0 %3077
        %3079 = vrot.lane.b32.xlu0 %v3064, 16
        %v3080 = vpop.permute.xlu0 %3079
        %3089 = vrot.lane.b32.xlu0 %v3065, 32
        %v3090 = vpop.permute.xlu0 %3089
        %3091 = vrot.lane.b32.xlu0 %v3066, 32
        %v3092 = vpop.permute.xlu0 %3091
        %3093 = vrot.lane.b32.xlu0 %v3067, 32
        %v3094 = vpop.permute.xlu0 %3093
        %3095 = vrot.lane.b32.xlu0 %v3068, 32
        %v3096 = vpop.permute.xlu0 %3095
        %v3101 = vsel %vm2983, %v3057, %v3074
        %v3102 = vsel %vm2983, %v3058, %v3076
        %v3103 = vsel %vm2983, %v3059, %v3078
        %v3104 = vsel %vm2983, %v3060, %v3080
        %v3105 = vsel %vm2156, %v3101, %v3090
        %v3106 = vsel %vm2156, %v3102, %v3092
        %v3107 = vsel %vm2156, %v3103, %v3094
        %v3108 = vsel %vm2156, %v3104, %v3096
        %v3109 = vpack.c.bf16 %v3106, %v3105
        %v3110 = vpack.c.bf16 %v3108, %v3107
        %v3111 = vld [vmem:[#allocation17] sm:$0xf]
        %v3112 = vld [vmem:[#allocation17 + $0x4] sm:$0xf]
        %v3113 = vld [vmem:[#allocation17 + $0x8] sm:$0xf]
        %v3114 = vld [vmem:[#allocation17 + $0xc] sm:$0xf]
        %v3115 = vld [vmem:[#allocation17 + $0x10] sm:$0xf]
        %v3116 = vld [vmem:[#allocation17 + $0x14] sm:$0xf]
        %v3123 = vunpack.c.l.b16 %v3111
        %v3124 = vunpack.c.l.b16 %v3112
        %v3125 = vunpack.c.l.b16 %v3113
        %v3126 = vunpack.c.l.b16 %v3114
        %v3127 = vunpack.c.l.b16 %v3115
        %v3128 = vunpack.c.l.b16 %v3116
        %v3129 = vpack.c.b16 %v3124, %v3123
        %v3130 = vpack.c.b16 %v3126, %v3125
        %v3131 = vpack.c.b16 %v3128, %v3127
        %vm3135 = vcmask 392192
        %v3137 = vsel %vm3135, %v3109, 0
        %v3140 = vsel %vm3135, %v3110, 0
        %3142 = vmatprep.subr.bf16.mxu0 0
        %3143 = vmatpush1.bf16.msra.mxu0 0
        %3144 = vmatprep.subr.bf16.mxu0 0
        %3145 = vmatpush1.bf16.msra.mxu0 0
        %3146 = vmatprep.subr.bf16.mxu0 0
        %3147 = vmatpush1.bf16.msra.mxu0 0
        %3148 = vmatprep.subr.bf16.mxu0 0
        %3149 = vmatpush1.bf16.msra.mxu0 0
        %3150 = vmatprep.subr.bf16.mxu0 0
        %3151 = vmatpush1.bf16.msra.mxu0 0
        %3152 = vmatprep.subr.bf16.mxu0 0
        %3153 = vmatpush1.bf16.msra.mxu0 %v3131
        %3154 = vmatprep.subr.bf16.mxu0 0
        %3155 = vmatpush1.bf16.msra.mxu0 %v3130
        %3156 = vmatprep.subr.bf16.mxu0 0
        %3157 = vmatpush1.bf16.msra.mxu0 %v3129
        %3158 = vmatprep.subr.bf16.mxu0 0
        %3159 = vmatpush2.bf16.msra.mxu0 0
        %3160 = vmatprep.subr.bf16.mxu0 0
        %3161 = vmatpush2.bf16.msra.mxu0 0
        %3162 = vmatprep.subr.bf16.mxu0 0
        %3163 = vmatpush2.bf16.msra.mxu0 0
        %3164 = vmatprep.subr.bf16.mxu0 0
        %3165 = vmatpush2.bf16.msra.mxu0 0
        %3166 = vmatprep.subr.bf16.mxu0 0
        %3167 = vmatpush2.bf16.msra.mxu0 0
        %3168 = vmatprep.subr.bf16.mxu0 0
        %3169 = vmatpush2.bf16.msra.mxu0 0
        %3170 = vmatprep.subr.bf16.mxu0 0
        %3171 = vmatpush2.bf16.msra.mxu0 0
        %3172 = vmatprep.subr.bf16.mxu0 0
        %3173 = vmatpush2.bf16.msra.mxu0 0
        %3174 = vmatprep.mubr.bf16.mxu0 0
        %3175 = vmatmul.mubr.bf16.gmra.mxu0 %v3137
        %v3176 = vpop.f32.mrf.mxu0
        %v3177 = vadd.f32 0.0, %v3176
        %v3178 = vpop.f32.mrf.mxu0
        %v3179 = vpop.f32.mrf.mxu0
        %v3180 = vadd.f32 0.0, %v3179
        %v3181 = vpop.f32.mrf.mxu0
        %3182 = vmatprep.mubr.bf16.mxu0 0
        %3183 = vmatmul.mubr.bf16.gmra.mxu0 %v3140
        %v3184 = vpop.f32.mrf.mxu0
        %v3185 = vadd.f32 0.0, %v3184
        %v3186 = vpop.f32.mrf.mxu0
        %v3187 = vpop.f32.mrf.mxu0
        %v3188 = vadd.f32 0.0, %v3187
        %v3189 = vpop.f32.mrf.mxu0
        %3190 = vdwg.mxu0
        %v3191 = vld [vmem:[%s8] sm:$0x1]
        %v3193 = vlaneseq
        %v3194 = vshrl.u32 %v3193, 7
        %v3195 = vsub.s32 0, %v3194
        %v3196 = vrot.slane %v3191, %v3195
        %v3198 = vmul.f32 %v3177, %v3196
        %v3199 = vmul.f32 %v3180, %v3196
        %v3200 = vmul.f32 %v3185, %v3196
        %v3201 = vmul.f32 %v3188, %v3196
        %v3202 = vld [vmem:[#allocation18] sm:$0x1]
        %v3204 = vlaneseq
        %v3205 = vshrl.u32 %v3204, 7
        %v3206 = vsub.s32 0, %v3205
        %v3207 = vrot.slane %v3202, %v3206
        %v3209 = vadd.f32 %v3198, %v3207
        %v3210 = vadd.f32 %v3199, %v3207
        %v3211 = vadd.f32 %v3200, %v3207
        %v3212 = vadd.f32 %v3201, %v3207
        %v3213 = vmax.f32 %v3209, 0.0
        %v3214 = vmax.f32 %v3210, 0.0
        %v3215 = vmax.f32 %v3211, 0.0
        %v3216 = vmax.f32 %v3212, 0.0
        %v3221 = vcombine.high %v3213, %v3213
        %v3223 = vunpack.c.l.s4 1983009808
        %v3224 = vunpack.c.0.s8 %v3223
        %v3225 = vlaneseq
        %v3226 = vshrl.u32 %v3225, 7
        %v3227 = vsub.s32 %v3224, %v3226
        %v3228 = vrot.slane %v3213, %v3227
        %v3230 = vunpack.c.l.s4 1983009808
        %v3231 = vunpack.c.0.s8 %v3230
        %v3232 = vlaneseq
        %v3233 = vshrl.u32 %v3232, 7
        %v3234 = vsub.s32 %v3231, %v3233
        %v3235 = vrot.slane %v3221, %v3234
        %v3236 = vcombine.high %v3228, %v3228
        %v3237 = vcombine.high %v3235, %v3235
        %v3238 = vcombine.high %v3214, %v3214
        %v3240 = vunpack.c.l.s4 1983009808
        %v3241 = vunpack.c.0.s8 %v3240
        %v3242 = vlaneseq
        %v3243 = vshrl.u32 %v3242, 7
        %v3244 = vsub.s32 %v3241, %v3243
        %v3245 = vrot.slane %v3214, %v3244
        %v3247 = vunpack.c.l.s4 1983009808
        %v3248 = vunpack.c.0.s8 %v3247
        %v3249 = vlaneseq
        %v3250 = vshrl.u32 %v3249, 7
        %v3251 = vsub.s32 %v3248, %v3250
        %v3252 = vrot.slane %v3238, %v3251
        %v3253 = vcombine.high %v3245, %v3245
        %v3254 = vcombine.high %v3252, %v3252
        %v3255 = vcombine.high %v3215, %v3215
        %v3257 = vunpack.c.l.s4 1983009808
        %v3258 = vunpack.c.0.s8 %v3257
        %v3259 = vlaneseq
        %v3260 = vshrl.u32 %v3259, 7
        %v3261 = vsub.s32 %v3258, %v3260
        %v3262 = vrot.slane %v3215, %v3261
        %v3264 = vunpack.c.l.s4 1983009808
        %v3265 = vunpack.c.0.s8 %v3264
        %v3266 = vlaneseq
        %v3267 = vshrl.u32 %v3266, 7
        %v3268 = vsub.s32 %v3265, %v3267
        %v3269 = vrot.slane %v3255, %v3268
        %v3270 = vcombine.high %v3262, %v3262
        %v3271 = vcombine.high %v3269, %v3269
        %v3272 = vcombine.high %v3216, %v3216
        %v3274 = vunpack.c.l.s4 1983009808
        %v3275 = vunpack.c.0.s8 %v3274
        %v3276 = vlaneseq
        %v3277 = vshrl.u32 %v3276, 7
        %v3278 = vsub.s32 %v3275, %v3277
        %v3279 = vrot.slane %v3216, %v3278
        %v3281 = vunpack.c.l.s4 1983009808
        %v3282 = vunpack.c.0.s8 %v3281
        %v3283 = vlaneseq
        %v3284 = vshrl.u32 %v3283, 7
        %v3285 = vsub.s32 %v3282, %v3284
        %v3286 = vrot.slane %v3272, %v3285
        %v3287 = vcombine.high %v3279, %v3279
        %v3288 = vcombine.high %v3286, %v3286
        %vm3305 = vcmask 58368
        %v3306 = vsel %vm3305, %v3228, -inf
        %v3307 = vrot.slane %v3306, 4
        %v3308 = vmax.f32 %v3306, %v3307
        %v3309 = vrot.slane %v3308, 2
        %v3310 = vmax.f32 %v3308, %v3309
        %v3311 = vrot.slane %v3310, 1
        %v3312 = vmax.f32 %v3310, %v3311
        %v3313 = vsel %vm3305, %v3236, -inf
        %v3314 = vrot.slane %v3313, 4
        %v3315 = vmax.f32 %v3313, %v3314
        %v3316 = vrot.slane %v3315, 2
        %v3317 = vmax.f32 %v3315, %v3316
        %v3318 = vrot.slane %v3317, 1
        %v3319 = vmax.f32 %v3317, %v3318
        %v3320 = vsel %vm3305, %v3235, -inf
        %v3321 = vrot.slane %v3320, 4
        %v3322 = vmax.f32 %v3320, %v3321
        %v3323 = vrot.slane %v3322, 2
        %v3324 = vmax.f32 %v3322, %v3323
        %v3325 = vrot.slane %v3324, 1
        %v3326 = vmax.f32 %v3324, %v3325
        %v3327 = vsel %vm3305, %v3237, -inf
        %v3328 = vrot.slane %v3327, 4
        %v3329 = vmax.f32 %v3327, %v3328
        %v3330 = vrot.slane %v3329, 2
        %v3331 = vmax.f32 %v3329, %v3330
        %v3332 = vrot.slane %v3331, 1
        %v3333 = vmax.f32 %v3331, %v3332
        %v3334 = vsel %vm3305, %v3245, -inf
        %v3335 = vrot.slane %v3334, 4
        %v3336 = vmax.f32 %v3334, %v3335
        %v3337 = vrot.slane %v3336, 2
        %v3338 = vmax.f32 %v3336, %v3337
        %v3339 = vrot.slane %v3338, 1
        %v3340 = vmax.f32 %v3338, %v3339
        %v3341 = vsel %vm3305, %v3253, -inf
        %v3342 = vrot.slane %v3341, 4
        %v3343 = vmax.f32 %v3341, %v3342
        %v3344 = vrot.slane %v3343, 2
        %v3345 = vmax.f32 %v3343, %v3344
        %v3346 = vrot.slane %v3345, 1
        %v3347 = vmax.f32 %v3345, %v3346
        %v3348 = vsel %vm3305, %v3252, -inf
        %v3349 = vrot.slane %v3348, 4
        %v3350 = vmax.f32 %v3348, %v3349
        %v3351 = vrot.slane %v3350, 2
        %v3352 = vmax.f32 %v3350, %v3351
        %v3353 = vrot.slane %v3352, 1
        %v3354 = vmax.f32 %v3352, %v3353
        %v3355 = vsel %vm3305, %v3254, -inf
        %v3356 = vrot.slane %v3355, 4
        %v3357 = vmax.f32 %v3355, %v3356
        %v3358 = vrot.slane %v3357, 2
        %v3359 = vmax.f32 %v3357, %v3358
        %v3360 = vrot.slane %v3359, 1
        %v3361 = vmax.f32 %v3359, %v3360
        %v3362 = vsel %vm3305, %v3262, -inf
        %v3363 = vrot.slane %v3362, 4
        %v3364 = vmax.f32 %v3362, %v3363
        %v3365 = vrot.slane %v3364, 2
        %v3366 = vmax.f32 %v3364, %v3365
        %v3367 = vrot.slane %v3366, 1
        %v3368 = vmax.f32 %v3366, %v3367
        %v3369 = vsel %vm3305, %v3270, -inf
        %v3370 = vrot.slane %v3369, 4
        %v3371 = vmax.f32 %v3369, %v3370
        %v3372 = vrot.slane %v3371, 2
        %v3373 = vmax.f32 %v3371, %v3372
        %v3374 = vrot.slane %v3373, 1
        %v3375 = vmax.f32 %v3373, %v3374
        %v3376 = vsel %vm3305, %v3269, -inf
        %v3377 = vrot.slane %v3376, 4
        %v3378 = vmax.f32 %v3376, %v3377
        %v3379 = vrot.slane %v3378, 2
        %v3380 = vmax.f32 %v3378, %v3379
        %v3381 = vrot.slane %v3380, 1
        %v3382 = vmax.f32 %v3380, %v3381
        %v3383 = vsel %vm3305, %v3271, -inf
        %v3384 = vrot.slane %v3383, 4
        %v3385 = vmax.f32 %v3383, %v3384
        %v3386 = vrot.slane %v3385, 2
        %v3387 = vmax.f32 %v3385, %v3386
        %v3388 = vrot.slane %v3387, 1
        %v3389 = vmax.f32 %v3387, %v3388
        %v3390 = vsel %vm3305, %v3279, -inf
        %v3391 = vrot.slane %v3390, 4
        %v3392 = vmax.f32 %v3390, %v3391
        %v3393 = vrot.slane %v3392, 2
        %v3394 = vmax.f32 %v3392, %v3393
        %v3395 = vrot.slane %v3394, 1
        %v3396 = vmax.f32 %v3394, %v3395
        %v3397 = vsel %vm3305, %v3287, -inf
        %v3398 = vrot.slane %v3397, 4
        %v3399 = vmax.f32 %v3397, %v3398
        %v3400 = vrot.slane %v3399, 2
        %v3401 = vmax.f32 %v3399, %v3400
        %v3402 = vrot.slane %v3401, 1
        %v3403 = vmax.f32 %v3401, %v3402
        %v3404 = vsel %vm3305, %v3286, -inf
        %v3405 = vrot.slane %v3404, 4
        %v3406 = vmax.f32 %v3404, %v3405
        %v3407 = vrot.slane %v3406, 2
        %v3408 = vmax.f32 %v3406, %v3407
        %v3409 = vrot.slane %v3408, 1
        %v3410 = vmax.f32 %v3408, %v3409
        %v3411 = vsel %vm3305, %v3288, -inf
        %v3412 = vrot.slane %v3411, 4
        %v3413 = vmax.f32 %v3411, %v3412
        %v3414 = vrot.slane %v3413, 2
        %v3415 = vmax.f32 %v3413, %v3414
        %v3416 = vrot.slane %v3415, 1
        %v3417 = vmax.f32 %v3415, %v3416
        %vm3418 = vcmask 64512
        %3419 = vst.msk [vmem:[#allocation5] sm:$0xff] %vm3418, 0.0
        %3420 = vst.msk [vmem:[#allocation5 + $0x8] sm:$0xff] %vm3418, 0.0
        %vm3421 = vcmask 60416
        %3422 = vst.msk [vmem:[#allocation5 + $0x10] sm:$0xf] %vm3421, 0.0
        %v3439 = vsel %vm2230, %v3319, %v3312
        %v3440 = vsel %vm2232, %v3326, %v3439
        %v3441 = vsel %vm2234, %v3333, %v3440
        %v3442 = vsel %vm2236, %v3340, %v3441
        %v3443 = vsel %vm2238, %v3347, %v3442
        %v3444 = vsel %vm2240, %v3354, %v3443
        %v3445 = vsel %vm2242, %v3361, %v3444
        %v3446 = vsel %vm2230, %v3375, %v3368
        %v3447 = vsel %vm2232, %v3382, %v3446
        %v3448 = vsel %vm2234, %v3389, %v3447
        %v3449 = vsel %vm2236, %v3396, %v3448
        %v3450 = vsel %vm2238, %v3403, %v3449
        %v3451 = vsel %vm2240, %v3410, %v3450
        %v3452 = vsel %vm2242, %v3417, %v3451
        %3455 = vst.msk [vmem:[#allocation5 + $0x2] sm:$0xff] %vm3418, %v3445
        %3456 = vst.msk [vmem:[#allocation5 + $0xa] sm:$0xff] %vm3418, %v3452
        %v3457 = vld [vmem:[#allocation5] sm:$0xff]
        %v3458 = vld [vmem:[#allocation5 + $0x8] sm:$0xff]
        %v3459 = vld [vmem:[#allocation5 + $0x10] sm:$0x1]
        %v3460 = vld [vmem:[#allocation5 + $0x1] sm:$0xff]
        %v3461 = vld [vmem:[#allocation5 + $0x9] sm:$0xff]
        %v3462 = vld [vmem:[#allocation5 + $0x11] sm:$0x1]
        %v3463 = vld [vmem:[#allocation5 + $0x2] sm:$0xff]
        %v3464 = vld [vmem:[#allocation5 + $0xa] sm:$0xff]
        %v3465 = vld [vmem:[#allocation5 + $0x12] sm:$0x1]
        %3469 = vrot.lane.b32.xlu0 %v3460, 8
        %v3470 = vpop.permute.xlu0 %3469
        %3471 = vrot.lane.b32.xlu0 %v3461, 8
        %v3472 = vpop.permute.xlu0 %3471
        %3473 = vrot.lane.b32.xlu0 %v3462, 8
        %v3474 = vpop.permute.xlu0 %3473
        %3481 = vrot.lane.b32.xlu0 %v3463, 16
        %v3482 = vpop.permute.xlu0 %3481
        %3483 = vrot.lane.b32.xlu0 %v3464, 16
        %v3484 = vpop.permute.xlu0 %3483
        %3485 = vrot.lane.b32.xlu0 %v3465, 16
        %v3486 = vpop.permute.xlu0 %3485
        %v3490 = vsel %vm3418, %v3457, %v3470
        %v3491 = vsel %vm3418, %v3458, %v3472
        %v3492 = vsel %vm3418, %v3459, %v3474
        %v3493 = vsel %vm2983, %v3490, %v3482
        %v3494 = vsel %vm2983, %v3491, %v3484
        %v3495 = vsel %vm2983, %v3492, %v3486
        %v3496 = vld [vmem:[#allocation5 + $0x3] sm:$0xff]
        %v3497 = vld [vmem:[#allocation5 + $0xb] sm:$0xff]
        %v3498 = vld [vmem:[#allocation5 + $0x13] sm:$0x1]
        %3499 = vrot.lane.b32.xlu0 %v3463, 8
        %v3500 = vpop.permute.xlu0 %3499
        %3501 = vrot.lane.b32.xlu0 %v3464, 8
        %v3502 = vpop.permute.xlu0 %3501
        %3503 = vrot.lane.b32.xlu0 %v3465, 8
        %v3504 = vpop.permute.xlu0 %3503
        %3511 = vrot.lane.b32.xlu0 %v3496, 16
        %v3512 = vpop.permute.xlu0 %3511
        %3513 = vrot.lane.b32.xlu0 %v3497, 16
        %v3514 = vpop.permute.xlu0 %3513
        %3515 = vrot.lane.b32.xlu0 %v3498, 16
        %v3516 = vpop.permute.xlu0 %3515
        %v3520 = vsel %vm3418, %v3460, %v3500
        %v3521 = vsel %vm3418, %v3461, %v3502
        %v3522 = vsel %vm3418, %v3462, %v3504
        %v3523 = vsel %vm2983, %v3520, %v3512
        %v3524 = vsel %vm2983, %v3521, %v3514
        %v3525 = vsel %vm2983, %v3522, %v3516
        %v3526 = vpack.c.bf16 %v3494, %v3493
        %v3527 = vpack.c.bf16 %v3495, %v3495
        %v3528 = vld [vmem:[#allocation20] sm:$0xf]
        %v3529 = vld [vmem:[#allocation20 + $0x4] sm:$0xf]
        %v3530 = vld [vmem:[#allocation20 + $0x8] sm:$0xf]
        %v3534 = vunpack.c.l.b16 %v3528
        %v3535 = vunpack.c.l.b16 %v3529
        %v3536 = vunpack.c.l.b16 %v3530
        %v3537 = vpack.c.b16 %v3535, %v3534
        %v3538 = vpack.c.b16 %v3536, %v3536
        %vm3540 = vcmask 195584
        %v3542 = vsel %vm3540, %v3526, 0
        %v3545 = vsel %vm3540, %v3527, 0
        %vm3547 = vcmask 1043456
        %v3549 = vsel %vm3547, %v3538, 0
        %3551 = vmatprep.subr.bf16.mxu0 0
        %3552 = vmatpush1.bf16.msra.mxu0 0
        %3553 = vmatprep.subr.bf16.mxu0 0
        %3554 = vmatpush1.bf16.msra.mxu0 0
        %3555 = vmatprep.subr.bf16.mxu0 0
        %3556 = vmatpush1.bf16.msra.mxu0 0
        %3557 = vmatprep.subr.bf16.mxu0 0
        %3558 = vmatpush1.bf16.msra.mxu0 0
        %3559 = vmatprep.subr.bf16.mxu0 0
        %3560 = vmatpush1.bf16.msra.mxu0 0
        %3561 = vmatprep.subr.bf16.mxu0 0
        %3562 = vmatpush1.bf16.msra.mxu0 0
        %3563 = vmatprep.subr.bf16.mxu0 0
        %3564 = vmatpush1.bf16.msra.mxu0 %v3549
        %3565 = vmatprep.subr.bf16.mxu0 0
        %3566 = vmatpush1.bf16.msra.mxu0 %v3537
        %3567 = vmatprep.subr.bf16.mxu0 0
        %3568 = vmatpush2.bf16.msra.mxu0 0
        %3569 = vmatprep.subr.bf16.mxu0 0
        %3570 = vmatpush2.bf16.msra.mxu0 0
        %3571 = vmatprep.subr.bf16.mxu0 0
        %3572 = vmatpush2.bf16.msra.mxu0 0
        %3573 = vmatprep.subr.bf16.mxu0 0
        %3574 = vmatpush2.bf16.msra.mxu0 0
        %3575 = vmatprep.subr.bf16.mxu0 0
        %3576 = vmatpush2.bf16.msra.mxu0 0
        %3577 = vmatprep.subr.bf16.mxu0 0
        %3578 = vmatpush2.bf16.msra.mxu0 0
        %3579 = vmatprep.subr.bf16.mxu0 0
        %3580 = vmatpush2.bf16.msra.mxu0 0
        %3581 = vmatprep.subr.bf16.mxu0 0
        %3582 = vmatpush2.bf16.msra.mxu0 0
        %3583 = vmatprep.mubr.bf16.mxu0 0
        %3584 = vmatmul.mubr.bf16.gmra.mxu0 %v3542
        %v3585 = vpop.f32.mrf.mxu0
        %v3586 = vadd.f32 0.0, %v3585
        %v3587 = vpop.f32.mrf.mxu0
        %v3588 = vpop.f32.mrf.mxu0
        %v3589 = vadd.f32 0.0, %v3588
        %v3590 = vpop.f32.mrf.mxu0
        %3591 = vmatprep.mubr.bf16.mxu0 0
        %3592 = vmatmul.mubr.bf16.gmra.mxu0 %v3545
        %v3593 = vpop.f32.mrf.mxu0
        %v3594 = vadd.f32 0.0, %v3593
        %v3595 = vpop.f32.mrf.mxu0
        %v3596 = vpop.f32.mrf.mxu0
        %v3597 = vpop.f32.mrf.mxu0
        %3598 = vdwg.mxu0
        %v3599 = vld [vmem:[%s12] sm:$0x1]
        %v3601 = vlaneseq
        %v3602 = vshrl.u32 %v3601, 7
        %v3603 = vsub.s32 0, %v3602
        %v3604 = vrot.slane %v3599, %v3603
        %v3606 = vmul.f32 %v3586, %v3604
        %v3607 = vmul.f32 %v3589, %v3604
        %v3608 = vmul.f32 %v3594, %v3604
        %v3609 = vld [vmem:[%s13] sm:$0x1]
        %v3611 = vlaneseq
        %v3612 = vshrl.u32 %v3611, 7
        %v3613 = vsub.s32 0, %v3612
        %v3614 = vrot.slane %v3609, %v3613
        %v3616 = vadd.f32 %v3606, %v3614
        %v3617 = vadd.f32 %v3607, %v3614
        %v3618 = vadd.f32 %v3608, %v3614
        %v3619 = vpack.c.bf16 %v3524, %v3523
        %v3620 = vpack.c.bf16 %v3525, %v3525
        %v3621 = vld [vmem:[#allocation21] sm:$0xf]
        %v3622 = vld [vmem:[#allocation21 + $0x4] sm:$0xf]
        %v3623 = vld [vmem:[#allocation21 + $0x8] sm:$0xf]
        %v3627 = vunpack.c.l.b16 %v3621
        %v3628 = vunpack.c.l.b16 %v3622
        %v3629 = vunpack.c.l.b16 %v3623
        %v3630 = vpack.c.b16 %v3628, %v3627
        %v3631 = vpack.c.b16 %v3629, %v3629
        %v3634 = vsel %vm3540, %v3619, 0
        %v3637 = vsel %vm3540, %v3620, 0
        %v3640 = vsel %vm3547, %v3631, 0
        %3642 = vmatprep.subr.bf16.mxu0 0
        %3643 = vmatpush1.bf16.msra.mxu0 0
        %3644 = vmatprep.subr.bf16.mxu0 0
        %3645 = vmatpush1.bf16.msra.mxu0 0
        %3646 = vmatprep.subr.bf16.mxu0 0
        %3647 = vmatpush1.bf16.msra.mxu0 0
        %3648 = vmatprep.subr.bf16.mxu0 0
        %3649 = vmatpush1.bf16.msra.mxu0 0
        %3650 = vmatprep.subr.bf16.mxu0 0
        %3651 = vmatpush1.bf16.msra.mxu0 0
        %3652 = vmatprep.subr.bf16.mxu0 0
        %3653 = vmatpush1.bf16.msra.mxu0 0
        %3654 = vmatprep.subr.bf16.mxu0 0
        %3655 = vmatpush1.bf16.msra.mxu0 %v3640
        %3656 = vmatprep.subr.bf16.mxu0 0
        %3657 = vmatpush1.bf16.msra.mxu0 %v3630
        %3658 = vmatprep.subr.bf16.mxu0 0
        %3659 = vmatpush2.bf16.msra.mxu0 0
        %3660 = vmatprep.subr.bf16.mxu0 0
        %3661 = vmatpush2.bf16.msra.mxu0 0
        %3662 = vmatprep.subr.bf16.mxu0 0
        %3663 = vmatpush2.bf16.msra.mxu0 0
        %3664 = vmatprep.subr.bf16.mxu0 0
        %3665 = vmatpush2.bf16.msra.mxu0 0
        %3666 = vmatprep.subr.bf16.mxu0 0
        %3667 = vmatpush2.bf16.msra.mxu0 0
        %3668 = vmatprep.subr.bf16.mxu0 0
        %3669 = vmatpush2.bf16.msra.mxu0 0
        %3670 = vmatprep.subr.bf16.mxu0 0
        %3671 = vmatpush2.bf16.msra.mxu0 0
        %3672 = vmatprep.subr.bf16.mxu0 0
        %3673 = vmatpush2.bf16.msra.mxu0 0
        %3674 = vmatprep.mubr.bf16.mxu0 0
        %3675 = vmatmul.mubr.bf16.gmra.mxu0 %v3634
        %v3676 = vpop.f32.mrf.mxu0
        %v3677 = vadd.f32 0.0, %v3676
        %v3678 = vpop.f32.mrf.mxu0
        %v3679 = vpop.f32.mrf.mxu0
        %v3680 = vadd.f32 0.0, %v3679
        %v3681 = vpop.f32.mrf.mxu0
        %3682 = vmatprep.mubr.bf16.mxu0 0
        %3683 = vmatmul.mubr.bf16.gmra.mxu0 %v3637
        %v3684 = vpop.f32.mrf.mxu0
        %v3685 = vadd.f32 0.0, %v3684
        %v3686 = vpop.f32.mrf.mxu0
        %v3687 = vpop.f32.mrf.mxu0
        %v3688 = vpop.f32.mrf.mxu0
        %3689 = vdwg.mxu0
        %v3690 = vmul.f32 %v3677, %v3604
        %v3691 = vmul.f32 %v3680, %v3604
        %v3692 = vmul.f32 %v3685, %v3604
        %v3693 = vadd.f32 %v3690, %v3614
        %v3694 = vadd.f32 %v3691, %v3614
        %v3695 = vadd.f32 %v3692, %v3614
        %v3696 = vmax.f32 %v3616, 0.0
        %v3697 = vmax.f32 %v3617, 0.0
        %v3698 = vmax.f32 %v3618, 0.0
        %v3699 = vmax.f32 %v3693, 0.0
        %v3700 = vmax.f32 %v3694, 0.0
        %v3701 = vmax.f32 %v3695, 0.0
        %3702 = vst.msk [vmem:[#allocation6] sm:$0xff] %vm2983, 0.0
        %3703 = vst.msk [vmem:[#allocation6 + $0x8] sm:$0xff] %vm2983, 0.0
        %3704 = vst.msk [vmem:[#allocation6 + $0x10] sm:$0xff] %vm2983, 0.0
        %3705 = vst.msk [vmem:[#allocation6 + $0x18] sm:$0xff] %vm2983, 0.0
        %vm3706 = vcmask 128000
        %3707 = vst.msk [vmem:[#allocation6 + $0x20] sm:$0x3f] %vm3706, 0.0
        %s3708 = scalar_lea.vmem [#allocation6], 2
        %3709 = vst [vmem:[%s3708] ss:$2 sm:$0xff] %v3696
        %s3710 = scalar_lea.vmem [#allocation6], 18
        %3711 = vst [vmem:[%s3710] ss:$2 sm:$0xff] %v3697
        %s3712 = scalar_lea.vmem [#allocation6], 34
        %3713 = vst [vmem:[%s3712] ss:$2 sm:$0x1] %v3698
        %s3714 = scalar_lea.vmem [#allocation6], 3
        %3715 = vst [vmem:[%s3714] ss:$2 sm:$0xff] %v3699
        %s3716 = scalar_lea.vmem [#allocation6], 19
        %3717 = vst [vmem:[%s3716] ss:$2 sm:$0xff] %v3700
        %s3718 = scalar_lea.vmem [#allocation6], 35
        %3719 = vst [vmem:[%s3718] ss:$2 sm:$0x1] %v3701
        %v3720 = vld [vmem:[#allocation6] sm:$0xff]
        %v3721 = vld [vmem:[#allocation6 + $0x8] sm:$0xff]
        %v3722 = vld [vmem:[#allocation6 + $0x10] sm:$0xff]
        %v3723 = vld [vmem:[#allocation6 + $0x18] sm:$0xff]
        %v3724 = vld [vmem:[#allocation6 + $0x20] sm:$0x7]
        %v3725 = vld [vmem:[#allocation6 + $0x1] sm:$0xff]
        %v3726 = vld [vmem:[#allocation6 + $0x9] sm:$0xff]
        %v3727 = vld [vmem:[#allocation6 + $0x11] sm:$0xff]
        %v3728 = vld [vmem:[#allocation6 + $0x19] sm:$0xff]
        %v3729 = vld [vmem:[#allocation6 + $0x21] sm:$0x7]
        %v3730 = vld [vmem:[#allocation6 + $0x2] sm:$0xff]
        %v3731 = vld [vmem:[#allocation6 + $0xa] sm:$0xff]
        %v3732 = vld [vmem:[#allocation6 + $0x12] sm:$0xff]
        %v3733 = vld [vmem:[#allocation6 + $0x1a] sm:$0xff]
        %v3734 = vld [vmem:[#allocation6 + $0x22] sm:$0x7]
        %3740 = vrot.lane.b32.xlu0 %v3725, 16
        %v3741 = vpop.permute.xlu0 %3740
        %3742 = vrot.lane.b32.xlu0 %v3726, 16
        %v3743 = vpop.permute.xlu0 %3742
        %3744 = vrot.lane.b32.xlu0 %v3727, 16
        %v3745 = vpop.permute.xlu0 %3744
        %3746 = vrot.lane.b32.xlu0 %v3728, 16
        %v3747 = vpop.permute.xlu0 %3746
        %3748 = vrot.lane.b32.xlu0 %v3729, 16
        %v3749 = vpop.permute.xlu0 %3748
        %3760 = vrot.lane.b32.xlu0 %v3730, 32
        %v3761 = vpop.permute.xlu0 %3760
        %3762 = vrot.lane.b32.xlu0 %v3731, 32
        %v3763 = vpop.permute.xlu0 %3762
        %3764 = vrot.lane.b32.xlu0 %v3732, 32
        %v3765 = vpop.permute.xlu0 %3764
        %3766 = vrot.lane.b32.xlu0 %v3733, 32
        %v3767 = vpop.permute.xlu0 %3766
        %3768 = vrot.lane.b32.xlu0 %v3734, 32
        %v3769 = vpop.permute.xlu0 %3768
        %v3775 = vsel %vm2983, %v3720, %v3741
        %v3776 = vsel %vm2983, %v3721, %v3743
        %v3777 = vsel %vm2983, %v3722, %v3745
        %v3778 = vsel %vm2983, %v3723, %v3747
        %v3779 = vsel %vm2983, %v3724, %v3749
        %v3780 = vsel %vm2156, %v3775, %v3761
        %v3781 = vsel %vm2156, %v3776, %v3763
        %v3782 = vsel %vm2156, %v3777, %v3765
        %v3783 = vsel %vm2156, %v3778, %v3767
        %v3784 = vsel %vm2156, %v3779, %v3769
        %v3785 = vld [vmem:[#allocation6 + $0x3] sm:$0xff]
        %v3786 = vld [vmem:[#allocation6 + $0xb] sm:$0xff]
        %v3787 = vld [vmem:[#allocation6 + $0x13] sm:$0xff]
        %v3788 = vld [vmem:[#allocation6 + $0x1b] sm:$0xff]
        %v3789 = vld [vmem:[#allocation6 + $0x23] sm:$0x7]
        %3790 = vrot.lane.b32.xlu0 %v3730, 16
        %v3791 = vpop.permute.xlu0 %3790
        %3792 = vrot.lane.b32.xlu0 %v3731, 16
        %v3793 = vpop.permute.xlu0 %3792
        %3794 = vrot.lane.b32.xlu0 %v3732, 16
        %v3795 = vpop.permute.xlu0 %3794
        %3796 = vrot.lane.b32.xlu0 %v3733, 16
        %v3797 = vpop.permute.xlu0 %3796
        %3798 = vrot.lane.b32.xlu0 %v3734, 16
        %v3799 = vpop.permute.xlu0 %3798
        %3810 = vrot.lane.b32.xlu0 %v3785, 32
        %v3811 = vpop.permute.xlu0 %3810
        %3812 = vrot.lane.b32.xlu0 %v3786, 32
        %v3813 = vpop.permute.xlu0 %3812
        %3814 = vrot.lane.b32.xlu0 %v3787, 32
        %v3815 = vpop.permute.xlu0 %3814
        %3816 = vrot.lane.b32.xlu0 %v3788, 32
        %v3817 = vpop.permute.xlu0 %3816
        %3818 = vrot.lane.b32.xlu0 %v3789, 32
        %v3819 = vpop.permute.xlu0 %3818
        %v3825 = vsel %vm2983, %v3725, %v3791
        %v3826 = vsel %vm2983, %v3726, %v3793
        %v3827 = vsel %vm2983, %v3727, %v3795
        %v3828 = vsel %vm2983, %v3728, %v3797
        %v3829 = vsel %vm2983, %v3729, %v3799
        %v3830 = vsel %vm2156, %v3825, %v3811
        %v3831 = vsel %vm2156, %v3826, %v3813
        %v3832 = vsel %vm2156, %v3827, %v3815
        %v3833 = vsel %vm2156, %v3828, %v3817
        %v3834 = vsel %vm2156, %v3829, %v3819
        %v3835 = vpack.c.bf16 %v3781, %v3780
        %v3836 = vpack.c.bf16 %v3783, %v3782
        %v3837 = vpack.c.bf16 %v3784, %v3784
        %v3838 = vld [vmem:[#allocation23] sm:$0xf]
        %v3839 = vld [vmem:[#allocation23 + $0x4] sm:$0xf]
        %v3840 = vld [vmem:[#allocation23 + $0x8] sm:$0xf]
        %v3841 = vld [vmem:[#allocation23 + $0xc] sm:$0xf]
        %v3842 = vld [vmem:[#allocation23 + $0x10] sm:$0xf]
        %v3843 = vld [vmem:[#allocation23 + $0x14] sm:$0xf]
        %v3850 = vunpack.c.l.b16 %v3838
        %v3851 = vunpack.c.l.b16 %v3839
        %v3852 = vunpack.c.l.b16 %v3840
        %v3853 = vunpack.c.l.b16 %v3841
        %v3854 = vunpack.c.l.b16 %v3842
        %v3855 = vunpack.c.l.b16 %v3843
        %v3856 = vpack.c.b16 %v3851, %v3850
        %v3857 = vpack.c.b16 %v3853, %v3852
        %v3858 = vpack.c.b16 %v3855, %v3854
        %v3863 = vsel %vm3135, %v3835, 0
        %v3866 = vsel %vm3135, %v3836, 0
        %v3869 = vsel %vm3135, %v3837, 0
        %3871 = vmatprep.subr.bf16.mxu0 0
        %3872 = vmatpush1.bf16.msra.mxu0 0
        %3873 = vmatprep.subr.bf16.mxu0 0
        %3874 = vmatpush1.bf16.msra.mxu0 0
        %3875 = vmatprep.subr.bf16.mxu0 0
        %3876 = vmatpush1.bf16.msra.mxu0 0
        %3877 = vmatprep.subr.bf16.mxu0 0
        %3878 = vmatpush1.bf16.msra.mxu0 0
        %3879 = vmatprep.subr.bf16.mxu0 0
        %3880 = vmatpush1.bf16.msra.mxu0 0
        %3881 = vmatprep.subr.bf16.mxu0 0
        %3882 = vmatpush1.bf16.msra.mxu0 %v3858
        %3883 = vmatprep.subr.bf16.mxu0 0
        %3884 = vmatpush1.bf16.msra.mxu0 %v3857
        %3885 = vmatprep.subr.bf16.mxu0 0
        %3886 = vmatpush1.bf16.msra.mxu0 %v3856
        %3887 = vmatprep.subr.bf16.mxu0 0
        %3888 = vmatpush2.bf16.msra.mxu0 0
        %3889 = vmatprep.subr.bf16.mxu0 0
        %3890 = vmatpush2.bf16.msra.mxu0 0
        %3891 = vmatprep.subr.bf16.mxu0 0
        %3892 = vmatpush2.bf16.msra.mxu0 0
        %3893 = vmatprep.subr.bf16.mxu0 0
        %3894 = vmatpush2.bf16.msra.mxu0 0
        %3895 = vmatprep.subr.bf16.mxu0 0
        %3896 = vmatpush2.bf16.msra.mxu0 0
        %3897 = vmatprep.subr.bf16.mxu0 0
        %3898 = vmatpush2.bf16.msra.mxu0 0
        %3899 = vmatprep.subr.bf16.mxu0 0
        %3900 = vmatpush2.bf16.msra.mxu0 0
        %3901 = vmatprep.subr.bf16.mxu0 0
        %3902 = vmatpush2.bf16.msra.mxu0 0
        %3903 = vmatprep.mubr.bf16.mxu0 0
        %3904 = vmatmul.mubr.bf16.gmra.mxu0 %v3863
        %v3905 = vpop.f32.mrf.mxu0
        %v3906 = vadd.f32 0.0, %v3905
        %v3907 = vpop.f32.mrf.mxu0
        %v3908 = vpop.f32.mrf.mxu0
        %v3909 = vadd.f32 0.0, %v3908
        %v3910 = vpop.f32.mrf.mxu0
        %3911 = vmatprep.mubr.bf16.mxu0 0
        %3912 = vmatmul.mubr.bf16.gmra.mxu0 %v3866
        %v3913 = vpop.f32.mrf.mxu0
        %v3914 = vadd.f32 0.0, %v3913
        %v3915 = vpop.f32.mrf.mxu0
        %v3916 = vpop.f32.mrf.mxu0
        %v3917 = vadd.f32 0.0, %v3916
        %v3918 = vpop.f32.mrf.mxu0
        %3919 = vmatprep.mubr.bf16.mxu0 0
        %3920 = vmatmul.mubr.bf16.gmra.mxu0 %v3869
        %v3921 = vpop.f32.mrf.mxu0
        %v3922 = vadd.f32 0.0, %v3921
        %v3923 = vpop.f32.mrf.mxu0
        %v3924 = vpop.f32.mrf.mxu0
        %v3925 = vpop.f32.mrf.mxu0
        %3926 = vdwg.mxu0
        %v3927 = vld [vmem:[%s16] sm:$0x1]
        %v3929 = vlaneseq
        %v3930 = vshrl.u32 %v3929, 7
        %v3931 = vsub.s32 0, %v3930
        %v3932 = vrot.slane %v3927, %v3931
        %v3934 = vmul.f32 %v3906, %v3932
        %v3935 = vmul.f32 %v3909, %v3932
        %v3936 = vmul.f32 %v3914, %v3932
        %v3937 = vmul.f32 %v3917, %v3932
        %v3938 = vmul.f32 %v3922, %v3932
        %v3939 = vld [vmem:[%s17] sm:$0x1]
        %v3941 = vlaneseq
        %v3942 = vshrl.u32 %v3941, 7
        %v3943 = vsub.s32 0, %v3942
        %v3944 = vrot.slane %v3939, %v3943
        %v3946 = vadd.f32 %v3934, %v3944
        %v3947 = vadd.f32 %v3935, %v3944
        %v3948 = vadd.f32 %v3936, %v3944
        %v3949 = vadd.f32 %v3937, %v3944
        %v3950 = vadd.f32 %v3938, %v3944
        %v3951 = vpack.c.bf16 %v3831, %v3830
        %v3952 = vpack.c.bf16 %v3833, %v3832
        %v3953 = vpack.c.bf16 %v3834, %v3834
        %v3954 = vld [vmem:[%s15] sm:$0xf]
        %v3955 = vld [vmem:[%s15 + $0x4] sm:$0xf]
        %v3956 = vld [vmem:[%s15 + $0x8] sm:$0xf]
        %v3957 = vld [vmem:[%s15 + $0xc] sm:$0xf]
        %v3958 = vld [vmem:[%s15 + $0x10] sm:$0xf]
        %v3959 = vld [vmem:[%s15 + $0x14] sm:$0xf]
        %v3966 = vunpack.c.l.b16 %v3954
        %v3967 = vunpack.c.l.b16 %v3955
        %v3968 = vunpack.c.l.b16 %v3956
        %v3969 = vunpack.c.l.b16 %v3957
        %v3970 = vunpack.c.l.b16 %v3958
        %v3971 = vunpack.c.l.b16 %v3959
        %v3972 = vpack.c.b16 %v3967, %v3966
        %v3973 = vpack.c.b16 %v3969, %v3968
        %v3974 = vpack.c.b16 %v3971, %v3970
        %v3979 = vsel %vm3135, %v3951, 0
        %v3982 = vsel %vm3135, %v3952, 0
        %v3985 = vsel %vm3135, %v3953, 0
        %3987 = vmatprep.subr.bf16.mxu0 0
        %3988 = vmatpush1.bf16.msra.mxu0 0
        %3989 = vmatprep.subr.bf16.mxu0 0
        %3990 = vmatpush1.bf16.msra.mxu0 0
        %3991 = vmatprep.subr.bf16.mxu0 0
        %3992 = vmatpush1.bf16.msra.mxu0 0
        %3993 = vmatprep.subr.bf16.mxu0 0
        %3994 = vmatpush1.bf16.msra.mxu0 0
        %3995 = vmatprep.subr.bf16.mxu0 0
        %3996 = vmatpush1.bf16.msra.mxu0 0
        %3997 = vmatprep.subr.bf16.mxu0 0
        %3998 = vmatpush1.bf16.msra.mxu0 %v3974
        %3999 = vmatprep.subr.bf16.mxu0 0
        %4000 = vmatpush1.bf16.msra.mxu0 %v3973
        %4001 = vmatprep.subr.bf16.mxu0 0
        %4002 = vmatpush1.bf16.msra.mxu0 %v3972
        %4003 = vmatprep.subr.bf16.mxu0 0
        %4004 = vmatpush2.bf16.msra.mxu0 0
        %4005 = vmatprep.subr.bf16.mxu0 0
        %4006 = vmatpush2.bf16.msra.mxu0 0
        %4007 = vmatprep.subr.bf16.mxu0 0
        %4008 = vmatpush2.bf16.msra.mxu0 0
        %4009 = vmatprep.subr.bf16.mxu0 0
        %4010 = vmatpush2.bf16.msra.mxu0 0
        %4011 = vmatprep.subr.bf16.mxu0 0
        %4012 = vmatpush2.bf16.msra.mxu0 0
        %4013 = vmatprep.subr.bf16.mxu0 0
        %4014 = vmatpush2.bf16.msra.mxu0 0
        %4015 = vmatprep.subr.bf16.mxu0 0
        %4016 = vmatpush2.bf16.msra.mxu0 0
        %4017 = vmatprep.subr.bf16.mxu0 0
        %4018 = vmatpush2.bf16.msra.mxu0 0
        %4019 = vmatprep.mubr.bf16.mxu0 0
        %4020 = vmatmul.mubr.bf16.gmra.mxu0 %v3979
        %v4021 = vpop.f32.mrf.mxu0
        %v4022 = vadd.f32 0.0, %v4021
        %v4023 = vpop.f32.mrf.mxu0
        %v4024 = vpop.f32.mrf.mxu0
        %v4025 = vadd.f32 0.0, %v4024
        %v4026 = vpop.f32.mrf.mxu0
        %4027 = vmatprep.mubr.bf16.mxu0 0
        %4028 = vmatmul.mubr.bf16.gmra.mxu0 %v3982
        %v4029 = vpop.f32.mrf.mxu0
        %v4030 = vadd.f32 0.0, %v4029
        %v4031 = vpop.f32.mrf.mxu0
        %v4032 = vpop.f32.mrf.mxu0
        %v4033 = vadd.f32 0.0, %v4032
        %v4034 = vpop.f32.mrf.mxu0
        %4035 = vmatprep.mubr.bf16.mxu0 0
        %4036 = vmatmul.mubr.bf16.gmra.mxu0 %v3985
        %v4037 = vpop.f32.mrf.mxu0
        %v4038 = vadd.f32 0.0, %v4037
        %v4039 = vpop.f32.mrf.mxu0
        %v4040 = vpop.f32.mrf.mxu0
        %v4041 = vpop.f32.mrf.mxu0
        %4042 = vdwg.mxu0
        %v4043 = vmul.f32 %v4022, %v3932
        %v4044 = vmul.f32 %v4025, %v3932
        %v4045 = vmul.f32 %v4030, %v3932
        %v4046 = vmul.f32 %v4033, %v3932
        %v4047 = vmul.f32 %v4038, %v3932
        %v4048 = vadd.f32 %v4043, %v3944
        %v4049 = vadd.f32 %v4044, %v3944
        %v4050 = vadd.f32 %v4045, %v3944
        %v4051 = vadd.f32 %v4046, %v3944
        %v4052 = vadd.f32 %v4047, %v3944
        %v4053 = vmax.f32 %v3946, 0.0
        %v4054 = vmax.f32 %v3947, 0.0
        %v4055 = vmax.f32 %v3948, 0.0
        %v4056 = vmax.f32 %v3949, 0.0
        %v4057 = vmax.f32 %v3950, 0.0
        %v4058 = vmax.f32 %v4048, 0.0
        %v4059 = vmax.f32 %v4049, 0.0
        %v4060 = vmax.f32 %v4050, 0.0
        %v4061 = vmax.f32 %v4051, 0.0
        %v4062 = vmax.f32 %v4052, 0.0
        %4063 = vst.msk [vmem:[#allocation7] sm:$0xff] %vm2156, 0.0
        %4064 = vst.msk [vmem:[#allocation7 + $0x8] sm:$0xff] %vm2156, 0.0
        %4065 = vst.msk [vmem:[#allocation7 + $0x10] sm:$0xff] %vm2156, 0.0
        %4066 = vst.msk [vmem:[#allocation7 + $0x18] sm:$0xff] %vm2156, 0.0
        %4067 = vst.msk [vmem:[#allocation7 + $0x20] sm:$0xff] %vm2156, 0.0
        %4068 = vst.msk [vmem:[#allocation7 + $0x28] sm:$0xff] %vm2156, 0.0
        %4069 = vst.msk [vmem:[#allocation7 + $0x30] sm:$0xff] %vm2156, 0.0
        %4070 = vst.msk [vmem:[#allocation7 + $0x38] sm:$0xff] %vm2156, 0.0
        %4071 = vst.msk [vmem:[#allocation7 + $0x40] sm:$0xff] %vm2156, 0.0
        %4072 = vst.msk [vmem:[#allocation7 + $0x48] sm:$0x3] %vm1707, 0.0
        %s4073 = scalar_lea.vmem [#allocation7], 2
        %4074 = vst [vmem:[%s4073] ss:$2 sm:$0xff] %v4053
        %s4075 = scalar_lea.vmem [#allocation7], 18
        %4076 = vst [vmem:[%s4075] ss:$2 sm:$0xff] %v4054
        %s4077 = scalar_lea.vmem [#allocation7], 34
        %4078 = vst [vmem:[%s4077] ss:$2 sm:$0xff] %v4055
        %s4079 = scalar_lea.vmem [#allocation7], 50
        %4080 = vst [vmem:[%s4079] ss:$2 sm:$0xff] %v4056
        %s4081 = scalar_lea.vmem [#allocation7], 66
        %4082 = vst [vmem:[%s4081] ss:$2 sm:$0x7] %v4057
        %s4083 = scalar_lea.vmem [#allocation7], 3
        %4084 = vst [vmem:[%s4083] ss:$2 sm:$0xff] %v4058
        %s4085 = scalar_lea.vmem [#allocation7], 19
        %4086 = vst [vmem:[%s4085] ss:$2 sm:$0xff] %v4059
        %s4087 = scalar_lea.vmem [#allocation7], 35
        %4088 = vst [vmem:[%s4087] ss:$2 sm:$0xff] %v4060
        %s4089 = scalar_lea.vmem [#allocation7], 51
        %4090 = vst [vmem:[%s4089] ss:$2 sm:$0xff] %v4061
        %s4091 = scalar_lea.vmem [#allocation7], 67
        %4092 = vst [vmem:[%s4091] ss:$2 sm:$0x7] %v4062
        %v4093 = vld [vmem:[#allocation7] sm:$0xff]
        %v4094 = vld [vmem:[#allocation7 + $0x8] sm:$0xff]
        %v4095 = vld [vmem:[#allocation7 + $0x10] sm:$0xff]
        %v4096 = vld [vmem:[#allocation7 + $0x18] sm:$0xff]
        %v4097 = vld [vmem:[#allocation7 + $0x20] sm:$0xff]
        %v4098 = vld [vmem:[#allocation7 + $0x28] sm:$0xff]
        %v4099 = vld [vmem:[#allocation7 + $0x30] sm:$0xff]
        %v4100 = vld [vmem:[#allocation7 + $0x38] sm:$0xff]
        %v4101 = vld [vmem:[#allocation7 + $0x40] sm:$0x7f]
        %v4102 = vld [vmem:[#allocation7 + $0x1] sm:$0xff]
        %v4103 = vld [vmem:[#allocation7 + $0x9] sm:$0xff]
        %v4104 = vld [vmem:[#allocation7 + $0x11] sm:$0xff]
        %v4105 = vld [vmem:[#allocation7 + $0x19] sm:$0xff]
        %v4106 = vld [vmem:[#allocation7 + $0x21] sm:$0xff]
        %v4107 = vld [vmem:[#allocation7 + $0x29] sm:$0xff]
        %v4108 = vld [vmem:[#allocation7 + $0x31] sm:$0xff]
        %v4109 = vld [vmem:[#allocation7 + $0x39] sm:$0xff]
        %v4110 = vld [vmem:[#allocation7 + $0x41] sm:$0x7f]
        %v4111 = vld [vmem:[#allocation7 + $0x2] sm:$0xff]
        %v4112 = vld [vmem:[#allocation7 + $0xa] sm:$0xff]
        %v4113 = vld [vmem:[#allocation7 + $0x12] sm:$0xff]
        %v4114 = vld [vmem:[#allocation7 + $0x1a] sm:$0xff]
        %v4115 = vld [vmem:[#allocation7 + $0x22] sm:$0xff]
        %v4116 = vld [vmem:[#allocation7 + $0x2a] sm:$0xff]
        %v4117 = vld [vmem:[#allocation7 + $0x32] sm:$0xff]
        %v4118 = vld [vmem:[#allocation7 + $0x3a] sm:$0xff]
        %v4119 = vld [vmem:[#allocation7 + $0x42] sm:$0x7f]
        %4129 = vrot.lane.b32.xlu0 %v4102, 32
        %v4130 = vpop.permute.xlu0 %4129
        %4131 = vrot.lane.b32.xlu0 %v4103, 32
        %v4132 = vpop.permute.xlu0 %4131
        %4133 = vrot.lane.b32.xlu0 %v4104, 32
        %v4134 = vpop.permute.xlu0 %4133
        %4135 = vrot.lane.b32.xlu0 %v4105, 32
        %v4136 = vpop.permute.xlu0 %4135
        %4137 = vrot.lane.b32.xlu0 %v4106, 32
        %v4138 = vpop.permute.xlu0 %4137
        %4139 = vrot.lane.b32.xlu0 %v4107, 32
        %v4140 = vpop.permute.xlu0 %4139
        %4141 = vrot.lane.b32.xlu0 %v4108, 32
        %v4142 = vpop.permute.xlu0 %4141
        %4143 = vrot.lane.b32.xlu0 %v4109, 32
        %v4144 = vpop.permute.xlu0 %4143
        %4145 = vrot.lane.b32.xlu0 %v4110, 32
        %v4146 = vpop.permute.xlu0 %4145
        %4165 = vrot.lane.b32.xlu0 %v4111, 64
        %v4166 = vpop.permute.xlu0 %4165
        %4167 = vrot.lane.b32.xlu0 %v4112, 64
        %v4168 = vpop.permute.xlu0 %4167
        %4169 = vrot.lane.b32.xlu0 %v4113, 64
        %v4170 = vpop.permute.xlu0 %4169
        %4171 = vrot.lane.b32.xlu0 %v4114, 64
        %v4172 = vpop.permute.xlu0 %4171
        %4173 = vrot.lane.b32.xlu0 %v4115, 64
        %v4174 = vpop.permute.xlu0 %4173
        %4175 = vrot.lane.b32.xlu0 %v4116, 64
        %v4176 = vpop.permute.xlu0 %4175
        %4177 = vrot.lane.b32.xlu0 %v4117, 64
        %v4178 = vpop.permute.xlu0 %4177
        %4179 = vrot.lane.b32.xlu0 %v4118, 64
        %v4180 = vpop.permute.xlu0 %4179
        %4181 = vrot.lane.b32.xlu0 %v4119, 64
        %v4182 = vpop.permute.xlu0 %4181
        %v4192 = vsel %vm2156, %v4093, %v4130
        %v4193 = vsel %vm2156, %v4094, %v4132
        %v4194 = vsel %vm2156, %v4095, %v4134
        %v4195 = vsel %vm2156, %v4096, %v4136
        %v4196 = vsel %vm2156, %v4097, %v4138
        %v4197 = vsel %vm2156, %v4098, %v4140
        %v4198 = vsel %vm2156, %v4099, %v4142
        %v4199 = vsel %vm2156, %v4100, %v4144
        %v4200 = vsel %vm2156, %v4101, %v4146
        %v4201 = vsel %vm2405, %v4192, %v4166
        %v4202 = vsel %vm2405, %v4193, %v4168
        %v4203 = vsel %vm2405, %v4194, %v4170
        %v4204 = vsel %vm2405, %v4195, %v4172
        %v4205 = vsel %vm2405, %v4196, %v4174
        %v4206 = vsel %vm2405, %v4197, %v4176
        %v4207 = vsel %vm2405, %v4198, %v4178
        %v4208 = vsel %vm2405, %v4199, %v4180
        %v4209 = vsel %vm2405, %v4200, %v4182
        %v4210 = vld [vmem:[#allocation7 + $0x3] sm:$0xff]
        %v4211 = vld [vmem:[#allocation7 + $0xb] sm:$0xff]
        %v4212 = vld [vmem:[#allocation7 + $0x13] sm:$0xff]
        %v4213 = vld [vmem:[#allocation7 + $0x1b] sm:$0xff]
        %v4214 = vld [vmem:[#allocation7 + $0x23] sm:$0xff]
        %v4215 = vld [vmem:[#allocation7 + $0x2b] sm:$0xff]
        %v4216 = vld [vmem:[#allocation7 + $0x33] sm:$0xff]
        %v4217 = vld [vmem:[#allocation7 + $0x3b] sm:$0xff]
        %v4218 = vld [vmem:[#allocation7 + $0x43] sm:$0x7f]
        %4219 = vrot.lane.b32.xlu0 %v4111, 32
        %v4220 = vpop.permute.xlu0 %4219
        %4221 = vrot.lane.b32.xlu0 %v4112, 32
        %v4222 = vpop.permute.xlu0 %4221
        %4223 = vrot.lane.b32.xlu0 %v4113, 32
        %v4224 = vpop.permute.xlu0 %4223
        %4225 = vrot.lane.b32.xlu0 %v4114, 32
        %v4226 = vpop.permute.xlu0 %4225
        %4227 = vrot.lane.b32.xlu0 %v4115, 32
        %v4228 = vpop.permute.xlu0 %4227
        %4229 = vrot.lane.b32.xlu0 %v4116, 32
        %v4230 = vpop.permute.xlu0 %4229
        %4231 = vrot.lane.b32.xlu0 %v4117, 32
        %v4232 = vpop.permute.xlu0 %4231
        %4233 = vrot.lane.b32.xlu0 %v4118, 32
        %v4234 = vpop.permute.xlu0 %4233
        %4235 = vrot.lane.b32.xlu0 %v4119, 32
        %v4236 = vpop.permute.xlu0 %4235
        %4255 = vrot.lane.b32.xlu0 %v4210, 64
        %v4256 = vpop.permute.xlu0 %4255
        %4257 = vrot.lane.b32.xlu0 %v4211, 64
        %v4258 = vpop.permute.xlu0 %4257
        %4259 = vrot.lane.b32.xlu0 %v4212, 64
        %v4260 = vpop.permute.xlu0 %4259
        %4261 = vrot.lane.b32.xlu0 %v4213, 64
        %v4262 = vpop.permute.xlu0 %4261
        %4263 = vrot.lane.b32.xlu0 %v4214, 64
        %v4264 = vpop.permute.xlu0 %4263
        %4265 = vrot.lane.b32.xlu0 %v4215, 64
        %v4266 = vpop.permute.xlu0 %4265
        %4267 = vrot.lane.b32.xlu0 %v4216, 64
        %v4268 = vpop.permute.xlu0 %4267
        %4269 = vrot.lane.b32.xlu0 %v4217, 64
        %v4270 = vpop.permute.xlu0 %4269
        %4271 = vrot.lane.b32.xlu0 %v4218, 64
        %v4272 = vpop.permute.xlu0 %4271
        %v4282 = vsel %vm2156, %v4102, %v4220
        %v4283 = vsel %vm2156, %v4103, %v4222
        %v4284 = vsel %vm2156, %v4104, %v4224
        %v4285 = vsel %vm2156, %v4105, %v4226
        %v4286 = vsel %vm2156, %v4106, %v4228
        %v4287 = vsel %vm2156, %v4107, %v4230
        %v4288 = vsel %vm2156, %v4108, %v4232
        %v4289 = vsel %vm2156, %v4109, %v4234
        %v4290 = vsel %vm2156, %v4110, %v4236
        %v4291 = vsel %vm2405, %v4282, %v4256
        %v4292 = vsel %vm2405, %v4283, %v4258
        %v4293 = vsel %vm2405, %v4284, %v4260
        %v4294 = vsel %vm2405, %v4285, %v4262
        %v4295 = vsel %vm2405, %v4286, %v4264
        %v4296 = vsel %vm2405, %v4287, %v4266
        %v4297 = vsel %vm2405, %v4288, %v4268
        %v4298 = vsel %vm2405, %v4289, %v4270
        %v4299 = vsel %vm2405, %v4290, %v4272
        %v4300 = vpack.c.bf16 %v4202, %v4201
        %v4301 = vpack.c.bf16 %v4204, %v4203
        %v4302 = vpack.c.bf16 %v4206, %v4205
        %v4303 = vpack.c.bf16 %v4208, %v4207
        %v4304 = vpack.c.bf16 %v4209, %v4209
        %v4305 = vld [vmem:[#allocation24] sm:$0xf]
        %v4306 = vld [vmem:[#allocation24 + $0x4] sm:$0xf]
        %v4307 = vld [vmem:[#allocation24 + $0x8] sm:$0xf]
        %v4308 = vld [vmem:[#allocation24 + $0xc] sm:$0xf]
        %v4309 = vld [vmem:[#allocation24 + $0x10] sm:$0xf]
        %v4310 = vld [vmem:[#allocation24 + $0x14] sm:$0xf]
        %v4311 = vld [vmem:[#allocation24 + $0x18] sm:$0xf]
        %v4312 = vld [vmem:[#allocation24 + $0x1c] sm:$0xf]
        %v4313 = vld [vmem:[#allocation24 + $0x20] sm:$0xf]
        %v4314 = vld [vmem:[#allocation24 + $0x24] sm:$0xf]
        %v4315 = vld [vmem:[#allocation24 + $0x28] sm:$0xf]
        %v4316 = vld [vmem:[#allocation24 + $0x2c] sm:$0xf]
        %v4329 = vunpack.c.l.b16 %v4305
        %v4330 = vunpack.c.l.b16 %v4306
        %v4331 = vunpack.c.l.b16 %v4307
        %v4332 = vunpack.c.l.b16 %v4308
        %v4333 = vunpack.c.l.b16 %v4309
        %v4334 = vunpack.c.l.b16 %v4310
        %v4335 = vunpack.c.l.b16 %v4311
        %v4336 = vunpack.c.l.b16 %v4312
        %v4337 = vunpack.c.l.b16 %v4313
        %v4338 = vunpack.c.l.b16 %v4314
        %v4339 = vunpack.c.l.b16 %v4315
        %v4340 = vunpack.c.l.b16 %v4316
        %v4341 = vpack.c.b16 %v4330, %v4329
        %v4342 = vpack.c.b16 %v4332, %v4331
        %v4343 = vpack.c.b16 %v4334, %v4333
        %v4344 = vpack.c.b16 %v4336, %v4335
        %v4345 = vpack.c.b16 %v4338, %v4337
        %v4346 = vpack.c.b16 %v4340, %v4339
        %v4354 = vsel %vm2466, %v4300, 0
        %v4357 = vsel %vm2466, %v4301, 0
        %v4360 = vsel %vm2466, %v4302, 0
        %v4363 = vsel %vm2466, %v4303, 0
        %v4366 = vsel %vm2466, %v4304, 0
        %4368 = vmatprep.subr.bf16.mxu0 0
        %4369 = vmatpush1.bf16.msra.mxu0 0
        %4370 = vmatprep.subr.bf16.mxu0 0
        %4371 = vmatpush1.bf16.msra.mxu0 0
        %4372 = vmatprep.subr.bf16.mxu0 0
        %4373 = vmatpush1.bf16.msra.mxu0 %v4346
        %4374 = vmatprep.subr.bf16.mxu0 0
        %4375 = vmatpush1.bf16.msra.mxu0 %v4345
        %4376 = vmatprep.subr.bf16.mxu0 0
        %4377 = vmatpush1.bf16.msra.mxu0 %v4344
        %4378 = vmatprep.subr.bf16.mxu0 0
        %4379 = vmatpush1.bf16.msra.mxu0 %v4343
        %4380 = vmatprep.subr.bf16.mxu0 0
        %4381 = vmatpush1.bf16.msra.mxu0 %v4342
        %4382 = vmatprep.subr.bf16.mxu0 0
        %4383 = vmatpush1.bf16.msra.mxu0 %v4341
        %4384 = vmatprep.subr.bf16.mxu0 0
        %4385 = vmatpush2.bf16.msra.mxu0 0
        %4386 = vmatprep.subr.bf16.mxu0 0
        %4387 = vmatpush2.bf16.msra.mxu0 0
        %4388 = vmatprep.subr.bf16.mxu0 0
        %4389 = vmatpush2.bf16.msra.mxu0 0
        %4390 = vmatprep.subr.bf16.mxu0 0
        %4391 = vmatpush2.bf16.msra.mxu0 0
        %4392 = vmatprep.subr.bf16.mxu0 0
        %4393 = vmatpush2.bf16.msra.mxu0 0
        %4394 = vmatprep.subr.bf16.mxu0 0
        %4395 = vmatpush2.bf16.msra.mxu0 0
        %4396 = vmatprep.subr.bf16.mxu0 0
        %4397 = vmatpush2.bf16.msra.mxu0 0
        %4398 = vmatprep.subr.bf16.mxu0 0
        %4399 = vmatpush2.bf16.msra.mxu0 0
        %4400 = vmatprep.mubr.bf16.mxu0 0
        %4401 = vmatmul.mubr.bf16.gmra.mxu0 %v4354
        %v4402 = vpop.f32.mrf.mxu0
        %v4403 = vadd.f32 0.0, %v4402
        %v4404 = vpop.f32.mrf.mxu0
        %v4405 = vpop.f32.mrf.mxu0
        %v4406 = vadd.f32 0.0, %v4405
        %v4407 = vpop.f32.mrf.mxu0
        %4408 = vmatprep.mubr.bf16.mxu0 0
        %4409 = vmatmul.mubr.bf16.gmra.mxu0 %v4357
        %v4410 = vpop.f32.mrf.mxu0
        %v4411 = vadd.f32 0.0, %v4410
        %v4412 = vpop.f32.mrf.mxu0
        %v4413 = vpop.f32.mrf.mxu0
        %v4414 = vadd.f32 0.0, %v4413
        %v4415 = vpop.f32.mrf.mxu0
        %4416 = vmatprep.mubr.bf16.mxu0 0
        %4417 = vmatmul.mubr.bf16.gmra.mxu0 %v4360
        %v4418 = vpop.f32.mrf.mxu0
        %v4419 = vadd.f32 0.0, %v4418
        %v4420 = vpop.f32.mrf.mxu0
        %v4421 = vpop.f32.mrf.mxu0
        %v4422 = vadd.f32 0.0, %v4421
        %v4423 = vpop.f32.mrf.mxu0
        %4424 = vmatprep.mubr.bf16.mxu0 0
        %4425 = vmatmul.mubr.bf16.gmra.mxu0 %v4363
        %v4426 = vpop.f32.mrf.mxu0
        %v4427 = vadd.f32 0.0, %v4426
        %v4428 = vpop.f32.mrf.mxu0
        %v4429 = vpop.f32.mrf.mxu0
        %v4430 = vadd.f32 0.0, %v4429
        %v4431 = vpop.f32.mrf.mxu0
        %4432 = vmatprep.mubr.bf16.mxu0 0
        %4433 = vmatmul.mubr.bf16.gmra.mxu0 %v4366
        %v4434 = vpop.f32.mrf.mxu0
        %v4435 = vadd.f32 0.0, %v4434
        %v4436 = vpop.f32.mrf.mxu0
        %v4437 = vpop.f32.mrf.mxu0
        %v4438 = vpop.f32.mrf.mxu0
        %4439 = vdwg.mxu0
        %v4440 = vld [vmem:[#allocation8] sm:$0x1]
        %v4442 = vlaneseq
        %v4443 = vshrl.u32 %v4442, 7
        %v4444 = vsub.s32 0, %v4443
        %v4445 = vrot.slane %v4440, %v4444
        %v4447 = vmul.f32 %v4403, %v4445
        %v4448 = vmul.f32 %v4406, %v4445
        %v4449 = vmul.f32 %v4411, %v4445
        %v4450 = vmul.f32 %v4414, %v4445
        %v4451 = vmul.f32 %v4419, %v4445
        %v4452 = vmul.f32 %v4422, %v4445
        %v4453 = vmul.f32 %v4427, %v4445
        %v4454 = vmul.f32 %v4430, %v4445
        %v4455 = vmul.f32 %v4435, %v4445
        %v4456 = vld [vmem:[#allocation9] sm:$0x1]
        %v4458 = vlaneseq
        %v4459 = vshrl.u32 %v4458, 7
        %v4460 = vsub.s32 0, %v4459
        %v4461 = vrot.slane %v4456, %v4460
        %v4463 = vadd.f32 %v4447, %v4461
        %v4464 = vadd.f32 %v4448, %v4461
        %v4465 = vadd.f32 %v4449, %v4461
        %v4466 = vadd.f32 %v4450, %v4461
        %v4467 = vadd.f32 %v4451, %v4461
        %v4468 = vadd.f32 %v4452, %v4461
        %v4469 = vadd.f32 %v4453, %v4461
        %v4470 = vadd.f32 %v4454, %v4461
        %v4471 = vadd.f32 %v4455, %v4461
        %v4472 = vpack.c.bf16 %v4292, %v4291
        %v4473 = vpack.c.bf16 %v4294, %v4293
        %v4474 = vpack.c.bf16 %v4296, %v4295
        %v4475 = vpack.c.bf16 %v4298, %v4297
        %v4476 = vpack.c.bf16 %v4299, %v4299
        %v4477 = vld [vmem:[#allocation26] sm:$0xf]
        %v4478 = vld [vmem:[#allocation26 + $0x4] sm:$0xf]
        %v4479 = vld [vmem:[#allocation26 + $0x8] sm:$0xf]
        %v4480 = vld [vmem:[#allocation26 + $0xc] sm:$0xf]
        %v4481 = vld [vmem:[#allocation26 + $0x10] sm:$0xf]
        %v4482 = vld [vmem:[#allocation26 + $0x14] sm:$0xf]
        %v4483 = vld [vmem:[#allocation26 + $0x18] sm:$0xf]
        %v4484 = vld [vmem:[#allocation26 + $0x1c] sm:$0xf]
        %v4485 = vld [vmem:[#allocation26 + $0x20] sm:$0xf]
        %v4486 = vld [vmem:[#allocation26 + $0x24] sm:$0xf]
        %v4487 = vld [vmem:[#allocation26 + $0x28] sm:$0xf]
        %v4488 = vld [vmem:[#allocation26 + $0x2c] sm:$0xf]
        %v4501 = vunpack.c.l.b16 %v4477
        %v4502 = vunpack.c.l.b16 %v4478
        %v4503 = vunpack.c.l.b16 %v4479
        %v4504 = vunpack.c.l.b16 %v4480
        %v4505 = vunpack.c.l.b16 %v4481
        %v4506 = vunpack.c.l.b16 %v4482
        %v4507 = vunpack.c.l.b16 %v4483
        %v4508 = vunpack.c.l.b16 %v4484
        %v4509 = vunpack.c.l.b16 %v4485
        %v4510 = vunpack.c.l.b16 %v4486
        %v4511 = vunpack.c.l.b16 %v4487
        %v4512 = vunpack.c.l.b16 %v4488
        %v4513 = vpack.c.b16 %v4502, %v4501
        %v4514 = vpack.c.b16 %v4504, %v4503
        %v4515 = vpack.c.b16 %v4506, %v4505
        %v4516 = vpack.c.b16 %v4508, %v4507
        %v4517 = vpack.c.b16 %v4510, %v4509
        %v4518 = vpack.c.b16 %v4512, %v4511
        %v4526 = vsel %vm2466, %v4472, 0
        %v4529 = vsel %vm2466, %v4473, 0
        %v4532 = vsel %vm2466, %v4474, 0
        %v4535 = vsel %vm2466, %v4475, 0
        %v4538 = vsel %vm2466, %v4476, 0
        %4540 = vmatprep.subr.bf16.mxu0 0
        %4541 = vmatpush1.bf16.msra.mxu0 0
        %4542 = vmatprep.subr.bf16.mxu0 0
        %4543 = vmatpush1.bf16.msra.mxu0 0
        %4544 = vmatprep.subr.bf16.mxu0 0
        %4545 = vmatpush1.bf16.msra.mxu0 %v4518
        %4546 = vmatprep.subr.bf16.mxu0 0
        %4547 = vmatpush1.bf16.msra.mxu0 %v4517
        %4548 = vmatprep.subr.bf16.mxu0 0
        %4549 = vmatpush1.bf16.msra.mxu0 %v4516
        %4550 = vmatprep.subr.bf16.mxu0 0
        %4551 = vmatpush1.bf16.msra.mxu0 %v4515
        %4552 = vmatprep.subr.bf16.mxu0 0
        %4553 = vmatpush1.bf16.msra.mxu0 %v4514
        %4554 = vmatprep.subr.bf16.mxu0 0
        %4555 = vmatpush1.bf16.msra.mxu0 %v4513
        %4556 = vmatprep.subr.bf16.mxu0 0
        %4557 = vmatpush2.bf16.msra.mxu0 0
        %4558 = vmatprep.subr.bf16.mxu0 0
        %4559 = vmatpush2.bf16.msra.mxu0 0
        %4560 = vmatprep.subr.bf16.mxu0 0
        %4561 = vmatpush2.bf16.msra.mxu0 0
        %4562 = vmatprep.subr.bf16.mxu0 0
        %4563 = vmatpush2.bf16.msra.mxu0 0
        %4564 = vmatprep.subr.bf16.mxu0 0
        %4565 = vmatpush2.bf16.msra.mxu0 0
        %4566 = vmatprep.subr.bf16.mxu0 0
        %4567 = vmatpush2.bf16.msra.mxu0 0
        %4568 = vmatprep.subr.bf16.mxu0 0
        %4569 = vmatpush2.bf16.msra.mxu0 0
        %4570 = vmatprep.subr.bf16.mxu0 0
        %4571 = vmatpush2.bf16.msra.mxu0 0
        %4572 = vmatprep.mubr.bf16.mxu0 0
        %4573 = vmatmul.mubr.bf16.gmra.mxu0 %v4526
        %v4574 = vpop.f32.mrf.mxu0
        %v4575 = vadd.f32 0.0, %v4574
        %v4576 = vpop.f32.mrf.mxu0
        %v4577 = vpop.f32.mrf.mxu0
        %v4578 = vadd.f32 0.0, %v4577
        %v4579 = vpop.f32.mrf.mxu0
        %4580 = vmatprep.mubr.bf16.mxu0 0
        %4581 = vmatmul.mubr.bf16.gmra.mxu0 %v4529
        %v4582 = vpop.f32.mrf.mxu0
        %v4583 = vadd.f32 0.0, %v4582
        %v4584 = vpop.f32.mrf.mxu0
        %v4585 = vpop.f32.mrf.mxu0
        %v4586 = vadd.f32 0.0, %v4585
        %v4587 = vpop.f32.mrf.mxu0
        %4588 = vmatprep.mubr.bf16.mxu0 0
        %4589 = vmatmul.mubr.bf16.gmra.mxu0 %v4532
        %v4590 = vpop.f32.mrf.mxu0
        %v4591 = vadd.f32 0.0, %v4590
        %v4592 = vpop.f32.mrf.mxu0
        %v4593 = vpop.f32.mrf.mxu0
        %v4594 = vadd.f32 0.0, %v4593
        %v4595 = vpop.f32.mrf.mxu0
        %4596 = vmatprep.mubr.bf16.mxu0 0
        %4597 = vmatmul.mubr.bf16.gmra.mxu0 %v4535
        %v4598 = vpop.f32.mrf.mxu0
        %v4599 = vadd.f32 0.0, %v4598
        %v4600 = vpop.f32.mrf.mxu0
        %v4601 = vpop.f32.mrf.mxu0
        %v4602 = vadd.f32 0.0, %v4601
        %v4603 = vpop.f32.mrf.mxu0
        %4604 = vmatprep.mubr.bf16.mxu0 0
        %4605 = vmatmul.mubr.bf16.gmra.mxu0 %v4538
        %v4606 = vpop.f32.mrf.mxu0
        %v4607 = vadd.f32 0.0, %v4606
        %v4608 = vpop.f32.mrf.mxu0
        %v4609 = vpop.f32.mrf.mxu0
        %v4610 = vpop.f32.mrf.mxu0
        %4611 = vdwg.mxu0
        %v4612 = vmul.f32 %v4575, %v4445
        %v4613 = vmul.f32 %v4578, %v4445
        %v4614 = vmul.f32 %v4583, %v4445
        %v4615 = vmul.f32 %v4586, %v4445
        %v4616 = vmul.f32 %v4591, %v4445
        %v4617 = vmul.f32 %v4594, %v4445
        %v4618 = vmul.f32 %v4599, %v4445
        %v4619 = vmul.f32 %v4602, %v4445
        %v4620 = vmul.f32 %v4607, %v4445
        %v4621 = vadd.f32 %v4612, %v4461
        %v4622 = vadd.f32 %v4613, %v4461
        %v4623 = vadd.f32 %v4614, %v4461
        %v4624 = vadd.f32 %v4615, %v4461
        %v4625 = vadd.f32 %v4616, %v4461
        %v4626 = vadd.f32 %v4617, %v4461
        %v4627 = vadd.f32 %v4618, %v4461
        %v4628 = vadd.f32 %v4619, %v4461
        %v4629 = vadd.f32 %v4620, %v4461
        %v4630 = vtanh.pop %v4463
        %v4631 = vtanh.pop %v4464
        %v4632 = vtanh.pop %v4465
        %v4633 = vtanh.pop %v4466
        %v4634 = vtanh.pop %v4467
        %v4635 = vtanh.pop %v4468
        %v4636 = vtanh.pop %v4469
        %v4637 = vtanh.pop %v4470
        %v4638 = vtanh.pop %v4471
        %v4639 = vtanh.pop %v4621
        %v4640 = vtanh.pop %v4622
        %v4641 = vtanh.pop %v4623
        %v4642 = vtanh.pop %v4624
        %v4643 = vtanh.pop %v4625
        %v4644 = vtanh.pop %v4626
        %v4645 = vtanh.pop %v4627
        %v4646 = vtanh.pop %v4628
        %v4647 = vtanh.pop %v4629
        %v4648 = vld [vmem:[%s22] sm:$0xff]
        %v4649 = vld [vmem:[%s22 + $0x8] sm:$0xff]
        %v4650 = vld [vmem:[%s22 + $0x10] sm:$0xff]
        %v4651 = vld [vmem:[%s22 + $0x18] sm:$0xff]
        %v4652 = vld [vmem:[%s22 + $0x20] sm:$0xff]
        %v4653 = vld [vmem:[%s22 + $0x28] sm:$0xff]
        %v4654 = vld [vmem:[%s22 + $0x30] sm:$0xff]
        %v4655 = vld [vmem:[%s22 + $0x38] sm:$0xff]
        %v4656 = vld [vmem:[%s22 + $0x40] sm:$0xff]
        %v4657 = vld [vmem:[%s22 + $0x48] sm:$0xff]
        %v4658 = vld [vmem:[%s22 + $0x50] sm:$0xff]
        %v4659 = vld [vmem:[%s22 + $0x58] sm:$0xff]
        %v4660 = vld [vmem:[%s22 + $0x60] sm:$0xff]
        %v4661 = vld [vmem:[%s22 + $0x68] sm:$0xff]
        %v4662 = vld [vmem:[%s22 + $0x70] sm:$0xff]
        %v4663 = vld [vmem:[%s22 + $0x78] sm:$0xff]
        %v4664 = vld [vmem:[%s23] sm:$0xff]
        %v4665 = vld [vmem:[%s23 + $0x8] sm:$0xff]
        %v4666 = vld [vmem:[%s23 + $0x10] sm:$0xff]
        %v4667 = vld [vmem:[%s23 + $0x18] sm:$0xff]
        %v4668 = vld [vmem:[%s23 + $0x20] sm:$0xff]
        %v4669 = vld [vmem:[%s23 + $0x28] sm:$0xff]
        %v4670 = vld [vmem:[%s23 + $0x30] sm:$0xff]
        %v4671 = vld [vmem:[%s23 + $0x38] sm:$0xff]
        %v4672 = vld [vmem:[%s23 + $0x40] sm:$0xff]
        %v4673 = vld [vmem:[%s23 + $0x48] sm:$0xff]
        %v4674 = vld [vmem:[%s23 + $0x50] sm:$0xff]
        %v4675 = vld [vmem:[%s23 + $0x58] sm:$0xff]
        %v4676 = vld [vmem:[%s23 + $0x60] sm:$0xff]
        %v4677 = vld [vmem:[%s23 + $0x68] sm:$0xff]
        %v4678 = vld [vmem:[%s23 + $0x70] sm:$0xff]
        %v4679 = vld [vmem:[%s23 + $0x78] sm:$0xff]
        %vm4680 = vcmask 580608
        %v4682 = vsel %vm4680, %v4664, 0
        %v4685 = vsel %vm4680, %v4665, 0
        %v4688 = vsel %vm4680, %v4666, 0
        %v4691 = vsel %vm4680, %v4667, 0
        %v4694 = vsel %vm4680, %v4668, 0
        %v4697 = vsel %vm4680, %v4669, 0
        %v4700 = vsel %vm4680, %v4670, 0
        %v4703 = vsel %vm4680, %v4671, 0
        %v4706 = vsel %vm4680, %v4672, 0
        %v4709 = vsel %vm4680, %v4673, 0
        %v4712 = vsel %vm4680, %v4674, 0
        %v4715 = vsel %vm4680, %v4675, 0
        %v4718 = vsel %vm4680, %v4676, 0
        %v4721 = vsel %vm4680, %v4677, 0
        %v4724 = vsel %vm4680, %v4678, 0
        %v4727 = vsel %vm4680, %v4679, 0
        %vm4729 = vcmask 1046528
        %v4731 = vsel %vm4729, %v4647, 0
        %4733 = vmatprep.subr.mxu0 0.0
        %4734 = vmatpush1.msra.mxu0 0.0
        %4735 = vmatprep.subr.mxu0 0.0
        %4736 = vmatpush1.msra.mxu0 0.0
        %4737 = vmatprep.subr.mxu0 0.0
        %4738 = vmatpush1.msra.mxu0 0.0
        %4739 = vmatprep.subr.mxu0 0.0
        %4740 = vmatpush1.msra.mxu0 0.0
        %4741 = vmatprep.subr.mxu0 0.0
        %4742 = vmatpush1.msra.mxu0 0.0
        %4743 = vmatprep.subr.mxu0 0.0
        %4744 = vmatpush1.msra.mxu0 0.0
        %4745 = vmatprep.subr.mxu0 0.0
        %4746 = vmatpush1.msra.mxu0 0.0
        %4747 = vmatprep.subr.mxu0 0.0
        %4748 = vmatpush1.msra.mxu0 %v4731
        %4749 = vmatprep.subr.mxu0 0.0
        %4750 = vmatpush1.msra.mxu0 %v4646
        %4751 = vmatprep.subr.mxu0 0.0
        %4752 = vmatpush1.msra.mxu0 %v4645
        %4753 = vmatprep.subr.mxu0 0.0
        %4754 = vmatpush1.msra.mxu0 %v4644
        %4755 = vmatprep.subr.mxu0 0.0
        %4756 = vmatpush1.msra.mxu0 %v4643
        %4757 = vmatprep.subr.mxu0 0.0
        %4758 = vmatpush1.msra.mxu0 %v4642
        %4759 = vmatprep.subr.mxu0 0.0
        %4760 = vmatpush1.msra.mxu0 %v4641
        %4761 = vmatprep.subr.mxu0 0.0
        %4762 = vmatpush1.msra.mxu0 %v4640
        %4763 = vmatprep.subr.mxu0 0.0
        %4764 = vmatpush1.msra.mxu0 %v4639
        %4765 = vmatprep.subr.mxu0 0.0
        %4766 = vmatpush2.msra.mxu0 0.0
        %4767 = vmatprep.subr.mxu0 0.0
        %4768 = vmatpush2.msra.mxu0 0.0
        %4769 = vmatprep.subr.mxu0 0.0
        %4770 = vmatpush2.msra.mxu0 0.0
        %4771 = vmatprep.subr.mxu0 0.0
        %4772 = vmatpush2.msra.mxu0 0.0
        %4773 = vmatprep.subr.mxu0 0.0
        %4774 = vmatpush2.msra.mxu0 0.0
        %4775 = vmatprep.subr.mxu0 0.0
        %4776 = vmatpush2.msra.mxu0 0.0
        %4777 = vmatprep.subr.mxu0 0.0
        %4778 = vmatpush2.msra.mxu0 0.0
        %4779 = vmatprep.subr.mxu0 0.0
        %4780 = vmatpush2.msra.mxu0 0.0
        %4781 = vmatprep.subr.mxu0 0.0
        %4782 = vmatpush2.msra.mxu0 0.0
        %4783 = vmatprep.subr.mxu0 0.0
        %4784 = vmatpush2.msra.mxu0 0.0
        %4785 = vmatprep.subr.mxu0 0.0
        %4786 = vmatpush2.msra.mxu0 0.0
        %4787 = vmatprep.subr.mxu0 0.0
        %4788 = vmatpush2.msra.mxu0 0.0
        %4789 = vmatprep.subr.mxu0 0.0
        %4790 = vmatpush2.msra.mxu0 0.0
        %4791 = vmatprep.subr.mxu0 0.0
        %4792 = vmatpush2.msra.mxu0 0.0
        %4793 = vmatprep.subr.mxu0 0.0
        %4794 = vmatpush2.msra.mxu0 0.0
        %4795 = vmatprep.subr.mxu0 0.0
        %4796 = vmatpush2.msra.mxu0 0.0
        %4797 = vmatprep.mubr.f32.mxu0 0.0
        %4798 = vmatmul.mubr.f32.gmra.mxu0 %v4682
        %v4799 = vpop.f32.mrf.mxu0
        %v4800 = vadd.f32 0.0, %v4799
        %v4801 = vpop.f32.mrf.mxu0
        %4802 = vmatprep.mubr.f32.mxu0 0.0
        %4803 = vmatmul.mubr.f32.gmra.mxu0 %v4685
        %v4804 = vpop.f32.mrf.mxu0
        %v4805 = vadd.f32 0.0, %v4804
        %v4806 = vpop.f32.mrf.mxu0
        %4807 = vmatprep.mubr.f32.mxu0 0.0
        %4808 = vmatmul.mubr.f32.gmra.mxu0 %v4688
        %v4809 = vpop.f32.mrf.mxu0
        %v4810 = vadd.f32 0.0, %v4809
        %v4811 = vpop.f32.mrf.mxu0
        %4812 = vmatprep.mubr.f32.mxu0 0.0
        %4813 = vmatmul.mubr.f32.gmra.mxu0 %v4691
        %v4814 = vpop.f32.mrf.mxu0
        %v4815 = vadd.f32 0.0, %v4814
        %v4816 = vpop.f32.mrf.mxu0
        %4817 = vmatprep.mubr.f32.mxu0 0.0
        %4818 = vmatmul.mubr.f32.gmra.mxu0 %v4694
        %v4819 = vpop.f32.mrf.mxu0
        %v4820 = vadd.f32 0.0, %v4819
        %v4821 = vpop.f32.mrf.mxu0
        %4822 = vmatprep.mubr.f32.mxu0 0.0
        %4823 = vmatmul.mubr.f32.gmra.mxu0 %v4697
        %v4824 = vpop.f32.mrf.mxu0
        %v4825 = vadd.f32 0.0, %v4824
        %v4826 = vpop.f32.mrf.mxu0
        %4827 = vmatprep.mubr.f32.mxu0 0.0
        %4828 = vmatmul.mubr.f32.gmra.mxu0 %v4700
        %v4829 = vpop.f32.mrf.mxu0
        %v4830 = vadd.f32 0.0, %v4829
        %v4831 = vpop.f32.mrf.mxu0
        %4832 = vmatprep.mubr.f32.mxu0 0.0
        %4833 = vmatmul.mubr.f32.gmra.mxu0 %v4703
        %v4834 = vpop.f32.mrf.mxu0
        %v4835 = vadd.f32 0.0, %v4834
        %v4836 = vpop.f32.mrf.mxu0
        %4837 = vmatprep.mubr.f32.mxu0 0.0
        %4838 = vmatmul.mubr.f32.gmra.mxu0 %v4706
        %v4839 = vpop.f32.mrf.mxu0
        %v4840 = vadd.f32 0.0, %v4839
        %v4841 = vpop.f32.mrf.mxu0
        %4842 = vmatprep.mubr.f32.mxu0 0.0
        %4843 = vmatmul.mubr.f32.gmra.mxu0 %v4709
        %v4844 = vpop.f32.mrf.mxu0
        %v4845 = vadd.f32 0.0, %v4844
        %v4846 = vpop.f32.mrf.mxu0
        %4847 = vmatprep.mubr.f32.mxu0 0.0
        %4848 = vmatmul.mubr.f32.gmra.mxu0 %v4712
        %v4849 = vpop.f32.mrf.mxu0
        %v4850 = vadd.f32 0.0, %v4849
        %v4851 = vpop.f32.mrf.mxu0
        %4852 = vmatprep.mubr.f32.mxu0 0.0
        %4853 = vmatmul.mubr.f32.gmra.mxu0 %v4715
        %v4854 = vpop.f32.mrf.mxu0
        %v4855 = vadd.f32 0.0, %v4854
        %v4856 = vpop.f32.mrf.mxu0
        %4857 = vmatprep.mubr.f32.mxu0 0.0
        %4858 = vmatmul.mubr.f32.gmra.mxu0 %v4718
        %v4859 = vpop.f32.mrf.mxu0
        %v4860 = vadd.f32 0.0, %v4859
        %v4861 = vpop.f32.mrf.mxu0
        %4862 = vmatprep.mubr.f32.mxu0 0.0
        %4863 = vmatmul.mubr.f32.gmra.mxu0 %v4721
        %v4864 = vpop.f32.mrf.mxu0
        %v4865 = vadd.f32 0.0, %v4864
        %v4866 = vpop.f32.mrf.mxu0
        %4867 = vmatprep.mubr.f32.mxu0 0.0
        %4868 = vmatmul.mubr.f32.gmra.mxu0 %v4724
        %v4869 = vpop.f32.mrf.mxu0
        %v4870 = vadd.f32 0.0, %v4869
        %v4871 = vpop.f32.mrf.mxu0
        %4872 = vmatprep.mubr.f32.mxu0 0.0
        %4873 = vmatmul.mubr.f32.gmra.mxu0 %v4727
        %v4874 = vpop.f32.mrf.mxu0
        %v4875 = vadd.f32 0.0, %v4874
        %v4876 = vpop.f32.mrf.mxu0
        %4877 = vdwg.mxu0
        %v4879 = vsel %vm4680, %v4648, 0
        %v4882 = vsel %vm4680, %v4649, 0
        %v4885 = vsel %vm4680, %v4650, 0
        %v4888 = vsel %vm4680, %v4651, 0
        %v4891 = vsel %vm4680, %v4652, 0
        %v4894 = vsel %vm4680, %v4653, 0
        %v4897 = vsel %vm4680, %v4654, 0
        %v4900 = vsel %vm4680, %v4655, 0
        %v4903 = vsel %vm4680, %v4656, 0
        %v4906 = vsel %vm4680, %v4657, 0
        %v4909 = vsel %vm4680, %v4658, 0
        %v4912 = vsel %vm4680, %v4659, 0
        %v4915 = vsel %vm4680, %v4660, 0
        %v4918 = vsel %vm4680, %v4661, 0
        %v4921 = vsel %vm4680, %v4662, 0
        %v4924 = vsel %vm4680, %v4663, 0
        %v4927 = vsel %vm4729, %v4638, 0
        %4929 = vmatprep.subr.mxu0 0.0
        %4930 = vmatpush1.msra.mxu0 0.0
        %4931 = vmatprep.subr.mxu0 0.0
        %4932 = vmatpush1.msra.mxu0 0.0
        %4933 = vmatprep.subr.mxu0 0.0
        %4934 = vmatpush1.msra.mxu0 0.0
        %4935 = vmatprep.subr.mxu0 0.0
        %4936 = vmatpush1.msra.mxu0 0.0
        %4937 = vmatprep.subr.mxu0 0.0
        %4938 = vmatpush1.msra.mxu0 0.0
        %4939 = vmatprep.subr.mxu0 0.0
        %4940 = vmatpush1.msra.mxu0 0.0
        %4941 = vmatprep.subr.mxu0 0.0
        %4942 = vmatpush1.msra.mxu0 0.0
        %4943 = vmatprep.subr.mxu0 0.0
        %4944 = vmatpush1.msra.mxu0 %v4927
        %4945 = vmatprep.subr.mxu0 0.0
        %4946 = vmatpush1.msra.mxu0 %v4637
        %4947 = vmatprep.subr.mxu0 0.0
        %4948 = vmatpush1.msra.mxu0 %v4636
        %4949 = vmatprep.subr.mxu0 0.0
        %4950 = vmatpush1.msra.mxu0 %v4635
        %4951 = vmatprep.subr.mxu0 0.0
        %4952 = vmatpush1.msra.mxu0 %v4634
        %4953 = vmatprep.subr.mxu0 0.0
        %4954 = vmatpush1.msra.mxu0 %v4633
        %4955 = vmatprep.subr.mxu0 0.0
        %4956 = vmatpush1.msra.mxu0 %v4632
        %4957 = vmatprep.subr.mxu0 0.0
        %4958 = vmatpush1.msra.mxu0 %v4631
        %4959 = vmatprep.subr.mxu0 0.0
        %4960 = vmatpush1.msra.mxu0 %v4630
        %4961 = vmatprep.subr.mxu0 0.0
        %4962 = vmatpush2.msra.mxu0 0.0
        %4963 = vmatprep.subr.mxu0 0.0
        %4964 = vmatpush2.msra.mxu0 0.0
        %4965 = vmatprep.subr.mxu0 0.0
        %4966 = vmatpush2.msra.mxu0 0.0
        %4967 = vmatprep.subr.mxu0 0.0
        %4968 = vmatpush2.msra.mxu0 0.0
        %4969 = vmatprep.subr.mxu0 0.0
        %4970 = vmatpush2.msra.mxu0 0.0
        %4971 = vmatprep.subr.mxu0 0.0
        %4972 = vmatpush2.msra.mxu0 0.0
        %4973 = vmatprep.subr.mxu0 0.0
        %4974 = vmatpush2.msra.mxu0 0.0
        %4975 = vmatprep.subr.mxu0 0.0
        %4976 = vmatpush2.msra.mxu0 0.0
        %4977 = vmatprep.subr.mxu0 0.0
        %4978 = vmatpush2.msra.mxu0 0.0
        %4979 = vmatprep.subr.mxu0 0.0
        %4980 = vmatpush2.msra.mxu0 0.0
        %4981 = vmatprep.subr.mxu0 0.0
        %4982 = vmatpush2.msra.mxu0 0.0
        %4983 = vmatprep.subr.mxu0 0.0
        %4984 = vmatpush2.msra.mxu0 0.0
        %4985 = vmatprep.subr.mxu0 0.0
        %4986 = vmatpush2.msra.mxu0 0.0
        %4987 = vmatprep.subr.mxu0 0.0
        %4988 = vmatpush2.msra.mxu0 0.0
        %4989 = vmatprep.subr.mxu0 0.0
        %4990 = vmatpush2.msra.mxu0 0.0
        %4991 = vmatprep.subr.mxu0 0.0
        %4992 = vmatpush2.msra.mxu0 0.0
        %4993 = vmatprep.mubr.f32.mxu0 0.0
        %4994 = vmatmul.mubr.f32.gmra.mxu0 %v4879
        %v4995 = vpop.f32.mrf.mxu0
        %v4996 = vadd.f32 %v4800, %v4995
        %v4997 = vpop.f32.mrf.mxu0
        %4998 = vmatprep.mubr.f32.mxu0 0.0
        %4999 = vmatmul.mubr.f32.gmra.mxu0 %v4882
        %v5000 = vpop.f32.mrf.mxu0
        %v5001 = vadd.f32 %v4805, %v5000
        %v5002 = vpop.f32.mrf.mxu0
        %5003 = vmatprep.mubr.f32.mxu0 0.0
        %5004 = vmatmul.mubr.f32.gmra.mxu0 %v4885
        %v5005 = vpop.f32.mrf.mxu0
        %v5006 = vadd.f32 %v4810, %v5005
        %v5007 = vpop.f32.mrf.mxu0
        %5008 = vmatprep.mubr.f32.mxu0 0.0
        %5009 = vmatmul.mubr.f32.gmra.mxu0 %v4888
        %v5010 = vpop.f32.mrf.mxu0
        %v5011 = vadd.f32 %v4815, %v5010
        %v5012 = vpop.f32.mrf.mxu0
        %5013 = vmatprep.mubr.f32.mxu0 0.0
        %5014 = vmatmul.mubr.f32.gmra.mxu0 %v4891
        %v5015 = vpop.f32.mrf.mxu0
        %v5016 = vadd.f32 %v4820, %v5015
        %v5017 = vpop.f32.mrf.mxu0
        %5018 = vmatprep.mubr.f32.mxu0 0.0
        %5019 = vmatmul.mubr.f32.gmra.mxu0 %v4894
        %v5020 = vpop.f32.mrf.mxu0
        %v5021 = vadd.f32 %v4825, %v5020
        %v5022 = vpop.f32.mrf.mxu0
        %5023 = vmatprep.mubr.f32.mxu0 0.0
        %5024 = vmatmul.mubr.f32.gmra.mxu0 %v4897
        %v5025 = vpop.f32.mrf.mxu0
        %v5026 = vadd.f32 %v4830, %v5025
        %v5027 = vpop.f32.mrf.mxu0
        %5028 = vmatprep.mubr.f32.mxu0 0.0
        %5029 = vmatmul.mubr.f32.gmra.mxu0 %v4900
        %v5030 = vpop.f32.mrf.mxu0
        %v5031 = vadd.f32 %v4835, %v5030
        %v5032 = vpop.f32.mrf.mxu0
        %5033 = vmatprep.mubr.f32.mxu0 0.0
        %5034 = vmatmul.mubr.f32.gmra.mxu0 %v4903
        %v5035 = vpop.f32.mrf.mxu0
        %v5036 = vadd.f32 %v4840, %v5035
        %v5037 = vpop.f32.mrf.mxu0
        %5038 = vmatprep.mubr.f32.mxu0 0.0
        %5039 = vmatmul.mubr.f32.gmra.mxu0 %v4906
        %v5040 = vpop.f32.mrf.mxu0
        %v5041 = vadd.f32 %v4845, %v5040
        %v5042 = vpop.f32.mrf.mxu0
        %5043 = vmatprep.mubr.f32.mxu0 0.0
        %5044 = vmatmul.mubr.f32.gmra.mxu0 %v4909
        %v5045 = vpop.f32.mrf.mxu0
        %v5046 = vadd.f32 %v4850, %v5045
        %v5047 = vpop.f32.mrf.mxu0
        %5048 = vmatprep.mubr.f32.mxu0 0.0
        %5049 = vmatmul.mubr.f32.gmra.mxu0 %v4912
        %v5050 = vpop.f32.mrf.mxu0
        %v5051 = vadd.f32 %v4855, %v5050
        %v5052 = vpop.f32.mrf.mxu0
        %5053 = vmatprep.mubr.f32.mxu0 0.0
        %5054 = vmatmul.mubr.f32.gmra.mxu0 %v4915
        %v5055 = vpop.f32.mrf.mxu0
        %v5056 = vadd.f32 %v4860, %v5055
        %v5057 = vpop.f32.mrf.mxu0
        %5058 = vmatprep.mubr.f32.mxu0 0.0
        %5059 = vmatmul.mubr.f32.gmra.mxu0 %v4918
        %v5060 = vpop.f32.mrf.mxu0
        %v5061 = vadd.f32 %v4865, %v5060
        %v5062 = vpop.f32.mrf.mxu0
        %5063 = vmatprep.mubr.f32.mxu0 0.0
        %5064 = vmatmul.mubr.f32.gmra.mxu0 %v4921
        %v5065 = vpop.f32.mrf.mxu0
        %v5066 = vadd.f32 %v4870, %v5065
        %v5067 = vpop.f32.mrf.mxu0
        %5068 = vmatprep.mubr.f32.mxu0 0.0
        %5069 = vmatmul.mubr.f32.gmra.mxu0 %v4924
        %v5070 = vpop.f32.mrf.mxu0
        %v5071 = vadd.f32 %v4875, %v5070
        %v5072 = vpop.f32.mrf.mxu0
        %5073 = vdwg.mxu0
        %5074 = vst.msk [vmem:[%s893] sm:$0xff] %vm911, %v4996
        %5075 = vst.msk [vmem:[%s893 + $0x8] sm:$0xff] %vm911, %v5001
        %5076 = vst.msk [vmem:[%s893 + $0x10] sm:$0xff] %vm911, %v5006
        %5077 = vst.msk [vmem:[%s893 + $0x18] sm:$0xff] %vm911, %v5011
        %5078 = vst.msk [vmem:[%s893 + $0x20] sm:$0xff] %vm911, %v5016
        %5079 = vst.msk [vmem:[%s893 + $0x28] sm:$0xff] %vm911, %v5021
        %5080 = vst.msk [vmem:[%s893 + $0x30] sm:$0xff] %vm911, %v5026
        %5081 = vst.msk [vmem:[%s893 + $0x38] sm:$0xff] %vm911, %v5031
        %5082 = vst.msk [vmem:[%s893 + $0x40] sm:$0xff] %vm911, %v5036
        %5083 = vst.msk [vmem:[%s893 + $0x48] sm:$0xff] %vm911, %v5041
        %5084 = vst.msk [vmem:[%s893 + $0x50] sm:$0xff] %vm911, %v5046
        %5085 = vst.msk [vmem:[%s893 + $0x58] sm:$0xff] %vm911, %v5051
        %5086 = vst.msk [vmem:[%s893 + $0x60] sm:$0xff] %vm911, %v5056
        %5087 = vst.msk [vmem:[%s893 + $0x68] sm:$0xff] %vm911, %v5061
        %5088 = vst.msk [vmem:[%s893 + $0x70] sm:$0xff] %vm911, %v5066
        %5089 = vst.msk [vmem:[%s893 + $0x78] sm:$0xff] %vm911, %v5071
        %p5090 = scmp.lt.s32.totalorder %s45, 1
        %s5091 = scalar_select %p5090, %s45, 1
        %s5092 = smul.addr %s5091, 16
        %s5093 = smul.addr %s5092, 8
        %s5094 = scalar_lea.vmem %s24, %s5093
        // Predicated region
        $region161: #{_lambda_.1} parent=115 // pred_check
          %p5095 = pneg %p572
        $region162: #{_lambda_.1} parent=115 // pred_check_branch
          %5097 = sbr.rel (%p5095) target = $region164
        $region163: #{_lambda_.1} parent=115 // pred_region
          _
        $region164: #{_lambda_.1} parent=115 // pred_fallthru
          _
      $region116: #{_lambda_.1} parent=5 // pred_fallthru
        _
      %p5098 = scmp.le.s32.totalorder 2, %s40
      // Predicated region
      $region165: #{_lambda_.1} parent=5 // pred_check
        %p5099 = pneg %p5098
      $region166: #{_lambda_.1} parent=5 // pred_check_branch
        %5101 = sbr.rel (%p5099) target = $region168
      $region167: #{_lambda_.1} parent=5 // pred_region
        %s5102 = ssub.s32 %s40, 2
        // Predicated region
        $region169: #{_lambda_.1} parent=167 // pred_check
          %p5103 = pneg %p578
        $region170: #{_lambda_.1} parent=167 // pred_check_branch
          %5105 = sbr.rel (%p5103) target = $region172
        $region171: #{_lambda_.1} parent=167 // pred_region
          %p5106 = scmp.lt.s32.totalorder %s46, 1
          %s5107 = scalar_select %p5106, %s46, 1
          %s5108 = smul.addr %s5107, 16
          %s5109 = smul.addr %s5108, 8
          %s5110 = scalar_lea.vmem %s24, %s5109
        $region172: #{_lambda_.1} parent=167 // pred_fallthru
          _
      $region168: #{_lambda_.1} parent=5 // pred_fallthru
        _
    $region6: #{_lambda_.1} parent=1 // loop_footer
      %s44 = sadd.s32 1, %s40
    $region7: #{_lambda_.1} parent=1 // loop_footer_branch
      %39 = sbr.rel target = $region3
    $region8: #{_lambda_.1} parent=1 // loop_exit
      _
    %5111 = vsyncpa [#allocation11], 1
    %s5112 = scalar_lea.sflag [#allocation11], 1
    %5113 = vsyncpa %s5112, 1
    %5114 = vsyncpa [#allocation13], 1
    %5115 = vsyncpa [#allocation16], 1
    %5116 = vsyncpa [#allocation19], 1
    %5117 = vsyncpa [#allocation22], 1
    %5118 = vsyncpa [#allocation25], 1

</llo_original>
